<compile_context>
chip_gen: v5e
topology: v5e:2x2
jax: 0.10.0
libtpu: 0.0.40
codegen_flags: <defaults>
</compile_context>

<pallas_src>
import functools

import jax
import jax.numpy as jnp
from jax.experimental import pallas as pl
from jax.experimental.pallas import tpu as pltpu

EPS = 1e-5                      # torch.nn.LayerNorm default eps
NEG_INF = -1e30                 # causal-mask fill (exp underflows to 0 in f32)
COMPUTE_DTYPE = jnp.bfloat16    # MXU-native operand dtype (f32 accumulation)


# --------------------------------------------------------------------------
# small helpers
# --------------------------------------------------------------------------
def _ln_rows(v, g, b):
    """LayerNorm over the last dim, one-pass variance; v:(N,D), g/b:(1,D)."""
    mu = jnp.mean(v, axis=-1, keepdims=True)
    var = jnp.maximum(jnp.mean(v * v, axis=-1, keepdims=True) - mu * mu, 0.0)
    return (v - mu) * jax.lax.rsqrt(var + EPS) * g + b


def _num_tensorcores():
    """Best-effort TensorCore-per-device count (megacore / v7x -> 2)."""
    try:
        kind = jax.devices()[0].device_kind.lower()
        if any(t in kind for t in ("v4", "v5p", "v7")):
            return 2
    except Exception:
        pass
    return 1


def _vmem_limit_bytes():
    """Explicit scoped-VMEM limit (~3/4 of physical) when queryable."""
    try:
        cap = getattr(pltpu.get_tpu_info(), "vmem_capacity_bytes", None)
        if cap:
            return int(cap) * 3 // 4
    except Exception:
        pass
    return None


def _pick_tb(batch, S, D, n_cores, act_budget_bytes=16 << 20):
    """Sequences per grid step: big M for the MXU, VMEM-capped, and >= n_cores
    parallel b-steps on multi-TensorCore chips."""
    per_seq = 48 * S * D                      # rough f32 working set / sequence
    tb = max(1, min(batch, act_budget_bytes // max(per_seq, 1)))
    if n_cores > 1 and batch >= 2:
        tb = min(tb, max(1, batch // n_cores))
    while batch % tb:
        tb -= 1
    return tb


# --------------------------------------------------------------------------
# Kernel 1: the whole transformer stack.  grid = (B//TB, L)
#   l==0 : seed resident activation with x + pos
#   every l: MaPLe row-mask injection -> LN -> fused QKV -> causal MHA ->
#            fused out-proj -> residual -> LN -> MLP(QuickGELU) -> residual
#   l==L-1: single HBM writeback of the (TB,S,D) tile
# --------------------------------------------------------------------------
def stack_kernel(x_ref, pos_ref, mask_ref, injm_ref, injt_ref,
                 g1_ref, b1_ref, wqkv_ref, bqkv_ref, wo_ref, bo_ref,
                 g2_ref, b2_ref, wfc_ref, bfc_ref, wpr_ref, bpr_ref,
                 o_ref, acc_ref, *, n_head):
    l = pl.program_id(1)
    last = pl.num_programs(1) - 1

    # Layer 0: fold in the positional embedding (no separate add kernel).
    @pl.when(l == 0)
    def _():
        acc_ref[...] = x_ref[...] + pos_ref[...]

    x = acc_ref[...]                                   # (TB, S, D) f32, resident
    tb, S, D = x.shape
    hd = D // n_head

    # MaPLe compound-prompt injection on the resident tile: rows [1,1+n_ctx)
    # replaced for layers 1..depth-1 (mask is all-zero for other layers).
    m = injm_ref[...]                                  # (S, 1) in {0,1}
    x = x * (1.0 - m) + injt_ref[...] * m

    x2 = x.reshape(tb * S, D)

    # ---- ln_1 + fused QKV (Q columns pre-scaled by 1/sqrt(hd) host-side) ----
    wqkv = wqkv_ref[...]
    xn = _ln_rows(x2, g1_ref[...], b1_ref[...])
    qkv = (jnp.dot(xn.astype(wqkv.dtype), wqkv,
                   preferred_element_type=jnp.float32) + bqkv_ref[...])
    qkv = qkv.reshape(tb, S, 3 * D)

    # ---- causal multi-head attention: per-head slices feed batched einsums
    #      directly (no q/k/v head-stacking concats) ----
    mask = mask_ref[...]                               # (S, S)
    outs = []
    for h in range(n_head):
        q_h = qkv[:, :, h * hd:(h + 1) * hd].astype(COMPUTE_DTYPE)
        k_h = qkv[:, :, D + h * hd:D + (h + 1) * hd].astype(COMPUTE_DTYPE)
        v_h = qkv[:, :, 2 * D + h * hd:2 * D + (h + 1) * hd].astype(COMPUTE_DTYPE)
        s = jnp.einsum('bqd,bkd->bqk', q_h, k_h,
                       preferred_element_type=jnp.float32) + mask
        s = s - jnp.max(s, axis=-1, keepdims=True)
        e = jnp.exp(s)                                 # softmax kept in f32
        p = e * pl.reciprocal(jnp.sum(e, axis=-1, keepdims=True), approx=True)
        outs.append(jnp.einsum('bqk,bkd->bqd', p.astype(COMPUTE_DTYPE), v_h,
                               preferred_element_type=jnp.float32))
    attn = jnp.concatenate(outs, axis=-1).reshape(tb * S, D)

    # ---- fused out-projection + residual ----
    wo = wo_ref[...]
    x2 = x2 + (jnp.dot(attn.astype(wo.dtype), wo,
                       preferred_element_type=jnp.float32) + bo_ref[...])

    # ---- ln_2 + MLP (c_fc -> QuickGELU -> c_proj) + residual ----
    wfc = wfc_ref[...]
    wpr = wpr_ref[...]
    xn2 = _ln_rows(x2, g2_ref[...], b2_ref[...])
    h1 = (jnp.dot(xn2.astype(wfc.dtype), wfc,
                  preferred_element_type=jnp.float32) + bfc_ref[...])
    h1 = h1 * jax.nn.sigmoid(1.702 * h1)               # QuickGELU in f32
    x2 = x2 + (jnp.dot(h1.astype(wpr.dtype), wpr,
                       preferred_element_type=jnp.float32) + bpr_ref[...])

    y = x2.reshape(tb, S, D)
    acc_ref[...] = y                                   # carry to next layer in VMEM

    @pl.when(l == last)
    def _():
        o_ref[...] = y                                 # one HBM writeback per b-block


def transformer_stack(x, inj_tmpl, inj_mask, kp):
    B, S, D = x.shape
    L = kp['wqkv'].shape[0]
    tb = _pick_tb(B, S, D, _num_tensorcores())

    def inv(a):                       # grid-invariant whole-array block
        return pl.BlockSpec(a.shape, lambda b, l, nd=a.ndim: (0,) * nd)

    def per_layer(a):                 # (L, ...) stacked, indexed by the layer axis
        return pl.BlockSpec((None,) + a.shape[1:],
                            lambda b, l, nd=a.ndim: (l,) + (0,) * (nd - 1))

    operands = [
        (x, pl.BlockSpec((tb, S, D), lambda b, l: (b, 0, 0))),
        (kp['pos'], inv(kp['pos'])),
        (kp['mask'], inv(kp['mask'])),
        (inj_mask, per_layer(inj_mask)),
        (inj_tmpl, per_layer(inj_tmpl)),
    ]
    for name in ('ln1_g', 'ln1_b', 'wqkv', 'bqkv', 'wo', 'bo',
                 'ln2_g', 'ln2_b', 'wfc', 'bfc', 'wpr', 'bpr'):
        operands.append((kp[name], per_layer(kp[name])))

    kernel = functools.partial(stack_kernel, n_head=kp['n_head'])
    return pl.pallas_call(
        kernel,
        out_shape=jax.ShapeDtypeStruct((B, S, D), jnp.float32),
        grid=(B // tb, L),
        in_specs=[s for _, s in operands],
        out_specs=pl.BlockSpec((tb, S, D), lambda b, l: (b, 0, 0)),
        scratch_shapes=[pltpu.VMEM((tb, S, D), jnp.float32)],
        compiler_params=pltpu.CompilerParams(
            dimension_semantics=("parallel", "arbitrary"),
            vmem_limit_bytes=_vmem_limit_bytes()),
    )(*[a for a, _ in operands])


# --------------------------------------------------------------------------
# Kernel 2: single-step EOT gather (B small manual DMAs) + ln_final on the
#           gathered rows + one batched (B, D) @ (D, P) text projection.
# --------------------------------------------------------------------------
def final_kernel(eot_ref, x_hbm, g_ref, b_ref, w_ref, o_ref,
                 rows_ref, sem, *, seq_len):
    n_rows = o_ref.shape[0]

    @pl.loop(0, n_rows)
    def _issue(i):
        row = i * seq_len + eot_ref[i]
        pltpu.make_async_copy(x_hbm.at[pl.ds(row, 1), :],
                              rows_ref.at[pl.ds(i, 1), :], sem.at[0]).start()

    @pl.loop(0, n_rows)
    def _drain(i):
        pltpu.make_async_copy(x_hbm.at[pl.ds(0, 1), :],
                              rows_ref.at[pl.ds(0, 1), :], sem.at[0]).wait()

    w = w_ref[...]
    rows = _ln_rows(rows_ref[...], g_ref[...], b_ref[...])
    o_ref[...] = jnp.dot(rows.astype(w.dtype), w,
                         preferred_element_type=jnp.float32).astype(jnp.float32)


def project_eot(x, eot_idx, ln_g, ln_b, text_proj):
    B, S, D = x.shape
    P = text_proj.shape[1]
    x2d = x.reshape(B * S, D)     # flat 2-D view so the gather is a 1-D row offset
    kernel = functools.partial(final_kernel, seq_len=S)
    return pl.pallas_call(
        kernel,
        out_shape=jax.ShapeDtypeStruct((B, P), jnp.float32),
        grid_spec=pltpu.PrefetchScalarGridSpec(
            num_scalar_prefetch=1,
            grid=(1,),
            in_specs=[
                pl.BlockSpec(memory_space=pl.ANY),            # x stays in HBM
                pl.BlockSpec((1, D), lambda i, eot: (0, 0)),  # ln_final gamma
                pl.BlockSpec((1, D), lambda i, eot: (0, 0)),  # ln_final beta
                pl.BlockSpec((D, P), lambda i, eot: (0, 0)),  # text projection
            ],
            out_specs=pl.BlockSpec((B, P), lambda i, eot: (0, 0)),
            scratch_shapes=[pltpu.VMEM((B, D), jnp.float32),
                            pltpu.SemaphoreType.DMA((1,))]),
        compiler_params=pltpu.CompilerParams(
            dimension_semantics=("arbitrary",)),
    )(eot_idx, x2d, ln_g, ln_b, text_proj)


# --------------------------------------------------------------------------
# Host-side, one-time weight re-layout:
#   torch (out,in) -> x @ W orientation, cast to bf16, stack along a leading
#   layer axis, fold 1/sqrt(head_dim) into the Q columns of wqkv/bqkv.
# --------------------------------------------------------------------------
def prepare_params(params, compute_dtype=COMPUTE_DTYPE):
    blocks = params['blocks']
    D = blocks[0]['wo'].shape[0]
    n_head = params['n_head']
    scale = 1.0 / ((D // n_head) ** 0.5)

    def stack(fn):
        return jnp.stack([fn(p) for p in blocks])

    def qkv_w(p):   # (3D, D) -> (D, 3D); scale Q columns; bf16
        return p['wqkv'].T.at[:, :D].multiply(scale).astype(compute_dtype)

    def qkv_b(p):   # (1, 3D); scale Q part; keep f32 (added after f32 accum)
        return p['bqkv'].at[:, :D].multiply(scale)

    return dict(
        n_head=n_head,
        mask=params['mask'],
        pos=params['pos'],
        ln_f_g=params['ln_f_g'], ln_f_b=params['ln_f_b'],
        text_proj=params['text_proj'].astype(compute_dtype),
        ln1_g=stack(lambda p: p['ln1_g']), ln1_b=stack(lambda p: p['ln1_b']),
        wqkv=stack(qkv_w), bqkv=stack(qkv_b),
        wo=stack(lambda p: p['wo'].T.astype(compute_dtype)),
        bo=stack(lambda p: p['bo']),
        ln2_g=stack(lambda p: p['ln2_g']), ln2_b=stack(lambda p: p['ln2_b']),
        wfc=stack(lambda p: p['wfc'].T.astype(compute_dtype)),
        bfc=stack(lambda p: p['bfc']),
        wpr=stack(lambda p: p['wpr'].T.astype(compute_dtype)),
        bpr=stack(lambda p: p['bpr']),
    )


def _build_injection(compound_prompts, L, S, D):
    """Per-layer injection template (L,S,D) and 0/1 row mask (L,S,1)."""
    tmpl = jnp.zeros((L, S, D), jnp.float32)
    msk = jnp.zeros((L, S, 1), jnp.float32)
    for i, cp in enumerate(compound_prompts):
        layer = i + 1
        if layer >= L:
            break
        n_ctx = cp.shape[0]
        tmpl = tmpl.at[layer, 1:1 + n_ctx, :].set(cp.astype(jnp.float32))
        msk = msk.at[layer, 1:1 + n_ctx, :].set(1.0)
    return tmpl, msk


# --------------------------------------------------------------------------
# Full TextEncoder_MaPLe forward (expects prepare_params()-style weights)
# --------------------------------------------------------------------------
def text_encoder_maple_forward(prompts, tokenized_prompts, compound_prompts, kp):
    B, S, D = prompts.shape
    L = kp['wqkv'].shape[0]
    inj_tmpl, inj_mask = _build_injection(compound_prompts, L, S, D)
    x = transformer_stack(prompts.astype(jnp.float32), inj_tmpl, inj_mask, kp)
    eot = jnp.argmax(tokenized_prompts, axis=-1).astype(jnp.int32)
    return project_eot(x, eot, kp['ln_f_g'], kp['ln_f_b'], kp['text_proj'])


# --------------------------------------------------------------------------
# Pure-JAX f32 reference (torch-layout weights) for verification
# --------------------------------------------------------------------------
def _ln(v, g, b):
    mu = jnp.mean(v, -1, keepdims=True)
    var = jnp.mean((v - mu) ** 2, -1, keepdims=True)
    return (v - mu) * jax.lax.rsqrt(var + EPS) * g + b


def _ref_block(x, mask, p, n_head):
    B, S, D = x.shape
    hd = D // n_head
    xn = _ln(x, p['ln1_g'][0], p['ln1_b'][0])
    qkv = xn @ p['wqkv'].T + p['bqkv'][0]
    q, k, v = jnp.split(qkv, 3, axis=-1)
    q = q.reshape(B, S, n_head, hd)
    k = k.reshape(B, S, n_head, hd)
    v = v.reshape(B, S, n_head, hd)
    s = jnp.einsum('bqhd,bkhd->bhqk', q, k) / (hd ** 0.5) + mask
    pw = jax.nn.softmax(s, axis=-1)
    o = jnp.einsum('bhqk,bkhd->bqhd', pw, v).reshape(B, S, D)
    x = x + o @ p['wo'].T + p['bo'][0]
    xn2 = _ln(x, p['ln2_g'][0], p['ln2_b'][0])
    h1 = xn2 @ p['wfc'].T + p['bfc'][0]
    h1 = h1 * jax.nn.sigmoid(1.702 * h1)
    return x + h1 @ p['wpr'].T + p['bpr'][0]


def reference_forward(prompts, tokenized_prompts, compound_prompts, params):
    x = prompts + params['pos'][None]
    counter = 0
    n_ctx = compound_prompts[0].shape[0] if compound_prompts else 0
    for i, p in enumerate(params['blocks']):
        if i > 0 and counter < len(compound_prompts):
            B, _, D = x.shape
            ctx = jnp.broadcast_to(compound_prompts[counter][None], (B, n_ctx, D))
            x = jnp.concatenate([x[:, :1, :], ctx, x[:, 1 + n_ctx:, :]], axis=1)
            counter += 1
        x = _ref_block(x, params['mask'], p, params['n_head'])
    x = _ln(x, params['ln_f_g'][0], params['ln_f_b'][0])
    eot = jnp.argmax(tokenized_prompts, axis=-1)
    sel = x[jnp.arange(x.shape[0]), eot]
    return sel @ params['text_proj']


# --------------------------------------------------------------------------
# Deterministic synthetic parameters (torch (out,in) layout; prepare_params()
# re-lays them for the kernels)
# --------------------------------------------------------------------------
def init_params(key, *, n_layers, D, S, n_head, P):
    keys = iter(jax.random.split(key, 12 * n_layers + 8))

    def w(shape, scale=0.02):
        return (scale * jax.random.normal(next(keys), shape)).astype(jnp.float32)

    blocks = []
    for _ in range(n_layers):
        blocks.append(dict(
            ln1_g=1.0 + w((1, D), 0.05), ln1_b=w((1, D), 0.02),
            wqkv=w((3 * D, D)), bqkv=w((1, 3 * D), 0.01),
            wo=w((D, D)), bo=w((1, D), 0.01),
            ln2_g=1.0 + w((1, D), 0.05), ln2_b=w((1, D), 0.02),
            wfc=w((4 * D, D)), bfc=w((1, 4 * D), 0.01),
            wpr=w((D, 4 * D)), bpr=w((1, D), 0.01),
        ))

    i = jnp.arange(S)
    mask = jnp.where(i[None, :] > i[:, None], NEG_INF, 0.0).astype(jnp.float32)

    return dict(
        blocks=blocks,
        n_head=n_head,
        mask=mask,
        pos=w((S, D)),
        ln_f_g=1.0 + w((1, D), 0.05),
        ln_f_b=w((1, D), 0.02),
        text_proj=w((D, P)),
    )


# --------------------------------------------------------------------------
if __name__ == "__main__":
    key = jax.random.PRNGKey(0)
    # n_prompts, context_len, width, heads, embed_dim (small, sublane-aligned S)
    B, S, D, H, P = 4, 8, 64, 4, 32
    n_layers, n_ctx, depth = 3, 2, 3       # depth-1 = 2 deep compound prompts

    k1, k2, k3, k4 = jax.random.split(key, 4)
    params = init_params(k1, n_layers=n_layers, D=D, S=S, n_head=H, P=P)
    kparams = prepare_params(params)       # one-time host-side re-layout (bf16)

    prompts = 0.02 * jax.random.normal(k2, (B, S, D), jnp.float32)
    compound_prompts = [0.02 * jax.random.normal(k, (n_ctx, D), jnp.float32)
                        for k in jax.random.split(k3, depth - 1)]
    tokenized = jax.random.randint(k4, (B, S), 1, 100, dtype=jnp.int32)
    eot_pos = jnp.array([5, 7, 3, 6], dtype=jnp.int32)
    tokenized = tokenized.at[jnp.arange(B), eot_pos].set(49407)   # EOT = argmax token

    out = text_encoder_maple_forward(prompts, tokenized, compound_prompts, kparams)
    out = jax.block_until_ready(out)

    ref = reference_forward(prompts, tokenized, compound_prompts, params)
    assert out.shape == (B, P), out.shape
    # bf16 matmul operands/weights vs f32 reference -> loosened tolerance.
    assert jnp.allclose(out, ref, rtol=5e-2, atol=1e-2), (
        float(jnp.max(jnp.abs(out - ref))))
    print("KERNEL_OK")
</pallas_src>

<mosaic_0001>
module attributes {stable_mosaic.version = 11 : i64} {
  func.func @stack_kernel(%arg0: i32, %arg1: i32, %arg2: memref<4x8x64xf32, #tpu.memory_space<vmem>>, %arg3: memref<8x64xf32, #tpu.memory_space<vmem>>, %arg4: memref<8x8xf32, #tpu.memory_space<vmem>>, %arg5: memref<1x8x1xf32, #tpu.memory_space<vmem>>, %arg6: memref<1x8x64xf32, #tpu.memory_space<vmem>>, %arg7: memref<1x1x64xf32, #tpu.memory_space<vmem>>, %arg8: memref<1x1x64xf32, #tpu.memory_space<vmem>>, %arg9: memref<1x64x192xbf16, #tpu.memory_space<vmem>>, %arg10: memref<1x1x192xf32, #tpu.memory_space<vmem>>, %arg11: memref<1x64x64xbf16, #tpu.memory_space<vmem>>, %arg12: memref<1x1x64xf32, #tpu.memory_space<vmem>>, %arg13: memref<1x1x64xf32, #tpu.memory_space<vmem>>, %arg14: memref<1x1x64xf32, #tpu.memory_space<vmem>>, %arg15: memref<1x64x256xbf16, #tpu.memory_space<vmem>>, %arg16: memref<1x1x256xf32, #tpu.memory_space<vmem>>, %arg17: memref<1x256x64xbf16, #tpu.memory_space<vmem>>, %arg18: memref<1x1x64xf32, #tpu.memory_space<vmem>>, %arg19: memref<4x8x64xf32, #tpu.memory_space<vmem>>, %arg20: memref<4x8x64xf32, #tpu.memory_space<vmem>>) attributes {dimension_semantics = [#tpu.dimension_semantics<parallel>, #tpu.dimension_semantics<arbitrary>], iteration_bounds = array<i64: 1, 3>, scalar_prefetch = 0 : i64, scratch_operands = 1 : i64, tpu.core_type = #tpu.core_type<tc>, window_params = [{transform_indices = @transform_0, window_bounds = array<i64: 4, 8, 64>}, {pipeline_mode = #tpu.pipeline_mode<synchronous>, transform_indices = @transform_1, window_bounds = array<i64: 8, 64>}, {pipeline_mode = #tpu.pipeline_mode<synchronous>, transform_indices = @transform_2, window_bounds = array<i64: 8, 8>}, {transform_indices = @transform_3, window_bounds = array<i64: 1, 8, 1>}, {transform_indices = @transform_4, window_bounds = array<i64: 1, 8, 64>}, {transform_indices = @transform_5, window_bounds = array<i64: 1, 1, 64>}, {transform_indices = @transform_6, window_bounds = array<i64: 1, 1, 64>}, {transform_indices = @transform_7, window_bounds = array<i64: 1, 64, 192>}, {transform_indices = @transform_8, window_bounds = array<i64: 1, 1, 192>}, {transform_indices = @transform_9, window_bounds = array<i64: 1, 64, 64>}, {transform_indices = @transform_10, window_bounds = array<i64: 1, 1, 64>}, {transform_indices = @transform_11, window_bounds = array<i64: 1, 1, 64>}, {transform_indices = @transform_12, window_bounds = array<i64: 1, 1, 64>}, {transform_indices = @transform_13, window_bounds = array<i64: 1, 64, 256>}, {transform_indices = @transform_14, window_bounds = array<i64: 1, 1, 256>}, {transform_indices = @transform_15, window_bounds = array<i64: 1, 256, 64>}, {transform_indices = @transform_16, window_bounds = array<i64: 1, 1, 64>}, {transform_indices = @transform_17, window_bounds = array<i64: 4, 8, 64>}]} {
    %c0_i32 = arith.constant 0 : i32
    %0 = arith.cmpi eq, %arg1, %c0_i32 : i32
    %1 = arith.extui %0 : i1 to i32
    %c0_i32_0 = arith.constant 0 : i32
    %2 = arith.cmpi ne, %1, %c0_i32_0 : i32
    scf.if %2 {
      %c0_85 = arith.constant 0 : index
      %c0_86 = arith.constant 0 : index
      %c0_87 = arith.constant 0 : index
      %214 = vector.load %arg2[%c0_85, %c0_86, %c0_87] : memref<4x8x64xf32, #tpu.memory_space<vmem>>, vector<4x8x64xf32>
      %c0_88 = arith.constant 0 : index
      %c0_89 = arith.constant 0 : index
      %215 = vector.load %arg3[%c0_88, %c0_89] : memref<8x64xf32, #tpu.memory_space<vmem>>, vector<8x64xf32>
      %216 = vector.shape_cast %215 : vector<8x64xf32> to vector<1x8x64xf32>
      %217 = vector.broadcast %216 : vector<1x8x64xf32> to vector<4x8x64xf32>
      %218 = arith.addf %214, %217 : vector<4x8x64xf32>
      %c0_90 = arith.constant 0 : index
      %c0_91 = arith.constant 0 : index
      %c0_92 = arith.constant 0 : index
      %219 = vector.load %arg20[%c0_90, %c0_91, %c0_92] : memref<4x8x64xf32, #tpu.memory_space<vmem>>, vector<4x8x64xf32>
      tpu.vector_store %arg20[%c0_90, %c0_91, %c0_92], %218 {strides = array<i32>} : memref<4x8x64xf32, #tpu.memory_space<vmem>>, vector<4x8x64xf32>,
    } else {
    }
    %c0 = arith.constant 0 : index
    %c0_1 = arith.constant 0 : index
    %c0_2 = arith.constant 0 : index
    %3 = vector.load %arg20[%c0, %c0_1, %c0_2] : memref<4x8x64xf32, #tpu.memory_space<vmem>>, vector<4x8x64xf32>
    %c0_3 = arith.constant 0 : index
    %c0_4 = arith.constant 0 : index
    %c0_5 = arith.constant 0 : index
    %4 = vector.load %arg5[%c0_3, %c0_4, %c0_5] : memref<1x8x1xf32, #tpu.memory_space<vmem>>, vector<1x8x1xf32>
    %5 = vector.shape_cast %4 : vector<1x8x1xf32> to vector<8x1xf32>
    %cst = arith.constant 1.000000e+00 : f32
    %6 = vector.broadcast %cst : f32 to vector<8x1xf32>
    %7 = arith.subf %6, %5 : vector<8x1xf32>
    %8 = vector.shape_cast %7 : vector<8x1xf32> to vector<1x8x1xf32>
    %9 = vector.broadcast %8 : vector<1x8x1xf32> to vector<4x8x64xf32>
    %10 = arith.mulf %3, %9 : vector<4x8x64xf32>
    %c0_6 = arith.constant 0 : index
    %c0_7 = arith.constant 0 : index
    %c0_8 = arith.constant 0 : index
    %11 = vector.load %arg6[%c0_6, %c0_7, %c0_8] : memref<1x8x64xf32, #tpu.memory_space<vmem>>, vector<1x8x64xf32>
    %12 = vector.shape_cast %11 : vector<1x8x64xf32> to vector<8x64xf32>
    %13 = vector.broadcast %5 : vector<8x1xf32> to vector<8x64xf32>
    %14 = arith.mulf %12, %13 : vector<8x64xf32>
    %15 = vector.shape_cast %14 : vector<8x64xf32> to vector<1x8x64xf32>
    %16 = vector.broadcast %15 : vector<1x8x64xf32> to vector<4x8x64xf32>
    %17 = arith.addf %10, %16 : vector<4x8x64xf32>
    %18 = vector.shape_cast %17 : vector<4x8x64xf32> to vector<32x64xf32>
    %c0_9 = arith.constant 0 : index
    %c0_10 = arith.constant 0 : index
    %c0_11 = arith.constant 0 : index
    %19 = vector.load %arg9[%c0_9, %c0_10, %c0_11] : memref<1x64x192xbf16, #tpu.memory_space<vmem>>, vector<1x64x192xbf16>
    %20 = vector.shape_cast %19 : vector<1x64x192xbf16> to vector<64x192xbf16>
    %c0_12 = arith.constant 0 : index
    %c0_13 = arith.constant 0 : index
    %c0_14 = arith.constant 0 : index
    %21 = vector.load %arg7[%c0_12, %c0_13, %c0_14] : memref<1x1x64xf32, #tpu.memory_space<vmem>>, vector<1x1x64xf32>
    %22 = vector.shape_cast %21 : vector<1x1x64xf32> to vector<1x64xf32>
    %c0_15 = arith.constant 0 : index
    %c0_16 = arith.constant 0 : index
    %c0_17 = arith.constant 0 : index
    %23 = vector.load %arg8[%c0_15, %c0_16, %c0_17] : memref<1x1x64xf32, #tpu.memory_space<vmem>>, vector<1x1x64xf32>
    %24 = vector.shape_cast %23 : vector<1x1x64xf32> to vector<1x64xf32>
    %cst_18 = arith.constant dense<0.000000e+00> : vector<32xf32>
    %25 = vector.multi_reduction <add>, %18, %cst_18 [1] : vector<32x64xf32> to vector<32xf32>
    %26 = vector.shape_cast %25 : vector<32xf32> to vector<32x1xf32>
    %cst_19 = arith.constant 6.400000e+01 : f32
    %27 = vector.broadcast %cst_19 : f32 to vector<32x1xf32>
    %28 = arith.divf %26, %27 : vector<32x1xf32>
    %29 = arith.mulf %18, %18 : vector<32x64xf32>
    %cst_20 = arith.constant dense<0.000000e+00> : vector<32xf32>
    %30 = vector.multi_reduction <add>, %29, %cst_20 [1] : vector<32x64xf32> to vector<32xf32>
    %31 = vector.shape_cast %30 : vector<32xf32> to vector<32x1xf32>
    %cst_21 = arith.constant 6.400000e+01 : f32
    %32 = vector.broadcast %cst_21 : f32 to vector<32x1xf32>
    %33 = arith.divf %31, %32 : vector<32x1xf32>
    %34 = arith.mulf %28, %28 : vector<32x1xf32>
    %35 = arith.subf %33, %34 : vector<32x1xf32>
    %cst_22 = arith.constant 0.000000e+00 : f32
    %36 = vector.broadcast %cst_22 : f32 to vector<32x1xf32>
    %37 = arith.maximumf %35, %36 : vector<32x1xf32>
    %38 = vector.broadcast %28 : vector<32x1xf32> to vector<32x64xf32>
    %39 = arith.subf %18, %38 : vector<32x64xf32>
    %cst_23 = arith.constant 9.99999974E-6 : f32
    %40 = vector.broadcast %cst_23 : f32 to vector<32x1xf32>
    %41 = arith.addf %37, %40 : vector<32x1xf32>
    %42 = math.rsqrt %41 : vector<32x1xf32>
    %43 = vector.broadcast %42 : vector<32x1xf32> to vector<32x64xf32>
    %44 = arith.mulf %39, %43 : vector<32x64xf32>
    %45 = vector.broadcast %22 : vector<1x64xf32> to vector<32x64xf32>
    %46 = arith.mulf %44, %45 : vector<32x64xf32>
    %47 = vector.broadcast %24 : vector<1x64xf32> to vector<32x64xf32>
    %48 = arith.addf %46, %47 : vector<32x64xf32>
    %49 = arith.truncf %48 : vector<32x64xf32> to vector<32x64xbf16>
    %cst_24 = arith.constant dense<0.000000e+00> : vector<32x192xf32>
    %50 = tpu.matmul %49, %20, %cst_24 {dimension_numbers = #tpu.dot_dimension_numbers<[1], [0], [0], [1], [0, 0, 1, 1], [], []>} : vector<32x64xbf16>, vector<64x192xbf16>, vector<32x192xf32> -> vector<32x192xf32>
    %c0_25 = arith.constant 0 : index
    %c0_26 = arith.constant 0 : index
    %c0_27 = arith.constant 0 : index
    %51 = vector.load %arg10[%c0_25, %c0_26, %c0_27] : memref<1x1x192xf32, #tpu.memory_space<vmem>>, vector<1x1x192xf32>
    %52 = vector.shape_cast %51 : vector<1x1x192xf32> to vector<1x192xf32>
    %53 = vector.broadcast %52 : vector<1x192xf32> to vector<32x192xf32>
    %54 = arith.addf %50, %53 : vector<32x192xf32>
    %55 = vector.shape_cast %54 : vector<32x192xf32> to vector<4x8x192xf32>
    %c0_28 = arith.constant 0 : index
    %c0_29 = arith.constant 0 : index
    %56 = vector.load %arg4[%c0_28, %c0_29] : memref<8x8xf32, #tpu.memory_space<vmem>>, vector<8x8xf32>
    %57 = vector.extract_strided_slice %55 {offsets = [0, 0, 0], sizes = [4, 8, 16], strides = [1, 1, 1]} : vector<4x8x192xf32> to vector<4x8x16xf32>
    %58 = arith.truncf %57 : vector<4x8x16xf32> to vector<4x8x16xbf16>
    %59 = vector.extract_strided_slice %55 {offsets = [0, 0, 64], sizes = [4, 8, 16], strides = [1, 1, 1]} : vector<4x8x192xf32> to vector<4x8x16xf32>
    %60 = arith.truncf %59 : vector<4x8x16xf32> to vector<4x8x16xbf16>
    %61 = vector.extract_strided_slice %55 {offsets = [0, 0, 128], sizes = [4, 8, 16], strides = [1, 1, 1]} : vector<4x8x192xf32> to vector<4x8x16xf32>
    %62 = arith.truncf %61 : vector<4x8x16xf32> to vector<4x8x16xbf16>
    "tpu.trace_start"() <{level = 10 : i32, message = "bqd,bkd->bqk"}> : () -> ()
    %cst_30 = arith.constant dense<0.000000e+00> : vector<4x8x8xf32>
    %63 = tpu.matmul %58, %60, %cst_30 {dimension_numbers = #tpu.dot_dimension_numbers<[2], [2], [1], [1], [0, 0, 0, 1, 1, 1], [0], [0]>} : vector<4x8x16xbf16>, vector<4x8x16xbf16>, vector<4x8x8xf32> -> vector<4x8x8xf32>
    "tpu.trace_stop"() : () -> ()
    %64 = vector.shape_cast %56 : vector<8x8xf32> to vector<1x8x8xf32>
    %65 = vector.broadcast %64 : vector<1x8x8xf32> to vector<4x8x8xf32>
    %66 = arith.addf %63, %65 : vector<4x8x8xf32>
    %cst_31 = arith.constant dense<0xFF800000> : vector<4x8xf32>
    %67 = vector.multi_reduction <maximumf>, %66, %cst_31 [2] : vector<4x8x8xf32> to vector<4x8xf32>
    %68 = vector.shape_cast %67 : vector<4x8xf32> to vector<4x8x1xf32>
    %69 = vector.broadcast %68 : vector<4x8x1xf32> to vector<4x8x8xf32>
    %70 = arith.subf %66, %69 : vector<4x8x8xf32>
    %71 = math.exp %70 : vector<4x8x8xf32>
    %cst_32 = arith.constant dense<0.000000e+00> : vector<4x8xf32>
    %72 = vector.multi_reduction <add>, %71, %cst_32 [2] : vector<4x8x8xf32> to vector<4x8xf32>
    %73 = vector.shape_cast %72 : vector<4x8xf32> to vector<4x8x1xf32>
    %74 = tpu.reciprocal %73 {approx = true} : vector<4x8x1xf32> -> vector<4x8x1xf32>
    %75 = vector.broadcast %74 : vector<4x8x1xf32> to vector<4x8x8xf32>
    %76 = arith.mulf %71, %75 : vector<4x8x8xf32>
    %77 = arith.truncf %76 : vector<4x8x8xf32> to vector<4x8x8xbf16>
    "tpu.trace_start"() <{level = 10 : i32, message = "bqk,bkd->bqd"}> : () -> ()
    %cst_33 = arith.constant dense<0.000000e+00> : vector<4x8x16xf32>
    %78 = tpu.matmul %77, %62, %cst_33 {dimension_numbers = #tpu.dot_dimension_numbers<[2], [1], [1], [2], [0, 0, 0, 1, 1, 2], [0], [0]>} : vector<4x8x8xbf16>, vector<4x8x16xbf16>, vector<4x8x16xf32> -> vector<4x8x16xf32>
    "tpu.trace_stop"() : () -> ()
    %79 = vector.extract_strided_slice %55 {offsets = [0, 0, 16], sizes = [4, 8, 16], strides = [1, 1, 1]} : vector<4x8x192xf32> to vector<4x8x16xf32>
    %80 = arith.truncf %79 : vector<4x8x16xf32> to vector<4x8x16xbf16>
    %81 = vector.extract_strided_slice %55 {offsets = [0, 0, 80], sizes = [4, 8, 16], strides = [1, 1, 1]} : vector<4x8x192xf32> to vector<4x8x16xf32>
    %82 = arith.truncf %81 : vector<4x8x16xf32> to vector<4x8x16xbf16>
    %83 = vector.extract_strided_slice %55 {offsets = [0, 0, 144], sizes = [4, 8, 16], strides = [1, 1, 1]} : vector<4x8x192xf32> to vector<4x8x16xf32>
    %84 = arith.truncf %83 : vector<4x8x16xf32> to vector<4x8x16xbf16>
    "tpu.trace_start"() <{level = 10 : i32, message = "bqd,bkd->bqk"}> : () -> ()
    %cst_34 = arith.constant dense<0.000000e+00> : vector<4x8x8xf32>
    %85 = tpu.matmul %80, %82, %cst_34 {dimension_numbers = #tpu.dot_dimension_numbers<[2], [2], [1], [1], [0, 0, 0, 1, 1, 1], [0], [0]>} : vector<4x8x16xbf16>, vector<4x8x16xbf16>, vector<4x8x8xf32> -> vector<4x8x8xf32>
    "tpu.trace_stop"() : () -> ()
    %86 = vector.shape_cast %56 : vector<8x8xf32> to vector<1x8x8xf32>
    %87 = vector.broadcast %86 : vector<1x8x8xf32> to vector<4x8x8xf32>
    %88 = arith.addf %85, %87 : vector<4x8x8xf32>
    %cst_35 = arith.constant dense<0xFF800000> : vector<4x8xf32>
    %89 = vector.multi_reduction <maximumf>, %88, %cst_35 [2] : vector<4x8x8xf32> to vector<4x8xf32>
    %90 = vector.shape_cast %89 : vector<4x8xf32> to vector<4x8x1xf32>
    %91 = vector.broadcast %90 : vector<4x8x1xf32> to vector<4x8x8xf32>
    %92 = arith.subf %88, %91 : vector<4x8x8xf32>
    %93 = math.exp %92 : vector<4x8x8xf32>
    %cst_36 = arith.constant dense<0.000000e+00> : vector<4x8xf32>
    %94 = vector.multi_reduction <add>, %93, %cst_36 [2] : vector<4x8x8xf32> to vector<4x8xf32>
    %95 = vector.shape_cast %94 : vector<4x8xf32> to vector<4x8x1xf32>
    %96 = tpu.reciprocal %95 {approx = true} : vector<4x8x1xf32> -> vector<4x8x1xf32>
    %97 = vector.broadcast %96 : vector<4x8x1xf32> to vector<4x8x8xf32>
    %98 = arith.mulf %93, %97 : vector<4x8x8xf32>
    %99 = arith.truncf %98 : vector<4x8x8xf32> to vector<4x8x8xbf16>
    "tpu.trace_start"() <{level = 10 : i32, message = "bqk,bkd->bqd"}> : () -> ()
    %cst_37 = arith.constant dense<0.000000e+00> : vector<4x8x16xf32>
    %100 = tpu.matmul %99, %84, %cst_37 {dimension_numbers = #tpu.dot_dimension_numbers<[2], [1], [1], [2], [0, 0, 0, 1, 1, 2], [0], [0]>} : vector<4x8x8xbf16>, vector<4x8x16xbf16>, vector<4x8x16xf32> -> vector<4x8x16xf32>
    "tpu.trace_stop"() : () -> ()
    %101 = vector.extract_strided_slice %55 {offsets = [0, 0, 32], sizes = [4, 8, 16], strides = [1, 1, 1]} : vector<4x8x192xf32> to vector<4x8x16xf32>
    %102 = arith.truncf %101 : vector<4x8x16xf32> to vector<4x8x16xbf16>
    %103 = vector.extract_strided_slice %55 {offsets = [0, 0, 96], sizes = [4, 8, 16], strides = [1, 1, 1]} : vector<4x8x192xf32> to vector<4x8x16xf32>
    %104 = arith.truncf %103 : vector<4x8x16xf32> to vector<4x8x16xbf16>
    %105 = vector.extract_strided_slice %55 {offsets = [0, 0, 160], sizes = [4, 8, 16], strides = [1, 1, 1]} : vector<4x8x192xf32> to vector<4x8x16xf32>
    %106 = arith.truncf %105 : vector<4x8x16xf32> to vector<4x8x16xbf16>
    "tpu.trace_start"() <{level = 10 : i32, message = "bqd,bkd->bqk"}> : () -> ()
    %cst_38 = arith.constant dense<0.000000e+00> : vector<4x8x8xf32>
    %107 = tpu.matmul %102, %104, %cst_38 {dimension_numbers = #tpu.dot_dimension_numbers<[2], [2], [1], [1], [0, 0, 0, 1, 1, 1], [0], [0]>} : vector<4x8x16xbf16>, vector<4x8x16xbf16>, vector<4x8x8xf32> -> vector<4x8x8xf32>
    "tpu.trace_stop"() : () -> ()
    %108 = vector.shape_cast %56 : vector<8x8xf32> to vector<1x8x8xf32>
    %109 = vector.broadcast %108 : vector<1x8x8xf32> to vector<4x8x8xf32>
    %110 = arith.addf %107, %109 : vector<4x8x8xf32>
    %cst_39 = arith.constant dense<0xFF800000> : vector<4x8xf32>
    %111 = vector.multi_reduction <maximumf>, %110, %cst_39 [2] : vector<4x8x8xf32> to vector<4x8xf32>
    %112 = vector.shape_cast %111 : vector<4x8xf32> to vector<4x8x1xf32>
    %113 = vector.broadcast %112 : vector<4x8x1xf32> to vector<4x8x8xf32>
    %114 = arith.subf %110, %113 : vector<4x8x8xf32>
    %115 = math.exp %114 : vector<4x8x8xf32>
    %cst_40 = arith.constant dense<0.000000e+00> : vector<4x8xf32>
    %116 = vector.multi_reduction <add>, %115, %cst_40 [2] : vector<4x8x8xf32> to vector<4x8xf32>
    %117 = vector.shape_cast %116 : vector<4x8xf32> to vector<4x8x1xf32>
    %118 = tpu.reciprocal %117 {approx = true} : vector<4x8x1xf32> -> vector<4x8x1xf32>
    %119 = vector.broadcast %118 : vector<4x8x1xf32> to vector<4x8x8xf32>
    %120 = arith.mulf %115, %119 : vector<4x8x8xf32>
    %121 = arith.truncf %120 : vector<4x8x8xf32> to vector<4x8x8xbf16>
    "tpu.trace_start"() <{level = 10 : i32, message = "bqk,bkd->bqd"}> : () -> ()
    %cst_41 = arith.constant dense<0.000000e+00> : vector<4x8x16xf32>
    %122 = tpu.matmul %121, %106, %cst_41 {dimension_numbers = #tpu.dot_dimension_numbers<[2], [1], [1], [2], [0, 0, 0, 1, 1, 2], [0], [0]>} : vector<4x8x8xbf16>, vector<4x8x16xbf16>, vector<4x8x16xf32> -> vector<4x8x16xf32>
    "tpu.trace_stop"() : () -> ()
    %123 = vector.extract_strided_slice %55 {offsets = [0, 0, 48], sizes = [4, 8, 16], strides = [1, 1, 1]} : vector<4x8x192xf32> to vector<4x8x16xf32>
    %124 = arith.truncf %123 : vector<4x8x16xf32> to vector<4x8x16xbf16>
    %125 = vector.extract_strided_slice %55 {offsets = [0, 0, 112], sizes = [4, 8, 16], strides = [1, 1, 1]} : vector<4x8x192xf32> to vector<4x8x16xf32>
    %126 = arith.truncf %125 : vector<4x8x16xf32> to vector<4x8x16xbf16>
    %127 = vector.extract_strided_slice %55 {offsets = [0, 0, 176], sizes = [4, 8, 16], strides = [1, 1, 1]} : vector<4x8x192xf32> to vector<4x8x16xf32>
    %128 = arith.truncf %127 : vector<4x8x16xf32> to vector<4x8x16xbf16>
    "tpu.trace_start"() <{level = 10 : i32, message = "bqd,bkd->bqk"}> : () -> ()
    %cst_42 = arith.constant dense<0.000000e+00> : vector<4x8x8xf32>
    %129 = tpu.matmul %124, %126, %cst_42 {dimension_numbers = #tpu.dot_dimension_numbers<[2], [2], [1], [1], [0, 0, 0, 1, 1, 1], [0], [0]>} : vector<4x8x16xbf16>, vector<4x8x16xbf16>, vector<4x8x8xf32> -> vector<4x8x8xf32>
    "tpu.trace_stop"() : () -> ()
    %130 = vector.shape_cast %56 : vector<8x8xf32> to vector<1x8x8xf32>
    %131 = vector.broadcast %130 : vector<1x8x8xf32> to vector<4x8x8xf32>
    %132 = arith.addf %129, %131 : vector<4x8x8xf32>
    %cst_43 = arith.constant dense<0xFF800000> : vector<4x8xf32>
    %133 = vector.multi_reduction <maximumf>, %132, %cst_43 [2] : vector<4x8x8xf32> to vector<4x8xf32>
    %134 = vector.shape_cast %133 : vector<4x8xf32> to vector<4x8x1xf32>
    %135 = vector.broadcast %134 : vector<4x8x1xf32> to vector<4x8x8xf32>
    %136 = arith.subf %132, %135 : vector<4x8x8xf32>
    %137 = math.exp %136 : vector<4x8x8xf32>
    %cst_44 = arith.constant dense<0.000000e+00> : vector<4x8xf32>
    %138 = vector.multi_reduction <add>, %137, %cst_44 [2] : vector<4x8x8xf32> to vector<4x8xf32>
    %139 = vector.shape_cast %138 : vector<4x8xf32> to vector<4x8x1xf32>
    %140 = tpu.reciprocal %139 {approx = true} : vector<4x8x1xf32> -> vector<4x8x1xf32>
    %141 = vector.broadcast %140 : vector<4x8x1xf32> to vector<4x8x8xf32>
    %142 = arith.mulf %137, %141 : vector<4x8x8xf32>
    %143 = arith.truncf %142 : vector<4x8x8xf32> to vector<4x8x8xbf16>
    "tpu.trace_start"() <{level = 10 : i32, message = "bqk,bkd->bqd"}> : () -> ()
    %cst_45 = arith.constant dense<0.000000e+00> : vector<4x8x16xf32>
    %144 = tpu.matmul %143, %128, %cst_45 {dimension_numbers = #tpu.dot_dimension_numbers<[2], [1], [1], [2], [0, 0, 0, 1, 1, 2], [0], [0]>} : vector<4x8x8xbf16>, vector<4x8x16xbf16>, vector<4x8x16xf32> -> vector<4x8x16xf32>
    "tpu.trace_stop"() : () -> ()
    %145 = tpu.concatenate %78, %100, %122, %144 in 2 : vector<4x8x16xf32>, vector<4x8x16xf32>, vector<4x8x16xf32>, vector<4x8x16xf32> -> vector<4x8x64xf32>
    %146 = vector.shape_cast %145 : vector<4x8x64xf32> to vector<32x64xf32>
    %c0_46 = arith.constant 0 : index
    %c0_47 = arith.constant 0 : index
    %c0_48 = arith.constant 0 : index
    %147 = vector.load %arg11[%c0_46, %c0_47, %c0_48] : memref<1x64x64xbf16, #tpu.memory_space<vmem>>, vector<1x64x64xbf16>
    %148 = vector.shape_cast %147 : vector<1x64x64xbf16> to vector<64x64xbf16>
    %149 = arith.truncf %146 : vector<32x64xf32> to vector<32x64xbf16>
    %cst_49 = arith.constant dense<0.000000e+00> : vector<32x64xf32>
    %150 = tpu.matmul %149, %148, %cst_49 {dimension_numbers = #tpu.dot_dimension_numbers<[1], [0], [0], [1], [0, 0, 1, 1], [], []>} : vector<32x64xbf16>, vector<64x64xbf16>, vector<32x64xf32> -> vector<32x64xf32>
    %c0_50 = arith.constant 0 : index
    %c0_51 = arith.constant 0 : index
    %c0_52 = arith.constant 0 : index
    %151 = vector.load %arg12[%c0_50, %c0_51, %c0_52] : memref<1x1x64xf32, #tpu.memory_space<vmem>>, vector<1x1x64xf32>
    %152 = vector.shape_cast %151 : vector<1x1x64xf32> to vector<1x64xf32>
    %153 = vector.broadcast %152 : vector<1x64xf32> to vector<32x64xf32>
    %154 = arith.addf %150, %153 : vector<32x64xf32>
    %155 = arith.addf %18, %154 : vector<32x64xf32>
    %c0_53 = arith.constant 0 : index
    %c0_54 = arith.constant 0 : index
    %c0_55 = arith.constant 0 : index
    %156 = vector.load %arg15[%c0_53, %c0_54, %c0_55] : memref<1x64x256xbf16, #tpu.memory_space<vmem>>, vector<1x64x256xbf16>
    %157 = vector.shape_cast %156 : vector<1x64x256xbf16> to vector<64x256xbf16>
    %c0_56 = arith.constant 0 : index
    %c0_57 = arith.constant 0 : index
    %c0_58 = arith.constant 0 : index
    %158 = vector.load %arg17[%c0_56, %c0_57, %c0_58] : memref<1x256x64xbf16, #tpu.memory_space<vmem>>, vector<1x256x64xbf16>
    %159 = vector.shape_cast %158 : vector<1x256x64xbf16> to vector<256x64xbf16>
    %c0_59 = arith.constant 0 : index
    %c0_60 = arith.constant 0 : index
    %c0_61 = arith.constant 0 : index
    %160 = vector.load %arg13[%c0_59, %c0_60, %c0_61] : memref<1x1x64xf32, #tpu.memory_space<vmem>>, vector<1x1x64xf32>
    %161 = vector.shape_cast %160 : vector<1x1x64xf32> to vector<1x64xf32>
    %c0_62 = arith.constant 0 : index
    %c0_63 = arith.constant 0 : index
    %c0_64 = arith.constant 0 : index
    %162 = vector.load %arg14[%c0_62, %c0_63, %c0_64] : memref<1x1x64xf32, #tpu.memory_space<vmem>>, vector<1x1x64xf32>
    %163 = vector.shape_cast %162 : vector<1x1x64xf32> to vector<1x64xf32>
    %cst_65 = arith.constant dense<0.000000e+00> : vector<32xf32>
    %164 = vector.multi_reduction <add>, %155, %cst_65 [1] : vector<32x64xf32> to vector<32xf32>
    %165 = vector.shape_cast %164 : vector<32xf32> to vector<32x1xf32>
    %cst_66 = arith.constant 6.400000e+01 : f32
    %166 = vector.broadcast %cst_66 : f32 to vector<32x1xf32>
    %167 = arith.divf %165, %166 : vector<32x1xf32>
    %168 = arith.mulf %155, %155 : vector<32x64xf32>
    %cst_67 = arith.constant dense<0.000000e+00> : vector<32xf32>
    %169 = vector.multi_reduction <add>, %168, %cst_67 [1] : vector<32x64xf32> to vector<32xf32>
    %170 = vector.shape_cast %169 : vector<32xf32> to vector<32x1xf32>
    %cst_68 = arith.constant 6.400000e+01 : f32
    %171 = vector.broadcast %cst_68 : f32 to vector<32x1xf32>
    %172 = arith.divf %170, %171 : vector<32x1xf32>
    %173 = arith.mulf %167, %167 : vector<32x1xf32>
    %174 = arith.subf %172, %173 : vector<32x1xf32>
    %cst_69 = arith.constant 0.000000e+00 : f32
    %175 = vector.broadcast %cst_69 : f32 to vector<32x1xf32>
    %176 = arith.maximumf %174, %175 : vector<32x1xf32>
    %177 = vector.broadcast %167 : vector<32x1xf32> to vector<32x64xf32>
    %178 = arith.subf %155, %177 : vector<32x64xf32>
    %cst_70 = arith.constant 9.99999974E-6 : f32
    %179 = vector.broadcast %cst_70 : f32 to vector<32x1xf32>
    %180 = arith.addf %176, %179 : vector<32x1xf32>
    %181 = math.rsqrt %180 : vector<32x1xf32>
    %182 = vector.broadcast %181 : vector<32x1xf32> to vector<32x64xf32>
    %183 = arith.mulf %178, %182 : vector<32x64xf32>
    %184 = vector.broadcast %161 : vector<1x64xf32> to vector<32x64xf32>
    %185 = arith.mulf %183, %184 : vector<32x64xf32>
    %186 = vector.broadcast %163 : vector<1x64xf32> to vector<32x64xf32>
    %187 = arith.addf %185, %186 : vector<32x64xf32>
    %188 = arith.truncf %187 : vector<32x64xf32> to vector<32x64xbf16>
    %cst_71 = arith.constant dense<0.000000e+00> : vector<32x256xf32>
    %189 = tpu.matmul %188, %157, %cst_71 {dimension_numbers = #tpu.dot_dimension_numbers<[1], [0], [0], [1], [0, 0, 1, 1], [], []>} : vector<32x64xbf16>, vector<64x256xbf16>, vector<32x256xf32> -> vector<32x256xf32>
    %c0_72 = arith.constant 0 : index
    %c0_73 = arith.constant 0 : index
    %c0_74 = arith.constant 0 : index
    %190 = vector.load %arg16[%c0_72, %c0_73, %c0_74] : memref<1x1x256xf32, #tpu.memory_space<vmem>>, vector<1x1x256xf32>
    %191 = vector.shape_cast %190 : vector<1x1x256xf32> to vector<1x256xf32>
    %192 = vector.broadcast %191 : vector<1x256xf32> to vector<32x256xf32>
    %193 = arith.addf %189, %192 : vector<32x256xf32>
    %cst_75 = arith.constant 1.702000e+00 : f32
    %194 = vector.broadcast %cst_75 : f32 to vector<32x256xf32>
    %195 = arith.mulf %194, %193 : vector<32x256xf32>
    %196 = arith.negf %195 : vector<32x256xf32>
    %197 = math.exp %196 : vector<32x256xf32>
    %cst_76 = arith.constant 1.000000e+00 : f32
    %198 = vector.broadcast %cst_76 : f32 to vector<32x256xf32>
    %199 = arith.addf %198, %197 : vector<32x256xf32>
    %200 = arith.divf %198, %199 : vector<32x256xf32>
    %201 = arith.mulf %193, %200 : vector<32x256xf32>
    %202 = arith.truncf %201 : vector<32x256xf32> to vector<32x256xbf16>
    %cst_77 = arith.constant dense<0.000000e+00> : vector<32x64xf32>
    %203 = tpu.matmul %202, %159, %cst_77 {dimension_numbers = #tpu.dot_dimension_numbers<[1], [0], [0], [1], [0, 0, 1, 1], [], []>} : vector<32x256xbf16>, vector<256x64xbf16>, vector<32x64xf32> -> vector<32x64xf32>
    %c0_78 = arith.constant 0 : index
    %c0_79 = arith.constant 0 : index
    %c0_80 = arith.constant 0 : index
    %204 = vector.load %arg18[%c0_78, %c0_79, %c0_80] : memref<1x1x64xf32, #tpu.memory_space<vmem>>, vector<1x1x64xf32>
    %205 = vector.shape_cast %204 : vector<1x1x64xf32> to vector<1x64xf32>
    %206 = vector.broadcast %205 : vector<1x64xf32> to vector<32x64xf32>
    %207 = arith.addf %203, %206 : vector<32x64xf32>
    %208 = arith.addf %155, %207 : vector<32x64xf32>
    %209 = vector.shape_cast %208 : vector<32x64xf32> to vector<4x8x64xf32>
    %c0_81 = arith.constant 0 : index
    %c0_82 = arith.constant 0 : index
    %c0_83 = arith.constant 0 : index
    %210 = vector.load %arg20[%c0_81, %c0_82, %c0_83] : memref<4x8x64xf32, #tpu.memory_space<vmem>>, vector<4x8x64xf32>
    tpu.vector_store %arg20[%c0_81, %c0_82, %c0_83], %209 {strides = array<i32>} : memref<4x8x64xf32, #tpu.memory_space<vmem>>, vector<4x8x64xf32>,
    %c2_i32 = arith.constant 2 : i32
    %211 = arith.cmpi eq, %arg1, %c2_i32 : i32
    %212 = arith.extui %211 : i1 to i32
    %c0_i32_84 = arith.constant 0 : i32
    %213 = arith.cmpi ne, %212, %c0_i32_84 : i32
    scf.if %213 {
      %c0_85 = arith.constant 0 : index
      %c0_86 = arith.constant 0 : index
      %c0_87 = arith.constant 0 : index
      %214 = vector.load %arg19[%c0_85, %c0_86, %c0_87] : memref<4x8x64xf32, #tpu.memory_space<vmem>>, vector<4x8x64xf32>
      tpu.vector_store %arg19[%c0_85, %c0_86, %c0_87], %209 {strides = array<i32>} : memref<4x8x64xf32, #tpu.memory_space<vmem>>, vector<4x8x64xf32>,
    } else {
    }
    return
  }
  func.func @transform_0(%arg0: i32, %arg1: i32) -> (i32, i32, i32) {
    %c0_i32 = arith.constant 0 : i32
    %c0_i32_0 = arith.constant 0 : i32
    %c0_i32_1 = arith.constant 0 : i32
    return %arg0, %c0_i32, %c0_i32_0 : i32, i32, i32
  }
  func.func @transform_1(%arg0: i32, %arg1: i32) -> (i32, i32) {
    %c0_i32 = arith.constant 0 : i32
    %c0_i32_0 = arith.constant 0 : i32
    %c0_i32_1 = arith.constant 0 : i32
    return %c0_i32, %c0_i32_0 : i32, i32
  }
  func.func @transform_2(%arg0: i32, %arg1: i32) -> (i32, i32) {
    %c0_i32 = arith.constant 0 : i32
    %c0_i32_0 = arith.constant 0 : i32
    %c0_i32_1 = arith.constant 0 : i32
    return %c0_i32, %c0_i32_0 : i32, i32
  }
  func.func @transform_3(%arg0: i32, %arg1: i32) -> (i32, i32, i32) {
    %c0_i32 = arith.constant 0 : i32
    %c0_i32_0 = arith.constant 0 : i32
    %c0_i32_1 = arith.constant 0 : i32
    return %arg1, %c0_i32, %c0_i32_0 : i32, i32, i32
  }
  func.func @transform_4(%arg0: i32, %arg1: i32) -> (i32, i32, i32) {
    %c0_i32 = arith.constant 0 : i32
    %c0_i32_0 = arith.constant 0 : i32
    %c0_i32_1 = arith.constant 0 : i32
    return %arg1, %c0_i32, %c0_i32_0 : i32, i32, i32
  }
  func.func @transform_5(%arg0: i32, %arg1: i32) -> (i32, i32, i32) {
    %c0_i32 = arith.constant 0 : i32
    %c0_i32_0 = arith.constant 0 : i32
    %c0_i32_1 = arith.constant 0 : i32
    return %arg1, %c0_i32, %c0_i32_0 : i32, i32, i32
  }
  func.func @transform_6(%arg0: i32, %arg1: i32) -> (i32, i32, i32) {
    %c0_i32 = arith.constant 0 : i32
    %c0_i32_0 = arith.constant 0 : i32
    %c0_i32_1 = arith.constant 0 : i32
    return %arg1, %c0_i32, %c0_i32_0 : i32, i32, i32
  }
  func.func @transform_7(%arg0: i32, %arg1: i32) -> (i32, i32, i32) {
    %c0_i32 = arith.constant 0 : i32
    %c0_i32_0 = arith.constant 0 : i32
    %c0_i32_1 = arith.constant 0 : i32
    return %arg1, %c0_i32, %c0_i32_0 : i32, i32, i32
  }
  func.func @transform_8(%arg0: i32, %arg1: i32) -> (i32, i32, i32) {
    %c0_i32 = arith.constant 0 : i32
    %c0_i32_0 = arith.constant 0 : i32
    %c0_i32_1 = arith.constant 0 : i32
    return %arg1, %c0_i32, %c0_i32_0 : i32, i32, i32
  }
  func.func @transform_9(%arg0: i32, %arg1: i32) -> (i32, i32, i32) {
    %c0_i32 = arith.constant 0 : i32
    %c0_i32_0 = arith.constant 0 : i32
    %c0_i32_1 = arith.constant 0 : i32
    return %arg1, %c0_i32, %c0_i32_0 : i32, i32, i32
  }
  func.func @transform_10(%arg0: i32, %arg1: i32) -> (i32, i32, i32) {
    %c0_i32 = arith.constant 0 : i32
    %c0_i32_0 = arith.constant 0 : i32
    %c0_i32_1 = arith.constant 0 : i32
    return %arg1, %c0_i32, %c0_i32_0 : i32, i32, i32
  }
  func.func @transform_11(%arg0: i32, %arg1: i32) -> (i32, i32, i32) {
    %c0_i32 = arith.constant 0 : i32
    %c0_i32_0 = arith.constant 0 : i32
    %c0_i32_1 = arith.constant 0 : i32
    return %arg1, %c0_i32, %c0_i32_0 : i32, i32, i32
  }
  func.func @transform_12(%arg0: i32, %arg1: i32) -> (i32, i32, i32) {
    %c0_i32 = arith.constant 0 : i32
    %c0_i32_0 = arith.constant 0 : i32
    %c0_i32_1 = arith.constant 0 : i32
    return %arg1, %c0_i32, %c0_i32_0 : i32, i32, i32
  }
  func.func @transform_13(%arg0: i32, %arg1: i32) -> (i32, i32, i32) {
    %c0_i32 = arith.constant 0 : i32
    %c0_i32_0 = arith.constant 0 : i32
    %c0_i32_1 = arith.constant 0 : i32
    return %arg1, %c0_i32, %c0_i32_0 : i32, i32, i32
  }
  func.func @transform_14(%arg0: i32, %arg1: i32) -> (i32, i32, i32) {
    %c0_i32 = arith.constant 0 : i32
    %c0_i32_0 = arith.constant 0 : i32
    %c0_i32_1 = arith.constant 0 : i32
    return %arg1, %c0_i32, %c0_i32_0 : i32, i32, i32
  }
  func.func @transform_15(%arg0: i32, %arg1: i32) -> (i32, i32, i32) {
    %c0_i32 = arith.constant 0 : i32
    %c0_i32_0 = arith.constant 0 : i32
    %c0_i32_1 = arith.constant 0 : i32
    return %arg1, %c0_i32, %c0_i32_0 : i32, i32, i32
  }
  func.func @transform_16(%arg0: i32, %arg1: i32) -> (i32, i32, i32) {
    %c0_i32 = arith.constant 0 : i32
    %c0_i32_0 = arith.constant 0 : i32
    %c0_i32_1 = arith.constant 0 : i32
    return %arg1, %c0_i32, %c0_i32_0 : i32, i32, i32
  }
  func.func @transform_17(%arg0: i32, %arg1: i32) -> (i32, i32, i32) {
    %c0_i32 = arith.constant 0 : i32
    %c0_i32_0 = arith.constant 0 : i32
    %c0_i32_1 = arith.constant 0 : i32
    return %arg0, %c0_i32, %c0_i32_0 : i32, i32, i32
  }
}

</mosaic_0001>

<llo_original>
// kernel: tpu_custom_call.1
$region0: #{tpu_custom_call.1}
  #allocation0 [shape = 'u32[]', space=smem, size = 0x4, offset = 0x4, fixed_abs, tag = 'smem constant byte address 0x4 - core index']
  #allocation1 [shape = 'u32[72,128]{1,0:T(1,128)}', space=vmem, size = 0x9000, scoped, tag = 'internal scratch']
  #allocation2 [shape = 'f32[4,8,64]{2,1,0:T(8,128)}', space=vmem, size = 0x4000, scoped, tag = 'scratch operand']
  %s0 = inlined_call_operand.vmem [shape: f32[4,8,64], index: 0, kind: input, shape index: {}]
  %s1 = inlined_call_operand.vmem [shape: f32[8,64], index: 1, kind: input, shape index: {}]
  %s2 = inlined_call_operand.vmem [shape: f32[8,8], index: 2, kind: input, shape index: {}]
  %s3 = inlined_call_operand.vmem [shape: f32[3,8,1], index: 3, kind: input, shape index: {}]
  %s4 = inlined_call_operand.vmem [shape: f32[3,8,64], index: 4, kind: input, shape index: {}]
  %s5 = inlined_call_operand.vmem [shape: f32[3,1,64], index: 5, kind: input, shape index: {}]
  %s6 = inlined_call_operand.vmem [shape: f32[3,1,64], index: 6, kind: input, shape index: {}]
  %s7 = inlined_call_operand.vmem [shape: bf16[3,64,192], index: 7, kind: input, shape index: {}]
  %s8 = inlined_call_operand.vmem [shape: f32[3,1,192], index: 8, kind: input, shape index: {}]
  %s9 = inlined_call_operand.vmem [shape: bf16[3,64,64], index: 9, kind: input, shape index: {}]
  %s10 = inlined_call_operand.vmem [shape: f32[3,1,64], index: 10, kind: input, shape index: {}]
  %s11 = inlined_call_operand.vmem [shape: f32[3,1,64], index: 11, kind: input, shape index: {}]
  %s12 = inlined_call_operand.vmem [shape: f32[3,1,64], index: 12, kind: input, shape index: {}]
  %s13 = inlined_call_operand.vmem [shape: bf16[3,64,256], index: 13, kind: input, shape index: {}]
  %s14 = inlined_call_operand.vmem [shape: f32[3,1,256], index: 14, kind: input, shape index: {}]
  %s15 = inlined_call_operand.vmem [shape: bf16[3,256,64], index: 15, kind: input, shape index: {}]
  %s16 = inlined_call_operand.vmem [shape: f32[3,1,64], index: 16, kind: input, shape index: {}]
  %s17 = inlined_call_operand.hbm [shape: f32[4,8,64], index: 17, kind: output, shape index: {}]
  %s18 = sld [smem:[#allocation0]]
  $region109: #{tpu_custom_call.1} parent=0
    _
  %s20 = ssub.s32 1, %s18
  %s21 = scalar_select 0, %s20, %s18
  $region1: #{tpu_custom_call.1} parent=0
    #allocation3 [shape = 'u8[16384]{0}', space=vmem, size = 0x4000, scoped, tag = 'output window, operand 0, single buffered']
    #allocation4 [shape = 's32[2]{0}', space=sflag, size = 0x8, scoped, tag = 'scoped memory for tpu_custom_call.1']
    %22 = vsyncpa [#allocation4], 0
    loop: start=0, step=1, limit=5
    $region2: #{tpu_custom_call.1} parent=1 // loop_pre_header
      _
    $region3: #{tpu_custom_call.1} parent=1 // loop_header
      %s24 = sphi 0, %s28
      %p25 = scmp.ge.s32.totalorder %s24, 5
      %s31 = sphi 0, %s43
      %s32 = sphi 0, %s39
      %s33 = sphi 0, %s31
      %s34 = sphi 0, %s32
      %s35 = sphi 0, %s33
      %s36 = sphi 0, %s34
      %s46 = sphi 0, %s48
      %s49 = sphi 0, %s46
      %s50 = sphi 0, %s49
      %s66 = sphi 0, %s50
      %s70 = sphi 0, %s70
      %s72 = sphi 0, %s70
      %s73 = sphi 0, %s72
      %s87 = sphi 0, %s73
      %s91 = sphi 0, %s91
      %s93 = sphi 0, %s91
      %s94 = sphi 0, %s93
      %s108 = sphi 0, %s94
      %s114 = sphi 0, %s116
      %s117 = sphi 0, %s114
      %s118 = sphi 0, %s117
      %s134 = sphi 0, %s118
      %s140 = sphi 0, %s142
      %s143 = sphi 0, %s140
      %s144 = sphi 0, %s143
      %s160 = sphi 0, %s144
      %s166 = sphi 0, %s168
      %s169 = sphi 0, %s166
      %s170 = sphi 0, %s169
      %s186 = sphi 0, %s170
      %s192 = sphi 0, %s194
      %s195 = sphi 0, %s192
      %s196 = sphi 0, %s195
      %s212 = sphi 0, %s196
      %s218 = sphi 0, %s220
      %s221 = sphi 0, %s218
      %s222 = sphi 0, %s221
      %s238 = sphi 0, %s222
      %s244 = sphi 0, %s246
      %s247 = sphi 0, %s244
      %s248 = sphi 0, %s247
      %s264 = sphi 0, %s248
      %s270 = sphi 0, %s272
      %s273 = sphi 0, %s270
      %s274 = sphi 0, %s273
      %s290 = sphi 0, %s274
      %s296 = sphi 0, %s298
      %s299 = sphi 0, %s296
      %s300 = sphi 0, %s299
      %s316 = sphi 0, %s300
      %s322 = sphi 0, %s324
      %s325 = sphi 0, %s322
      %s326 = sphi 0, %s325
      %s342 = sphi 0, %s326
      %s348 = sphi 0, %s350
      %s351 = sphi 0, %s348
      %s352 = sphi 0, %s351
      %s368 = sphi 0, %s352
      %s374 = sphi 0, %s376
      %s377 = sphi 0, %s374
      %s378 = sphi 0, %s377
      %s394 = sphi 0, %s378
      %s400 = sphi 0, %s402
      %s403 = sphi 0, %s400
      %s404 = sphi 0, %s403
      %s420 = sphi 0, %s404
      %s426 = sphi 0, %s428
      %s429 = sphi 0, %s426
      %s430 = sphi 0, %s429
      %s446 = sphi 0, %s430
      %s452 = sphi 0, %s454
      %s455 = sphi 0, %s452
      %s456 = sphi 0, %s455
      %s472 = sphi 0, %s456
      %s478 = sphi 0, %s480
      %s481 = sphi 0, %s478
      %s482 = sphi 0, %s481
      %s498 = sphi 0, %s482
    $region4: #{tpu_custom_call.1} parent=1 // loop_header_branch
      %27 = sbr.rel (%p25) target = $region8
    $region5: #{tpu_custom_call.1} parent=1 // loop_body
      %s29 = ssub.s32 %s24, 1
      %s30 = ssub.s32 %s24, 2
      %s37 = sadd.s32 1, %s32
      %p38 = scmp.ge.s32.totalorder %s37, 3
      %s39 = scalar_select %p38, 0, %s37
      %s40 = sadd.s32 1, %s31
      %s41 = scalar_select %p38, %s40, %s31
      %p42 = scmp.ge.s32.totalorder %s41, 1
      %s43 = scalar_select %p42, 0, %s41
      %s44 = ssub.s32 %s31, %s43
      %p45 = scmp.eq.s32.totalorder %s44, 0
      %s47 = sadd.s32 %s46, 1
      %s48 = scalar_select %p45, %s46, %s47
      %p51 = pneg %p45
      %p52 = scmp.eq.s32.totalorder %s24, 2
      %p53 = por %p51, %p52
      %p54 = scmp.ne.s32.totalorder %s46, %s49
      %p55 = scmp.eq.s32.totalorder %s24, 0
      %p56 = por %p54, %p55
      %p57 = scmp.ne.s32.totalorder %s46, %s49
      %p58 = scmp.eq.s32.totalorder %s29, 2
      %p59 = por %p57, %p58
      %p60 = scmp.ne.s32.totalorder %s49, %s50
      %p61 = scmp.eq.s32.totalorder %s29, 0
      %p62 = por %p60, %p61
      %p63 = scmp.ne.s32.totalorder %s49, %s50
      %p64 = scmp.eq.s32.totalorder %s30, 2
      %p65 = por %p63, %p64
      %p67 = scmp.ne.s32.totalorder %s50, %s66
      %p68 = scmp.eq.s32.totalorder %s30, 0
      %p69 = por %p67, %p68
      %s71 = sadd.s32 %s70, 1
      %p74 = scmp.eq.s32.totalorder %s24, 2
      %p75 = scmp.ne.s32.totalorder %s70, %s72
      %p76 = scmp.eq.s32.totalorder %s24, 0
      %p77 = por %p75, %p76
      %p78 = scmp.ne.s32.totalorder %s70, %s72
      %p79 = scmp.eq.s32.totalorder %s29, 2
      %p80 = por %p78, %p79
      %p81 = scmp.ne.s32.totalorder %s72, %s73
      %p82 = scmp.eq.s32.totalorder %s29, 0
      %p83 = por %p81, %p82
      %p84 = scmp.ne.s32.totalorder %s72, %s73
      %p85 = scmp.eq.s32.totalorder %s30, 2
      %p86 = por %p84, %p85
      %p88 = scmp.ne.s32.totalorder %s73, %s87
      %p89 = scmp.eq.s32.totalorder %s30, 0
      %p90 = por %p88, %p89
      %s92 = sadd.s32 %s91, 1
      %p95 = scmp.eq.s32.totalorder %s24, 2
      %p96 = scmp.ne.s32.totalorder %s91, %s93
      %p97 = scmp.eq.s32.totalorder %s24, 0
      %p98 = por %p96, %p97
      %p99 = scmp.ne.s32.totalorder %s91, %s93
      %p100 = scmp.eq.s32.totalorder %s29, 2
      %p101 = por %p99, %p100
      %p102 = scmp.ne.s32.totalorder %s93, %s94
      %p103 = scmp.eq.s32.totalorder %s29, 0
      %p104 = por %p102, %p103
      %p105 = scmp.ne.s32.totalorder %s93, %s94
      %p106 = scmp.eq.s32.totalorder %s30, 2
      %p107 = por %p105, %p106
      %p109 = scmp.ne.s32.totalorder %s94, %s108
      %p110 = scmp.eq.s32.totalorder %s30, 0
      %p111 = por %p109, %p110
      %s112 = ssub.s32 %s32, %s39
      %p113 = scmp.eq.s32.totalorder %s112, 0
      %s115 = sadd.s32 %s114, 1
      %s116 = scalar_select %p113, %s114, %s115
      %p119 = pneg %p113
      %p120 = scmp.eq.s32.totalorder %s24, 2
      %p121 = por %p119, %p120
      %p122 = scmp.ne.s32.totalorder %s114, %s117
      %p123 = scmp.eq.s32.totalorder %s24, 0
      %p124 = por %p122, %p123
      %p125 = scmp.ne.s32.totalorder %s114, %s117
      %p126 = scmp.eq.s32.totalorder %s29, 2
      %p127 = por %p125, %p126
      %p128 = scmp.ne.s32.totalorder %s117, %s118
      %p129 = scmp.eq.s32.totalorder %s29, 0
      %p130 = por %p128, %p129
      %p131 = scmp.ne.s32.totalorder %s117, %s118
      %p132 = scmp.eq.s32.totalorder %s30, 2
      %p133 = por %p131, %p132
      %p135 = scmp.ne.s32.totalorder %s118, %s134
      %p136 = scmp.eq.s32.totalorder %s30, 0
      %p137 = por %p135, %p136
      %s138 = ssub.s32 %s32, %s39
      %p139 = scmp.eq.s32.totalorder %s138, 0
      %s141 = sadd.s32 %s140, 1
      %s142 = scalar_select %p139, %s140, %s141
      %p145 = pneg %p139
      %p146 = scmp.eq.s32.totalorder %s24, 2
      %p147 = por %p145, %p146
      %p148 = scmp.ne.s32.totalorder %s140, %s143
      %p149 = scmp.eq.s32.totalorder %s24, 0
      %p150 = por %p148, %p149
      %p151 = scmp.ne.s32.totalorder %s140, %s143
      %p152 = scmp.eq.s32.totalorder %s29, 2
      %p153 = por %p151, %p152
      %p154 = scmp.ne.s32.totalorder %s143, %s144
      %p155 = scmp.eq.s32.totalorder %s29, 0
      %p156 = por %p154, %p155
      %p157 = scmp.ne.s32.totalorder %s143, %s144
      %p158 = scmp.eq.s32.totalorder %s30, 2
      %p159 = por %p157, %p158
      %p161 = scmp.ne.s32.totalorder %s144, %s160
      %p162 = scmp.eq.s32.totalorder %s30, 0
      %p163 = por %p161, %p162
      %s164 = ssub.s32 %s32, %s39
      %p165 = scmp.eq.s32.totalorder %s164, 0
      %s167 = sadd.s32 %s166, 1
      %s168 = scalar_select %p165, %s166, %s167
      %p171 = pneg %p165
      %p172 = scmp.eq.s32.totalorder %s24, 2
      %p173 = por %p171, %p172
      %p174 = scmp.ne.s32.totalorder %s166, %s169
      %p175 = scmp.eq.s32.totalorder %s24, 0
      %p176 = por %p174, %p175
      %p177 = scmp.ne.s32.totalorder %s166, %s169
      %p178 = scmp.eq.s32.totalorder %s29, 2
      %p179 = por %p177, %p178
      %p180 = scmp.ne.s32.totalorder %s169, %s170
      %p181 = scmp.eq.s32.totalorder %s29, 0
      %p182 = por %p180, %p181
      %p183 = scmp.ne.s32.totalorder %s169, %s170
      %p184 = scmp.eq.s32.totalorder %s30, 2
      %p185 = por %p183, %p184
      %p187 = scmp.ne.s32.totalorder %s170, %s186
      %p188 = scmp.eq.s32.totalorder %s30, 0
      %p189 = por %p187, %p188
      %s190 = ssub.s32 %s32, %s39
      %p191 = scmp.eq.s32.totalorder %s190, 0
      %s193 = sadd.s32 %s192, 1
      %s194 = scalar_select %p191, %s192, %s193
      %p197 = pneg %p191
      %p198 = scmp.eq.s32.totalorder %s24, 2
      %p199 = por %p197, %p198
      %p200 = scmp.ne.s32.totalorder %s192, %s195
      %p201 = scmp.eq.s32.totalorder %s24, 0
      %p202 = por %p200, %p201
      %p203 = scmp.ne.s32.totalorder %s192, %s195
      %p204 = scmp.eq.s32.totalorder %s29, 2
      %p205 = por %p203, %p204
      %p206 = scmp.ne.s32.totalorder %s195, %s196
      %p207 = scmp.eq.s32.totalorder %s29, 0
      %p208 = por %p206, %p207
      %p209 = scmp.ne.s32.totalorder %s195, %s196
      %p210 = scmp.eq.s32.totalorder %s30, 2
      %p211 = por %p209, %p210
      %p213 = scmp.ne.s32.totalorder %s196, %s212
      %p214 = scmp.eq.s32.totalorder %s30, 0
      %p215 = por %p213, %p214
      %s216 = ssub.s32 %s32, %s39
      %p217 = scmp.eq.s32.totalorder %s216, 0
      %s219 = sadd.s32 %s218, 1
      %s220 = scalar_select %p217, %s218, %s219
      %p223 = pneg %p217
      %p224 = scmp.eq.s32.totalorder %s24, 2
      %p225 = por %p223, %p224
      %p226 = scmp.ne.s32.totalorder %s218, %s221
      %p227 = scmp.eq.s32.totalorder %s24, 0
      %p228 = por %p226, %p227
      %p229 = scmp.ne.s32.totalorder %s218, %s221
      %p230 = scmp.eq.s32.totalorder %s29, 2
      %p231 = por %p229, %p230
      %p232 = scmp.ne.s32.totalorder %s221, %s222
      %p233 = scmp.eq.s32.totalorder %s29, 0
      %p234 = por %p232, %p233
      %p235 = scmp.ne.s32.totalorder %s221, %s222
      %p236 = scmp.eq.s32.totalorder %s30, 2
      %p237 = por %p235, %p236
      %p239 = scmp.ne.s32.totalorder %s222, %s238
      %p240 = scmp.eq.s32.totalorder %s30, 0
      %p241 = por %p239, %p240
      %s242 = ssub.s32 %s32, %s39
      %p243 = scmp.eq.s32.totalorder %s242, 0
      %s245 = sadd.s32 %s244, 1
      %s246 = scalar_select %p243, %s244, %s245
      %p249 = pneg %p243
      %p250 = scmp.eq.s32.totalorder %s24, 2
      %p251 = por %p249, %p250
      %p252 = scmp.ne.s32.totalorder %s244, %s247
      %p253 = scmp.eq.s32.totalorder %s24, 0
      %p254 = por %p252, %p253
      %p255 = scmp.ne.s32.totalorder %s244, %s247
      %p256 = scmp.eq.s32.totalorder %s29, 2
      %p257 = por %p255, %p256
      %p258 = scmp.ne.s32.totalorder %s247, %s248
      %p259 = scmp.eq.s32.totalorder %s29, 0
      %p260 = por %p258, %p259
      %p261 = scmp.ne.s32.totalorder %s247, %s248
      %p262 = scmp.eq.s32.totalorder %s30, 2
      %p263 = por %p261, %p262
      %p265 = scmp.ne.s32.totalorder %s248, %s264
      %p266 = scmp.eq.s32.totalorder %s30, 0
      %p267 = por %p265, %p266
      %s268 = ssub.s32 %s32, %s39
      %p269 = scmp.eq.s32.totalorder %s268, 0
      %s271 = sadd.s32 %s270, 1
      %s272 = scalar_select %p269, %s270, %s271
      %p275 = pneg %p269
      %p276 = scmp.eq.s32.totalorder %s24, 2
      %p277 = por %p275, %p276
      %p278 = scmp.ne.s32.totalorder %s270, %s273
      %p279 = scmp.eq.s32.totalorder %s24, 0
      %p280 = por %p278, %p279
      %p281 = scmp.ne.s32.totalorder %s270, %s273
      %p282 = scmp.eq.s32.totalorder %s29, 2
      %p283 = por %p281, %p282
      %p284 = scmp.ne.s32.totalorder %s273, %s274
      %p285 = scmp.eq.s32.totalorder %s29, 0
      %p286 = por %p284, %p285
      %p287 = scmp.ne.s32.totalorder %s273, %s274
      %p288 = scmp.eq.s32.totalorder %s30, 2
      %p289 = por %p287, %p288
      %p291 = scmp.ne.s32.totalorder %s274, %s290
      %p292 = scmp.eq.s32.totalorder %s30, 0
      %p293 = por %p291, %p292
      %s294 = ssub.s32 %s32, %s39
      %p295 = scmp.eq.s32.totalorder %s294, 0
      %s297 = sadd.s32 %s296, 1
      %s298 = scalar_select %p295, %s296, %s297
      %p301 = pneg %p295
      %p302 = scmp.eq.s32.totalorder %s24, 2
      %p303 = por %p301, %p302
      %p304 = scmp.ne.s32.totalorder %s296, %s299
      %p305 = scmp.eq.s32.totalorder %s24, 0
      %p306 = por %p304, %p305
      %p307 = scmp.ne.s32.totalorder %s296, %s299
      %p308 = scmp.eq.s32.totalorder %s29, 2
      %p309 = por %p307, %p308
      %p310 = scmp.ne.s32.totalorder %s299, %s300
      %p311 = scmp.eq.s32.totalorder %s29, 0
      %p312 = por %p310, %p311
      %p313 = scmp.ne.s32.totalorder %s299, %s300
      %p314 = scmp.eq.s32.totalorder %s30, 2
      %p315 = por %p313, %p314
      %p317 = scmp.ne.s32.totalorder %s300, %s316
      %p318 = scmp.eq.s32.totalorder %s30, 0
      %p319 = por %p317, %p318
      %s320 = ssub.s32 %s32, %s39
      %p321 = scmp.eq.s32.totalorder %s320, 0
      %s323 = sadd.s32 %s322, 1
      %s324 = scalar_select %p321, %s322, %s323
      %p327 = pneg %p321
      %p328 = scmp.eq.s32.totalorder %s24, 2
      %p329 = por %p327, %p328
      %p330 = scmp.ne.s32.totalorder %s322, %s325
      %p331 = scmp.eq.s32.totalorder %s24, 0
      %p332 = por %p330, %p331
      %p333 = scmp.ne.s32.totalorder %s322, %s325
      %p334 = scmp.eq.s32.totalorder %s29, 2
      %p335 = por %p333, %p334
      %p336 = scmp.ne.s32.totalorder %s325, %s326
      %p337 = scmp.eq.s32.totalorder %s29, 0
      %p338 = por %p336, %p337
      %p339 = scmp.ne.s32.totalorder %s325, %s326
      %p340 = scmp.eq.s32.totalorder %s30, 2
      %p341 = por %p339, %p340
      %p343 = scmp.ne.s32.totalorder %s326, %s342
      %p344 = scmp.eq.s32.totalorder %s30, 0
      %p345 = por %p343, %p344
      %s346 = ssub.s32 %s32, %s39
      %p347 = scmp.eq.s32.totalorder %s346, 0
      %s349 = sadd.s32 %s348, 1
      %s350 = scalar_select %p347, %s348, %s349
      %p353 = pneg %p347
      %p354 = scmp.eq.s32.totalorder %s24, 2
      %p355 = por %p353, %p354
      %p356 = scmp.ne.s32.totalorder %s348, %s351
      %p357 = scmp.eq.s32.totalorder %s24, 0
      %p358 = por %p356, %p357
      %p359 = scmp.ne.s32.totalorder %s348, %s351
      %p360 = scmp.eq.s32.totalorder %s29, 2
      %p361 = por %p359, %p360
      %p362 = scmp.ne.s32.totalorder %s351, %s352
      %p363 = scmp.eq.s32.totalorder %s29, 0
      %p364 = por %p362, %p363
      %p365 = scmp.ne.s32.totalorder %s351, %s352
      %p366 = scmp.eq.s32.totalorder %s30, 2
      %p367 = por %p365, %p366
      %p369 = scmp.ne.s32.totalorder %s352, %s368
      %p370 = scmp.eq.s32.totalorder %s30, 0
      %p371 = por %p369, %p370
      %s372 = ssub.s32 %s32, %s39
      %p373 = scmp.eq.s32.totalorder %s372, 0
      %s375 = sadd.s32 %s374, 1
      %s376 = scalar_select %p373, %s374, %s375
      %p379 = pneg %p373
      %p380 = scmp.eq.s32.totalorder %s24, 2
      %p381 = por %p379, %p380
      %p382 = scmp.ne.s32.totalorder %s374, %s377
      %p383 = scmp.eq.s32.totalorder %s24, 0
      %p384 = por %p382, %p383
      %p385 = scmp.ne.s32.totalorder %s374, %s377
      %p386 = scmp.eq.s32.totalorder %s29, 2
      %p387 = por %p385, %p386
      %p388 = scmp.ne.s32.totalorder %s377, %s378
      %p389 = scmp.eq.s32.totalorder %s29, 0
      %p390 = por %p388, %p389
      %p391 = scmp.ne.s32.totalorder %s377, %s378
      %p392 = scmp.eq.s32.totalorder %s30, 2
      %p393 = por %p391, %p392
      %p395 = scmp.ne.s32.totalorder %s378, %s394
      %p396 = scmp.eq.s32.totalorder %s30, 0
      %p397 = por %p395, %p396
      %s398 = ssub.s32 %s32, %s39
      %p399 = scmp.eq.s32.totalorder %s398, 0
      %s401 = sadd.s32 %s400, 1
      %s402 = scalar_select %p399, %s400, %s401
      %p405 = pneg %p399
      %p406 = scmp.eq.s32.totalorder %s24, 2
      %p407 = por %p405, %p406
      %p408 = scmp.ne.s32.totalorder %s400, %s403
      %p409 = scmp.eq.s32.totalorder %s24, 0
      %p410 = por %p408, %p409
      %p411 = scmp.ne.s32.totalorder %s400, %s403
      %p412 = scmp.eq.s32.totalorder %s29, 2
      %p413 = por %p411, %p412
      %p414 = scmp.ne.s32.totalorder %s403, %s404
      %p415 = scmp.eq.s32.totalorder %s29, 0
      %p416 = por %p414, %p415
      %p417 = scmp.ne.s32.totalorder %s403, %s404
      %p418 = scmp.eq.s32.totalorder %s30, 2
      %p419 = por %p417, %p418
      %p421 = scmp.ne.s32.totalorder %s404, %s420
      %p422 = scmp.eq.s32.totalorder %s30, 0
      %p423 = por %p421, %p422
      %s424 = ssub.s32 %s32, %s39
      %p425 = scmp.eq.s32.totalorder %s424, 0
      %s427 = sadd.s32 %s426, 1
      %s428 = scalar_select %p425, %s426, %s427
      %p431 = pneg %p425
      %p432 = scmp.eq.s32.totalorder %s24, 2
      %p433 = por %p431, %p432
      %p434 = scmp.ne.s32.totalorder %s426, %s429
      %p435 = scmp.eq.s32.totalorder %s24, 0
      %p436 = por %p434, %p435
      %p437 = scmp.ne.s32.totalorder %s426, %s429
      %p438 = scmp.eq.s32.totalorder %s29, 2
      %p439 = por %p437, %p438
      %p440 = scmp.ne.s32.totalorder %s429, %s430
      %p441 = scmp.eq.s32.totalorder %s29, 0
      %p442 = por %p440, %p441
      %p443 = scmp.ne.s32.totalorder %s429, %s430
      %p444 = scmp.eq.s32.totalorder %s30, 2
      %p445 = por %p443, %p444
      %p447 = scmp.ne.s32.totalorder %s430, %s446
      %p448 = scmp.eq.s32.totalorder %s30, 0
      %p449 = por %p447, %p448
      %s450 = ssub.s32 %s32, %s39
      %p451 = scmp.eq.s32.totalorder %s450, 0
      %s453 = sadd.s32 %s452, 1
      %s454 = scalar_select %p451, %s452, %s453
      %p457 = pneg %p451
      %p458 = scmp.eq.s32.totalorder %s24, 2
      %p459 = por %p457, %p458
      %p460 = scmp.ne.s32.totalorder %s452, %s455
      %p461 = scmp.eq.s32.totalorder %s24, 0
      %p462 = por %p460, %p461
      %p463 = scmp.ne.s32.totalorder %s452, %s455
      %p464 = scmp.eq.s32.totalorder %s29, 2
      %p465 = por %p463, %p464
      %p466 = scmp.ne.s32.totalorder %s455, %s456
      %p467 = scmp.eq.s32.totalorder %s29, 0
      %p468 = por %p466, %p467
      %p469 = scmp.ne.s32.totalorder %s455, %s456
      %p470 = scmp.eq.s32.totalorder %s30, 2
      %p471 = por %p469, %p470
      %p473 = scmp.ne.s32.totalorder %s456, %s472
      %p474 = scmp.eq.s32.totalorder %s30, 0
      %p475 = por %p473, %p474
      %s476 = ssub.s32 %s31, %s43
      %p477 = scmp.eq.s32.totalorder %s476, 0
      %s479 = sadd.s32 %s478, 1
      %s480 = scalar_select %p477, %s478, %s479
      %p483 = pneg %p477
      %p484 = scmp.eq.s32.totalorder %s24, 2
      %p485 = por %p483, %p484
      %p486 = scmp.ne.s32.totalorder %s478, %s481
      %p487 = scmp.eq.s32.totalorder %s24, 0
      %p488 = por %p486, %p487
      %p489 = scmp.ne.s32.totalorder %s478, %s481
      %p490 = scmp.eq.s32.totalorder %s29, 2
      %p491 = por %p489, %p490
      %p492 = scmp.ne.s32.totalorder %s481, %s482
      %p493 = scmp.eq.s32.totalorder %s29, 0
      %p494 = por %p492, %p493
      %p495 = scmp.ne.s32.totalorder %s481, %s482
      %p496 = scmp.eq.s32.totalorder %s30, 2
      %p497 = por %p495, %p496
      %p499 = scmp.ne.s32.totalorder %s482, %s498
      %p500 = scmp.eq.s32.totalorder %s30, 0
      %p501 = por %p499, %p500
      %p502 = scmp.le.s32.totalorder 1, %s24
      %p503 = scmp.lt.s32.totalorder %s24, 4
      %p504 = pnand %p502, %p503
      %p505 = pneg %p504
      // Predicated region
      $region9: #{tpu_custom_call.1} parent=5 // pred_check
        _
      $region10: #{tpu_custom_call.1} parent=5 // pred_check_branch
        %507 = sbr.rel (%p504) target = $region12
      $region11: #{tpu_custom_call.1} parent=5 // pred_region
        %s508 = ssub.s32 %s24, 1
        // Predicated region
        $region13: #{tpu_custom_call.1} parent=11 // pred_check
          %p509 = pneg %p62
        $region14: #{tpu_custom_call.1} parent=11 // pred_check_branch
          %511 = sbr.rel (%p509) target = $region16
        $region15: #{tpu_custom_call.1} parent=11 // pred_region
          %s512 = smul.u32 4, %s33
          %p513 = scmp.lt.s32.totalorder %s512, 3
          %s514 = scalar_select %p513, %s512, 3
          %s515 = smul.addr %s514, 8
          %s516 = scalar_lea.vmem %s0, %s515
          %s517 = smul.u32 4, %s33
        $region16: #{tpu_custom_call.1} parent=11 // pred_fallthru
          _
        // Predicated region
        $region17: #{tpu_custom_call.1} parent=11 // pred_check
          %p518 = pneg %p83
        $region18: #{tpu_custom_call.1} parent=11 // pred_check_branch
          %520 = sbr.rel (%p518) target = $region20
        $region19: #{tpu_custom_call.1} parent=11 // pred_region
          _
        $region20: #{tpu_custom_call.1} parent=11 // pred_fallthru
          _
        // Predicated region
        $region21: #{tpu_custom_call.1} parent=11 // pred_check
          %p521 = pneg %p104
        $region22: #{tpu_custom_call.1} parent=11 // pred_check_branch
          %523 = sbr.rel (%p521) target = $region24
        $region23: #{tpu_custom_call.1} parent=11 // pred_region
          _
        $region24: #{tpu_custom_call.1} parent=11 // pred_fallthru
          _
      $region12: #{tpu_custom_call.1} parent=5 // pred_fallthru
        _
      %p524 = scmp.lt.s32.totalorder %s24, 3
      // Predicated region
      $region25: #{tpu_custom_call.1} parent=5 // pred_check
        %p525 = pneg %p524
      $region26: #{tpu_custom_call.1} parent=5 // pred_check_branch
        %527 = sbr.rel (%p525) target = $region28
      $region27: #{tpu_custom_call.1} parent=5 // pred_region
        // Predicated region
        $region29: #{tpu_custom_call.1} parent=27 // pred_check
          %p528 = pneg %p124
        $region30: #{tpu_custom_call.1} parent=27 // pred_check_branch
          %530 = sbr.rel (%p528) target = $region32
        $region31: #{tpu_custom_call.1} parent=27 // pred_region
          %p531 = scmp.lt.s32.totalorder %s32, 2
          %s532 = scalar_select %p531, %s32, 2
          %s533 = smul.addr %s532, 8
          %s534 = scalar_lea.vmem %s3, %s533
        $region32: #{tpu_custom_call.1} parent=27 // pred_fallthru
          _
        // Predicated region
        $region33: #{tpu_custom_call.1} parent=27 // pred_check
          %p535 = pneg %p150
        $region34: #{tpu_custom_call.1} parent=27 // pred_check_branch
          %537 = sbr.rel (%p535) target = $region36
        $region35: #{tpu_custom_call.1} parent=27 // pred_region
          %p538 = scmp.lt.s32.totalorder %s32, 2
          %s539 = scalar_select %p538, %s32, 2
          %s540 = smul.addr %s539, 8
          %s541 = scalar_lea.vmem %s4, %s540
        $region36: #{tpu_custom_call.1} parent=27 // pred_fallthru
          _
        // Predicated region
        $region37: #{tpu_custom_call.1} parent=27 // pred_check
          %p542 = pneg %p176
        $region38: #{tpu_custom_call.1} parent=27 // pred_check_branch
          %544 = sbr.rel (%p542) target = $region40
        $region39: #{tpu_custom_call.1} parent=27 // pred_region
          %p545 = scmp.lt.s32.totalorder %s32, 2
          %s546 = scalar_select %p545, %s32, 2
          %s547 = scalar_lea.vmem %s5, %s546
        $region40: #{tpu_custom_call.1} parent=27 // pred_fallthru
          _
        // Predicated region
        $region41: #{tpu_custom_call.1} parent=27 // pred_check
          %p548 = pneg %p202
        $region42: #{tpu_custom_call.1} parent=27 // pred_check_branch
          %550 = sbr.rel (%p548) target = $region44
        $region43: #{tpu_custom_call.1} parent=27 // pred_region
          %p551 = scmp.lt.s32.totalorder %s32, 2
          %s552 = scalar_select %p551, %s32, 2
          %s553 = scalar_lea.vmem %s6, %s552
        $region44: #{tpu_custom_call.1} parent=27 // pred_fallthru
          _
        // Predicated region
        $region45: #{tpu_custom_call.1} parent=27 // pred_check
          %p554 = pneg %p228
        $region46: #{tpu_custom_call.1} parent=27 // pred_check_branch
          %556 = sbr.rel (%p554) target = $region48
        $region47: #{tpu_custom_call.1} parent=27 // pred_region
          %p557 = scmp.lt.s32.totalorder %s32, 2
          %s558 = scalar_select %p557, %s32, 2
          %s559 = smul.addr %s558, 16
          %s560 = smul.addr %s559, 4
          %s561 = scalar_lea.vmem %s7, %s560
        $region48: #{tpu_custom_call.1} parent=27 // pred_fallthru
          _
        // Predicated region
        $region49: #{tpu_custom_call.1} parent=27 // pred_check
          %p562 = pneg %p254
        $region50: #{tpu_custom_call.1} parent=27 // pred_check_branch
          %564 = sbr.rel (%p562) target = $region52
        $region51: #{tpu_custom_call.1} parent=27 // pred_region
          %p565 = scmp.lt.s32.totalorder %s32, 2
          %s566 = scalar_select %p565, %s32, 2
          %s567 = smul.addr %s566, 2
          %s568 = scalar_lea.vmem %s8, %s567
        $region52: #{tpu_custom_call.1} parent=27 // pred_fallthru
          _
        // Predicated region
        $region53: #{tpu_custom_call.1} parent=27 // pred_check
          %p569 = pneg %p280
        $region54: #{tpu_custom_call.1} parent=27 // pred_check_branch
          %571 = sbr.rel (%p569) target = $region56
        $region55: #{tpu_custom_call.1} parent=27 // pred_region
          %p572 = scmp.lt.s32.totalorder %s32, 2
          %s573 = scalar_select %p572, %s32, 2
          %s574 = smul.addr %s573, 8
          %s575 = smul.addr %s574, 4
          %s576 = scalar_lea.vmem %s9, %s575
        $region56: #{tpu_custom_call.1} parent=27 // pred_fallthru
          _
        // Predicated region
        $region57: #{tpu_custom_call.1} parent=27 // pred_check
          %p577 = pneg %p306
        $region58: #{tpu_custom_call.1} parent=27 // pred_check_branch
          %579 = sbr.rel (%p577) target = $region60
        $region59: #{tpu_custom_call.1} parent=27 // pred_region
          %p580 = scmp.lt.s32.totalorder %s32, 2
          %s581 = scalar_select %p580, %s32, 2
          %s582 = scalar_lea.vmem %s10, %s581
        $region60: #{tpu_custom_call.1} parent=27 // pred_fallthru
          _
        // Predicated region
        $region61: #{tpu_custom_call.1} parent=27 // pred_check
          %p583 = pneg %p332
        $region62: #{tpu_custom_call.1} parent=27 // pred_check_branch
          %585 = sbr.rel (%p583) target = $region64
        $region63: #{tpu_custom_call.1} parent=27 // pred_region
          %p586 = scmp.lt.s32.totalorder %s32, 2
          %s587 = scalar_select %p586, %s32, 2
          %s588 = scalar_lea.vmem %s11, %s587
        $region64: #{tpu_custom_call.1} parent=27 // pred_fallthru
          _
        // Predicated region
        $region65: #{tpu_custom_call.1} parent=27 // pred_check
          %p589 = pneg %p358
        $region66: #{tpu_custom_call.1} parent=27 // pred_check_branch
          %591 = sbr.rel (%p589) target = $region68
        $region67: #{tpu_custom_call.1} parent=27 // pred_region
          %p592 = scmp.lt.s32.totalorder %s32, 2
          %s593 = scalar_select %p592, %s32, 2
          %s594 = scalar_lea.vmem %s12, %s593
        $region68: #{tpu_custom_call.1} parent=27 // pred_fallthru
          _
        // Predicated region
        $region69: #{tpu_custom_call.1} parent=27 // pred_check
          %p595 = pneg %p384
        $region70: #{tpu_custom_call.1} parent=27 // pred_check_branch
          %597 = sbr.rel (%p595) target = $region72
        $region71: #{tpu_custom_call.1} parent=27 // pred_region
          %p598 = scmp.lt.s32.totalorder %s32, 2
          %s599 = scalar_select %p598, %s32, 2
          %s600 = smul.addr %s599, 16
          %s601 = smul.addr %s600, 4
          %s602 = scalar_lea.vmem %s13, %s601
        $region72: #{tpu_custom_call.1} parent=27 // pred_fallthru
          _
        // Predicated region
        $region73: #{tpu_custom_call.1} parent=27 // pred_check
          %p603 = pneg %p410
        $region74: #{tpu_custom_call.1} parent=27 // pred_check_branch
          %605 = sbr.rel (%p603) target = $region76
        $region75: #{tpu_custom_call.1} parent=27 // pred_region
          %p606 = scmp.lt.s32.totalorder %s32, 2
          %s607 = scalar_select %p606, %s32, 2
          %s608 = smul.addr %s607, 2
          %s609 = scalar_lea.vmem %s14, %s608
        $region76: #{tpu_custom_call.1} parent=27 // pred_fallthru
          _
        // Predicated region
        $region77: #{tpu_custom_call.1} parent=27 // pred_check
          %p610 = pneg %p436
        $region78: #{tpu_custom_call.1} parent=27 // pred_check_branch
          %612 = sbr.rel (%p610) target = $region80
        $region79: #{tpu_custom_call.1} parent=27 // pred_region
          %p613 = scmp.lt.s32.totalorder %s32, 2
          %s614 = scalar_select %p613, %s32, 2
          %s615 = smul.addr %s614, 32
          %s616 = smul.addr %s615, 4
          %s617 = scalar_lea.vmem %s15, %s616
        $region80: #{tpu_custom_call.1} parent=27 // pred_fallthru
          _
        // Predicated region
        $region81: #{tpu_custom_call.1} parent=27 // pred_check
          %p618 = pneg %p462
        $region82: #{tpu_custom_call.1} parent=27 // pred_check_branch
          %620 = sbr.rel (%p618) target = $region84
        $region83: #{tpu_custom_call.1} parent=27 // pred_region
          %p621 = scmp.lt.s32.totalorder %s32, 2
          %s622 = scalar_select %p621, %s32, 2
          %s623 = scalar_lea.vmem %s16, %s622
        $region84: #{tpu_custom_call.1} parent=27 // pred_fallthru
          _
      $region28: #{tpu_custom_call.1} parent=5 // pred_fallthru
        _
      %p624 = scmp.le.s32.totalorder 1, %s24
      %p625 = scmp.lt.s32.totalorder %s24, 4
      %p626 = pnand %p624, %p625
      %p627 = pneg %p626
      // Predicated region
      $region85: #{tpu_custom_call.1} parent=5 // pred_check
        _
      $region86: #{tpu_custom_call.1} parent=5 // pred_check_branch
        %629 = sbr.rel (%p626) target = $region88
      $region87: #{tpu_custom_call.1} parent=5 // pred_region
        %s630 = ssub.s32 %s24, 1
        %s631 = smul.u32 4, %s33
        %p632 = scmp.lt.s32.totalorder %s631, 3
        %s633 = scalar_select %p632, %s631, 3
        %s634 = smul.addr %s633, 8
        %s635 = scalar_lea.vmem %s0, %s634
        %p636 = pneg %p62
        %p637 = pneg %p59
        %p638 = pneg %p83
        %p639 = pneg %p80
        %p640 = pneg %p104
        %p641 = pneg %p101
        %p642 = scmp.lt.s32.totalorder %s34, 2
        %s643 = scalar_select %p642, %s34, 2
        %s644 = smul.addr %s643, 8
        %s645 = scalar_lea.vmem %s3, %s644
        %p646 = pneg %p130
        %p647 = pneg %p127
        %p648 = scmp.lt.s32.totalorder %s34, 2
        %s649 = scalar_select %p648, %s34, 2
        %s650 = smul.addr %s649, 8
        %s651 = scalar_lea.vmem %s4, %s650
        %p652 = pneg %p156
        %p653 = pneg %p153
        %p654 = scmp.lt.s32.totalorder %s34, 2
        %s655 = scalar_select %p654, %s34, 2
        %s656 = scalar_lea.vmem %s5, %s655
        %p657 = pneg %p182
        %p658 = pneg %p179
        %p659 = scmp.lt.s32.totalorder %s34, 2
        %s660 = scalar_select %p659, %s34, 2
        %s661 = scalar_lea.vmem %s6, %s660
        %p662 = pneg %p208
        %p663 = pneg %p205
        %p664 = scmp.lt.s32.totalorder %s34, 2
        %s665 = scalar_select %p664, %s34, 2
        %s666 = smul.addr %s665, 16
        %s667 = smul.addr %s666, 4
        %s668 = scalar_lea.vmem %s7, %s667
        %p669 = pneg %p234
        %p670 = pneg %p231
        %p671 = scmp.lt.s32.totalorder %s34, 2
        %s672 = scalar_select %p671, %s34, 2
        %s673 = smul.addr %s672, 2
        %s674 = scalar_lea.vmem %s8, %s673
        %p675 = pneg %p260
        %p676 = pneg %p257
        %p677 = scmp.lt.s32.totalorder %s34, 2
        %s678 = scalar_select %p677, %s34, 2
        %s679 = smul.addr %s678, 8
        %s680 = smul.addr %s679, 4
        %s681 = scalar_lea.vmem %s9, %s680
        %p682 = pneg %p286
        %p683 = pneg %p283
        %p684 = scmp.lt.s32.totalorder %s34, 2
        %s685 = scalar_select %p684, %s34, 2
        %s686 = scalar_lea.vmem %s10, %s685
        %p687 = pneg %p312
        %p688 = pneg %p309
        %p689 = scmp.lt.s32.totalorder %s34, 2
        %s690 = scalar_select %p689, %s34, 2
        %s691 = scalar_lea.vmem %s11, %s690
        %p692 = pneg %p338
        %p693 = pneg %p335
        %p694 = scmp.lt.s32.totalorder %s34, 2
        %s695 = scalar_select %p694, %s34, 2
        %s696 = scalar_lea.vmem %s12, %s695
        %p697 = pneg %p364
        %p698 = pneg %p361
        %p699 = scmp.lt.s32.totalorder %s34, 2
        %s700 = scalar_select %p699, %s34, 2
        %s701 = smul.addr %s700, 16
        %s702 = smul.addr %s701, 4
        %s703 = scalar_lea.vmem %s13, %s702
        %p704 = pneg %p390
        %p705 = pneg %p387
        %p706 = scmp.lt.s32.totalorder %s34, 2
        %s707 = scalar_select %p706, %s34, 2
        %s708 = smul.addr %s707, 2
        %s709 = scalar_lea.vmem %s14, %s708
        %p710 = pneg %p416
        %p711 = pneg %p413
        %p712 = scmp.lt.s32.totalorder %s34, 2
        %s713 = scalar_select %p712, %s34, 2
        %s714 = smul.addr %s713, 32
        %s715 = smul.addr %s714, 4
        %s716 = scalar_lea.vmem %s15, %s715
        %p717 = pneg %p442
        %p718 = pneg %p439
        %p719 = scmp.lt.s32.totalorder %s34, 2
        %s720 = scalar_select %p719, %s34, 2
        %s721 = scalar_lea.vmem %s16, %s720
        %p722 = pneg %p468
        %p723 = pneg %p465
        %p724 = pneg %p494
        %p725 = pneg %p491
        %s726 = smul.u32 4, %s33
        %p727 = scmp.lt.s32.totalorder %s726, 3
        %s728 = scalar_select %p727, %s726, 3
        %s729 = smul.addr %s728, 8
        %s730 = scalar_lea.vmem %s0, %s729
        %s731 = smul.u32 4, %s33
        %p732 = scmp.lt.s32.totalorder %s34, 2
        %s733 = scalar_select %p732, %s34, 2
        %s734 = smul.addr %s733, 8
        %s735 = scalar_lea.vmem %s3, %s734
        %p736 = scmp.lt.s32.totalorder %s34, 2
        %s737 = scalar_select %p736, %s34, 2
        %s738 = smul.addr %s737, 8
        %s739 = scalar_lea.vmem %s4, %s738
        %p740 = scmp.lt.s32.totalorder %s34, 2
        %s741 = scalar_select %p740, %s34, 2
        %s742 = scalar_lea.vmem %s5, %s741
        %p743 = scmp.lt.s32.totalorder %s34, 2
        %s744 = scalar_select %p743, %s34, 2
        %s745 = scalar_lea.vmem %s6, %s744
        %p746 = scmp.lt.s32.totalorder %s34, 2
        %s747 = scalar_select %p746, %s34, 2
        %s748 = smul.addr %s747, 16
        %s749 = smul.addr %s748, 4
        %s750 = scalar_lea.vmem %s7, %s749
        %p751 = scmp.lt.s32.totalorder %s34, 2
        %s752 = scalar_select %p751, %s34, 2
        %s753 = smul.addr %s752, 2
        %s754 = scalar_lea.vmem %s8, %s753
        %p755 = scmp.lt.s32.totalorder %s34, 2
        %s756 = scalar_select %p755, %s34, 2
        %s757 = smul.addr %s756, 8
        %s758 = smul.addr %s757, 4
        %s759 = scalar_lea.vmem %s9, %s758
        %p760 = scmp.lt.s32.totalorder %s34, 2
        %s761 = scalar_select %p760, %s34, 2
        %s762 = scalar_lea.vmem %s10, %s761
        %p763 = scmp.lt.s32.totalorder %s34, 2
        %s764 = scalar_select %p763, %s34, 2
        %s765 = scalar_lea.vmem %s11, %s764
        %p766 = scmp.lt.s32.totalorder %s34, 2
        %s767 = scalar_select %p766, %s34, 2
        %s768 = scalar_lea.vmem %s12, %s767
        %p769 = scmp.lt.s32.totalorder %s34, 2
        %s770 = scalar_select %p769, %s34, 2
        %s771 = smul.addr %s770, 16
        %s772 = smul.addr %s771, 4
        %s773 = scalar_lea.vmem %s13, %s772
        %p774 = scmp.lt.s32.totalorder %s34, 2
        %s775 = scalar_select %p774, %s34, 2
        %s776 = smul.addr %s775, 2
        %s777 = scalar_lea.vmem %s14, %s776
        %p778 = scmp.lt.s32.totalorder %s34, 2
        %s779 = scalar_select %p778, %s34, 2
        %s780 = smul.addr %s779, 32
        %s781 = smul.addr %s780, 4
        %s782 = scalar_lea.vmem %s15, %s781
        %p783 = scmp.lt.s32.totalorder %s34, 2
        %s784 = scalar_select %p783, %s34, 2
        %s785 = scalar_lea.vmem %s16, %s784
        %s786 = smul.u32 4, %s33
        %p788 = scmp.eq.s32.totalorder %s34, 0
        // Predicated region
        $region89: #{tpu_custom_call.1} parent=87 // pred_check
          %p789 = pneg %p788
        $region90: #{tpu_custom_call.1} parent=87 // pred_check_branch
          %791 = sbr.rel (%p789) target = $region92
        $region91: #{tpu_custom_call.1} parent=87 // pred_region
          %v792 = vld [vmem:[%s730] sm:$0xff]
          %v793 = vld [vmem:[%s730 + $0x8] sm:$0xff]
          %v794 = vld [vmem:[%s730 + $0x10] sm:$0xff]
          %v795 = vld [vmem:[%s730 + $0x18] sm:$0xff]
          %v796 = vld [vmem:[%s1] sm:$0xff]
          %v797 = vadd.f32 %v792, %v796
          %v798 = vadd.f32 %v793, %v796
          %v799 = vadd.f32 %v794, %v796
          %v800 = vadd.f32 %v795, %v796
          %vm801 = vcmask 523264
          %802 = vst.msk [vmem:[#allocation2] sm:$0xff] %vm801, %v797
          %803 = vst.msk [vmem:[#allocation2 + $0x8] sm:$0xff] %vm801, %v798
          %804 = vst.msk [vmem:[#allocation2 + $0x10] sm:$0xff] %vm801, %v799
          %805 = vst.msk [vmem:[#allocation2 + $0x18] sm:$0xff] %vm801, %v800
        $region92: #{tpu_custom_call.1} parent=87 // pred_fallthru
          _
        %v806 = vld [vmem:[#allocation2] sm:$0xff]
        %v807 = vld [vmem:[#allocation2 + $0x8] sm:$0xff]
        %v808 = vld [vmem:[#allocation2 + $0x10] sm:$0xff]
        %v809 = vld [vmem:[#allocation2 + $0x18] sm:$0xff]
        %v810 = vld [vmem:[%s735] sm:$0xff]
        %v811 = vsub.f32 1.0, %v810
        %813 = vset.pattern.permute.xlu0 0
        %814 = vperm.xlu0 %813, %v811
        %v815 = vpop.permute.xlu0 %814
        %v817 = vmul.f32 %v806, %v815
        %v818 = vmul.f32 %v807, %v815
        %v819 = vmul.f32 %v808, %v815
        %v820 = vmul.f32 %v809, %v815
        %v821 = vld [vmem:[%s739] sm:$0xff]
        %823 = vset.pattern.permute.xlu0 0
        %824 = vperm.xlu0 %823, %v810
        %v825 = vpop.permute.xlu0 %824
        %v827 = vmul.f32 %v821, %v825
        %v828 = vadd.f32 %v817, %v827
        %v829 = vadd.f32 %v818, %v827
        %v830 = vadd.f32 %v819, %v827
        %v831 = vadd.f32 %v820, %v827
        %v832 = vld [vmem:[%s750] sm:$0xff]
        %v833 = vld [vmem:[%s750 + $0x8] sm:$0xff]
        %v834 = vld [vmem:[%s750 + $0x10] sm:$0xff]
        %v835 = vld [vmem:[%s750 + $0x18] sm:$0xff]
        %v836 = vld [vmem:[%s750 + $0x20] sm:$0xff]
        %v837 = vld [vmem:[%s750 + $0x28] sm:$0xff]
        %v838 = vld [vmem:[%s750 + $0x30] sm:$0xff]
        %v839 = vld [vmem:[%s750 + $0x38] sm:$0xff]
        %v840 = vld [vmem:[%s742] sm:$0x1]
        %v841 = vld [vmem:[%s745] sm:$0x1]
        %vm842 = vcmask 523264
        %v843 = vsel %vm842, %v828, 0.0
        %844 = vadd.xlane.f32.xlu0 %v843
        %v845 = vpop.xlane.xlu0 %844
        %v846 = vsel %vm842, %v829, 0.0
        %847 = vadd.xlane.f32.xlu0 %v846
        %v848 = vpop.xlane.xlu0 %847
        %v849 = vsel %vm842, %v830, 0.0
        %850 = vadd.xlane.f32.xlu0 %v849
        %v851 = vpop.xlane.xlu0 %850
        %v852 = vsel %vm842, %v831, 0.0
        %853 = vadd.xlane.f32.xlu0 %v852
        %v854 = vpop.xlane.xlu0 %853
        %v855 = vrcp.pop 64.0
        %v856 = vmul.f32 64.0, %v855
        %v857 = vsub.f32 1.0, %v856
        %v858 = vmul.f32 %v855, %v857
        %v859 = vadd.f32 %v855, %v858
        %vm860 = vweird.f32 %v855
        %v861 = vsel %vm860, %v855, %v859
        %v862 = vmul.f32 %v845, %v861
        %v863 = vmul.f32 %v848, %v861
        %v864 = vmul.f32 %v851, %v861
        %v865 = vmul.f32 %v854, %v861
        %v866 = vmul.f32 %v828, %v828
        %v867 = vmul.f32 %v829, %v829
        %v868 = vmul.f32 %v830, %v830
        %v869 = vmul.f32 %v831, %v831
        %v870 = vsel %vm842, %v866, 0.0
        %871 = vadd.xlane.f32.xlu0 %v870
        %v872 = vpop.xlane.xlu0 %871
        %v873 = vsel %vm842, %v867, 0.0
        %874 = vadd.xlane.f32.xlu0 %v873
        %v875 = vpop.xlane.xlu0 %874
        %v876 = vsel %vm842, %v868, 0.0
        %877 = vadd.xlane.f32.xlu0 %v876
        %v878 = vpop.xlane.xlu0 %877
        %v879 = vsel %vm842, %v869, 0.0
        %880 = vadd.xlane.f32.xlu0 %v879
        %v881 = vpop.xlane.xlu0 %880
        %v882 = vmul.f32 %v872, %v861
        %v883 = vmul.f32 %v875, %v861
        %v884 = vmul.f32 %v878, %v861
        %v885 = vmul.f32 %v881, %v861
        %v886 = vmul.f32 %v862, %v862
        %v887 = vmul.f32 %v863, %v863
        %v888 = vmul.f32 %v864, %v864
        %v889 = vmul.f32 %v865, %v865
        %v890 = vsub.f32 %v882, %v886
        %v891 = vsub.f32 %v883, %v887
        %v892 = vsub.f32 %v884, %v888
        %v893 = vsub.f32 %v885, %v889
        %v894 = vmax.f32 %v890, 0.0
        %v895 = vmax.f32 %v891, 0.0
        %v896 = vmax.f32 %v892, 0.0
        %v897 = vmax.f32 %v893, 0.0
        %v898 = vsub.f32 %v828, %v862
        %v899 = vsub.f32 %v829, %v863
        %v900 = vsub.f32 %v830, %v864
        %v901 = vsub.f32 %v831, %v865
        %v902 = vadd.f32 %v894, 1e-05
        %v903 = vadd.f32 %v895, 1e-05
        %v904 = vadd.f32 %v896, 1e-05
        %v905 = vadd.f32 %v897, 1e-05
        %v906 = vrsqrt.pop %v902
        %v907 = vmul.f32 %v906, %v902
        %v908 = vmul.f32 %v907, %v906
        %v909 = vmul.f32 0.5, %v908
        %v910 = vsub.f32 1.5, %v909
        %v911 = vmul.f32 %v906, %v910
        %vm912 = vweird.f32 %v902
        %vm913 = vweird.f32 %v906
        %vm914 = vmor %vm912, %vm913
        %v915 = vsel %vm914, %v906, %v911
        %v916 = vrsqrt.pop %v903
        %v917 = vmul.f32 %v916, %v903
        %v918 = vmul.f32 %v917, %v916
        %v919 = vmul.f32 0.5, %v918
        %v920 = vsub.f32 1.5, %v919
        %v921 = vmul.f32 %v916, %v920
        %vm922 = vweird.f32 %v903
        %vm923 = vweird.f32 %v916
        %vm924 = vmor %vm922, %vm923
        %v925 = vsel %vm924, %v916, %v921
        %v926 = vrsqrt.pop %v904
        %v927 = vmul.f32 %v926, %v904
        %v928 = vmul.f32 %v927, %v926
        %v929 = vmul.f32 0.5, %v928
        %v930 = vsub.f32 1.5, %v929
        %v931 = vmul.f32 %v926, %v930
        %vm932 = vweird.f32 %v904
        %vm933 = vweird.f32 %v926
        %vm934 = vmor %vm932, %vm933
        %v935 = vsel %vm934, %v926, %v931
        %v936 = vrsqrt.pop %v905
        %v937 = vmul.f32 %v936, %v905
        %v938 = vmul.f32 %v937, %v936
        %v939 = vmul.f32 0.5, %v938
        %v940 = vsub.f32 1.5, %v939
        %v941 = vmul.f32 %v936, %v940
        %vm942 = vweird.f32 %v905
        %vm943 = vweird.f32 %v936
        %vm944 = vmor %vm942, %vm943
        %v945 = vsel %vm944, %v936, %v941
        %v946 = vmul.f32 %v898, %v915
        %v947 = vmul.f32 %v899, %v925
        %v948 = vmul.f32 %v900, %v935
        %v949 = vmul.f32 %v901, %v945
        %v951 = vperm.slane %v840, 0
        %v953 = vmul.f32 %v946, %v951
        %v954 = vmul.f32 %v947, %v951
        %v955 = vmul.f32 %v948, %v951
        %v956 = vmul.f32 %v949, %v951
        %v958 = vperm.slane %v841, 0
        %v960 = vadd.f32 %v953, %v958
        %v961 = vadd.f32 %v954, %v958
        %v962 = vadd.f32 %v955, %v958
        %v963 = vadd.f32 %v956, %v958
        %v964 = vpack.c.bf16 %v961, %v960
        %v965 = vpack.c.bf16 %v963, %v962
        %v966 = vld [vmem:[%s754] sm:$0x3]
        %v968 = vperm.slane %v966, 0
        %v969 = vperm.slane %v966, 1
        %v980 = vunpack.c.l.b16 %v832
        %v981 = vunpack.c.h.b16 %v832
        %v982 = vunpack.c.l.b16 %v833
        %v983 = vunpack.c.h.b16 %v833
        %v984 = vunpack.c.l.b16 %v834
        %v985 = vunpack.c.h.b16 %v834
        %v986 = vunpack.c.l.b16 %v835
        %v987 = vunpack.c.h.b16 %v835
        %v988 = vunpack.c.l.b16 %v836
        %v989 = vunpack.c.h.b16 %v836
        %v990 = vunpack.c.l.b16 %v837
        %v991 = vunpack.c.h.b16 %v837
        %v992 = vunpack.c.l.b16 %v838
        %v993 = vunpack.c.h.b16 %v838
        %v994 = vunpack.c.l.b16 %v839
        %v995 = vunpack.c.h.b16 %v839
        %v996 = vpack.c.b16 %v982, %v980
        %v997 = vpack.c.b16 %v983, %v981
        %v998 = vpack.c.b16 %v986, %v984
        %v999 = vpack.c.b16 %v987, %v985
        %v1000 = vpack.c.b16 %v990, %v988
        %v1001 = vpack.c.b16 %v991, %v989
        %v1002 = vpack.c.b16 %v994, %v992
        %v1003 = vpack.c.b16 %v995, %v993
        %v1013 = vsel %vm842, %v964, 0
        %v1016 = vsel %vm842, %v965, 0
        %1018 = vmatpush.bf16.msra.mxu0 0
        %1019 = vmatpush.bf16.msra.mxu0 0
        %1020 = vmatpush.bf16.msra.mxu0 0
        %1021 = vmatpush.bf16.msra.mxu0 0
        %1022 = vmatpush.bf16.msra.mxu0 %v1002
        %1023 = vmatpush.bf16.msra.mxu0 %v1000
        %1024 = vmatpush.bf16.msra.mxu0 %v998
        %1025 = vmatpush.bf16.msra.mxu0 %v996
        %1026 = vmatmul.bf16.gmra.mxu0 %v1013
        %v1027 = vpop.f32.mrf.mxu0
        %v1028 = vadd.f32 %v968, %v1027
        %v1029 = vpop.f32.mrf.mxu0
        %v1030 = vadd.f32 %v968, %v1029
        %1031 = vmatmul.bf16.gmra.mxu0 %v1016
        %v1032 = vpop.f32.mrf.mxu0
        %v1033 = vadd.f32 %v968, %v1032
        %v1034 = vpop.f32.mrf.mxu0
        %v1035 = vadd.f32 %v968, %v1034
        %1036 = vdwg.mxu0
        %1037 = vmatpush.bf16.msra.mxu0 0
        %1038 = vmatpush.bf16.msra.mxu0 0
        %1039 = vmatpush.bf16.msra.mxu0 0
        %1040 = vmatpush.bf16.msra.mxu0 0
        %1041 = vmatpush.bf16.msra.mxu0 %v1003
        %1042 = vmatpush.bf16.msra.mxu0 %v1001
        %1043 = vmatpush.bf16.msra.mxu0 %v999
        %1044 = vmatpush.bf16.msra.mxu0 %v997
        %1045 = vmatmul.bf16.gmra.mxu0 %v1013
        %v1046 = vpop.f32.mrf.mxu0
        %v1047 = vadd.f32 %v969, %v1046
        %v1048 = vpop.f32.mrf.mxu0
        %v1049 = vadd.f32 %v969, %v1048
        %1050 = vmatmul.bf16.gmra.mxu0 %v1016
        %v1051 = vpop.f32.mrf.mxu0
        %v1052 = vadd.f32 %v969, %v1051
        %v1053 = vpop.f32.mrf.mxu0
        %v1054 = vadd.f32 %v969, %v1053
        %1055 = vdwg.mxu0
        %v1056 = vld [vmem:[%s2] sm:$0xff]
        %v1057 = vpack.c.bf16 %v1028, %v1028
        %v1058 = vpack.c.bf16 %v1030, %v1030
        %v1059 = vpack.c.bf16 %v1033, %v1033
        %v1060 = vpack.c.bf16 %v1035, %v1035
        %v1061 = vpack.c.bf16 %v1047, %v1047
        %v1062 = vpack.c.bf16 %v1049, %v1049
        %v1063 = vpack.c.bf16 %v1052, %v1052
        %v1064 = vpack.c.bf16 %v1054, %v1054
        %v1066 = vunpack.c.l.b16 %v1057
        %v1067 = vpack.c.b16 %v1066, %v1066
        %1068 = vrot.lane.b32.xlu0 %v1067, 64
        %v1069 = vpop.permute.xlu0 %1068
        %vm1070 = vcmask 130048
        %v1072 = vsel %vm1070, %v1057, 0
        %v1075 = vsel %vm1070, %v1069, 0
        %1077 = vmatpush.bf16.xpose.msra.mxu0 0
        %1078 = vmatpush.bf16.xpose.msra.mxu0 0
        %1079 = vmatpush.bf16.xpose.msra.mxu0 0
        %1080 = vmatpush.bf16.xpose.msra.mxu0 0
        %1081 = vmatpush.bf16.xpose.msra.mxu0 0
        %1082 = vmatpush.bf16.xpose.msra.mxu0 0
        %1083 = vmatpush.bf16.xpose.msra.mxu0 0
        %1084 = vmatpush.bf16.xpose.msra.mxu0 %v1075
        %1085 = vmatmul.bf16.gmra.mxu0 %v1072
        %v1086 = vpop.f32.mrf.mxu0
        %v1087 = vadd.f32 %v1056, %v1086
        %v1088 = vpop.f32.mrf.mxu0
        %1089 = vdwg.mxu0
        %v1091 = vunpack.c.l.b16 %v1058
        %v1092 = vpack.c.b16 %v1091, %v1091
        %1093 = vrot.lane.b32.xlu0 %v1092, 64
        %v1094 = vpop.permute.xlu0 %1093
        %v1096 = vsel %vm1070, %v1058, 0
        %v1099 = vsel %vm1070, %v1094, 0
        %1101 = vmatpush.bf16.xpose.msra.mxu0 0
        %1102 = vmatpush.bf16.xpose.msra.mxu0 0
        %1103 = vmatpush.bf16.xpose.msra.mxu0 0
        %1104 = vmatpush.bf16.xpose.msra.mxu0 0
        %1105 = vmatpush.bf16.xpose.msra.mxu0 0
        %1106 = vmatpush.bf16.xpose.msra.mxu0 0
        %1107 = vmatpush.bf16.xpose.msra.mxu0 0
        %1108 = vmatpush.bf16.xpose.msra.mxu0 %v1099
        %1109 = vmatmul.bf16.gmra.mxu0 %v1096
        %v1110 = vpop.f32.mrf.mxu0
        %v1111 = vadd.f32 %v1056, %v1110
        %v1112 = vpop.f32.mrf.mxu0
        %1113 = vdwg.mxu0
        %v1115 = vunpack.c.l.b16 %v1059
        %v1116 = vpack.c.b16 %v1115, %v1115
        %1117 = vrot.lane.b32.xlu0 %v1116, 64
        %v1118 = vpop.permute.xlu0 %1117
        %v1120 = vsel %vm1070, %v1059, 0
        %v1123 = vsel %vm1070, %v1118, 0
        %1125 = vmatpush.bf16.xpose.msra.mxu0 0
        %1126 = vmatpush.bf16.xpose.msra.mxu0 0
        %1127 = vmatpush.bf16.xpose.msra.mxu0 0
        %1128 = vmatpush.bf16.xpose.msra.mxu0 0
        %1129 = vmatpush.bf16.xpose.msra.mxu0 0
        %1130 = vmatpush.bf16.xpose.msra.mxu0 0
        %1131 = vmatpush.bf16.xpose.msra.mxu0 0
        %1132 = vmatpush.bf16.xpose.msra.mxu0 %v1123
        %1133 = vmatmul.bf16.gmra.mxu0 %v1120
        %v1134 = vpop.f32.mrf.mxu0
        %v1135 = vadd.f32 %v1056, %v1134
        %v1136 = vpop.f32.mrf.mxu0
        %1137 = vdwg.mxu0
        %v1139 = vunpack.c.l.b16 %v1060
        %v1140 = vpack.c.b16 %v1139, %v1139
        %1141 = vrot.lane.b32.xlu0 %v1140, 64
        %v1142 = vpop.permute.xlu0 %1141
        %v1144 = vsel %vm1070, %v1060, 0
        %v1147 = vsel %vm1070, %v1142, 0
        %1149 = vmatpush.bf16.xpose.msra.mxu0 0
        %1150 = vmatpush.bf16.xpose.msra.mxu0 0
        %1151 = vmatpush.bf16.xpose.msra.mxu0 0
        %1152 = vmatpush.bf16.xpose.msra.mxu0 0
        %1153 = vmatpush.bf16.xpose.msra.mxu0 0
        %1154 = vmatpush.bf16.xpose.msra.mxu0 0
        %1155 = vmatpush.bf16.xpose.msra.mxu0 0
        %1156 = vmatpush.bf16.xpose.msra.mxu0 %v1147
        %1157 = vmatmul.bf16.gmra.mxu0 %v1144
        %v1158 = vpop.f32.mrf.mxu0
        %v1159 = vadd.f32 %v1056, %v1158
        %v1160 = vpop.f32.mrf.mxu0
        %1161 = vdwg.mxu0
        %vm1162 = vcmask 64512
        %v1163 = vsel %vm1162, %v1087, -inf
        %1164 = vmax.xlane.f32.xlu0 %v1163
        %v1165 = vpop.xlane.xlu0 %1164
        %v1166 = vsel %vm1162, %v1111, -inf
        %1167 = vmax.xlane.f32.xlu0 %v1166
        %v1168 = vpop.xlane.xlu0 %1167
        %v1169 = vsel %vm1162, %v1135, -inf
        %1170 = vmax.xlane.f32.xlu0 %v1169
        %v1171 = vpop.xlane.xlu0 %1170
        %v1172 = vsel %vm1162, %v1159, -inf
        %1173 = vmax.xlane.f32.xlu0 %v1172
        %v1174 = vpop.xlane.xlu0 %1173
        %v1175 = vsub.f32 %v1087, %v1165
        %v1176 = vsub.f32 %v1111, %v1168
        %v1177 = vsub.f32 %v1135, %v1171
        %v1178 = vsub.f32 %v1159, %v1174
        %v1179 = vmul.f32 %v1175, 1.442695
        %v1180 = vpow.pop %v1179
        %v1181 = vmul.f32 %v1176, 1.442695
        %v1182 = vpow.pop %v1181
        %v1183 = vmul.f32 %v1177, 1.442695
        %v1184 = vpow.pop %v1183
        %v1185 = vmul.f32 %v1178, 1.442695
        %v1186 = vpow.pop %v1185
        %v1187 = vsel %vm1162, %v1180, 0.0
        %1188 = vadd.xlane.f32.xlu0 %v1187
        %v1189 = vpop.xlane.xlu0 %1188
        %v1190 = vsel %vm1162, %v1182, 0.0
        %1191 = vadd.xlane.f32.xlu0 %v1190
        %v1192 = vpop.xlane.xlu0 %1191
        %v1193 = vsel %vm1162, %v1184, 0.0
        %1194 = vadd.xlane.f32.xlu0 %v1193
        %v1195 = vpop.xlane.xlu0 %1194
        %v1196 = vsel %vm1162, %v1186, 0.0
        %1197 = vadd.xlane.f32.xlu0 %v1196
        %v1198 = vpop.xlane.xlu0 %1197
        %v1199 = vrcp.pop %v1189
        %v1200 = vrcp.pop %v1192
        %v1201 = vrcp.pop %v1195
        %v1202 = vrcp.pop %v1198
        %v1203 = vmul.f32 %v1180, %v1199
        %v1204 = vmul.f32 %v1182, %v1200
        %v1205 = vmul.f32 %v1184, %v1201
        %v1206 = vmul.f32 %v1186, %v1202
        %v1207 = vpack.c.bf16 %v1203, %v1203
        %v1208 = vpack.c.bf16 %v1204, %v1204
        %v1209 = vpack.c.bf16 %v1205, %v1205
        %v1210 = vpack.c.bf16 %v1206, %v1206
        %v1212 = vsel %vm1162, %v1207, 0
        %vm1214 = vcmask 1043456
        %v1216 = vsel %vm1214, %v1061, 0
        %1218 = vmatpush.bf16.msra.mxu0 0
        %1219 = vmatpush.bf16.msra.mxu0 0
        %1220 = vmatpush.bf16.msra.mxu0 0
        %1221 = vmatpush.bf16.msra.mxu0 0
        %1222 = vmatpush.bf16.msra.mxu0 0
        %1223 = vmatpush.bf16.msra.mxu0 0
        %1224 = vmatpush.bf16.msra.mxu0 0
        %1225 = vmatpush.bf16.msra.mxu0 %v1216
        %1226 = vmatmul.bf16.gmra.mxu0 %v1212
        %v1227 = vpop.f32.mrf.mxu0
        %v1228 = vadd.f32 0.0, %v1227
        %v1229 = vpop.f32.mrf.mxu0
        %1230 = vdwg.mxu0
        %v1232 = vsel %vm1162, %v1208, 0
        %v1235 = vsel %vm1214, %v1062, 0
        %1237 = vmatpush.bf16.msra.mxu0 0
        %1238 = vmatpush.bf16.msra.mxu0 0
        %1239 = vmatpush.bf16.msra.mxu0 0
        %1240 = vmatpush.bf16.msra.mxu0 0
        %1241 = vmatpush.bf16.msra.mxu0 0
        %1242 = vmatpush.bf16.msra.mxu0 0
        %1243 = vmatpush.bf16.msra.mxu0 0
        %1244 = vmatpush.bf16.msra.mxu0 %v1235
        %1245 = vmatmul.bf16.gmra.mxu0 %v1232
        %v1246 = vpop.f32.mrf.mxu0
        %v1247 = vadd.f32 0.0, %v1246
        %v1248 = vpop.f32.mrf.mxu0
        %1249 = vdwg.mxu0
        %v1251 = vsel %vm1162, %v1209, 0
        %v1254 = vsel %vm1214, %v1063, 0
        %1256 = vmatpush.bf16.msra.mxu0 0
        %1257 = vmatpush.bf16.msra.mxu0 0
        %1258 = vmatpush.bf16.msra.mxu0 0
        %1259 = vmatpush.bf16.msra.mxu0 0
        %1260 = vmatpush.bf16.msra.mxu0 0
        %1261 = vmatpush.bf16.msra.mxu0 0
        %1262 = vmatpush.bf16.msra.mxu0 0
        %1263 = vmatpush.bf16.msra.mxu0 %v1254
        %1264 = vmatmul.bf16.gmra.mxu0 %v1251
        %v1265 = vpop.f32.mrf.mxu0
        %v1266 = vadd.f32 0.0, %v1265
        %v1267 = vpop.f32.mrf.mxu0
        %1268 = vdwg.mxu0
        %v1270 = vsel %vm1162, %v1210, 0
        %v1273 = vsel %vm1214, %v1064, 0
        %1275 = vmatpush.bf16.msra.mxu0 0
        %1276 = vmatpush.bf16.msra.mxu0 0
        %1277 = vmatpush.bf16.msra.mxu0 0
        %1278 = vmatpush.bf16.msra.mxu0 0
        %1279 = vmatpush.bf16.msra.mxu0 0
        %1280 = vmatpush.bf16.msra.mxu0 0
        %1281 = vmatpush.bf16.msra.mxu0 0
        %1282 = vmatpush.bf16.msra.mxu0 %v1273
        %1283 = vmatmul.bf16.gmra.mxu0 %v1270
        %v1284 = vpop.f32.mrf.mxu0
        %v1285 = vadd.f32 0.0, %v1284
        %v1286 = vpop.f32.mrf.mxu0
        %1287 = vdwg.mxu0
        %1288 = vrot.lane.b32.xlu0 %v1067, 112
        %v1289 = vpop.permute.xlu0 %1288
        %1290 = vrot.lane.b32.xlu0 %v1067, 48
        %v1291 = vpop.permute.xlu0 %1290
        %v1293 = vsel %vm1070, %v1289, 0
        %v1296 = vsel %vm1070, %v1291, 0
        %1298 = vmatpush.bf16.xpose.msra.mxu0 0
        %1299 = vmatpush.bf16.xpose.msra.mxu0 0
        %1300 = vmatpush.bf16.xpose.msra.mxu0 0
        %1301 = vmatpush.bf16.xpose.msra.mxu0 0
        %1302 = vmatpush.bf16.xpose.msra.mxu0 0
        %1303 = vmatpush.bf16.xpose.msra.mxu0 0
        %1304 = vmatpush.bf16.xpose.msra.mxu0 0
        %1305 = vmatpush.bf16.xpose.msra.mxu0 %v1296
        %1306 = vmatmul.bf16.gmra.mxu0 %v1293
        %v1307 = vpop.f32.mrf.mxu0
        %v1308 = vadd.f32 %v1056, %v1307
        %v1309 = vpop.f32.mrf.mxu0
        %1310 = vdwg.mxu0
        %1311 = vrot.lane.b32.xlu0 %v1092, 112
        %v1312 = vpop.permute.xlu0 %1311
        %1313 = vrot.lane.b32.xlu0 %v1092, 48
        %v1314 = vpop.permute.xlu0 %1313
        %v1316 = vsel %vm1070, %v1312, 0
        %v1319 = vsel %vm1070, %v1314, 0
        %1321 = vmatpush.bf16.xpose.msra.mxu0 0
        %1322 = vmatpush.bf16.xpose.msra.mxu0 0
        %1323 = vmatpush.bf16.xpose.msra.mxu0 0
        %1324 = vmatpush.bf16.xpose.msra.mxu0 0
        %1325 = vmatpush.bf16.xpose.msra.mxu0 0
        %1326 = vmatpush.bf16.xpose.msra.mxu0 0
        %1327 = vmatpush.bf16.xpose.msra.mxu0 0
        %1328 = vmatpush.bf16.xpose.msra.mxu0 %v1319
        %1329 = vmatmul.bf16.gmra.mxu0 %v1316
        %v1330 = vpop.f32.mrf.mxu0
        %v1331 = vadd.f32 %v1056, %v1330
        %v1332 = vpop.f32.mrf.mxu0
        %1333 = vdwg.mxu0
        %1334 = vrot.lane.b32.xlu0 %v1116, 112
        %v1335 = vpop.permute.xlu0 %1334
        %1336 = vrot.lane.b32.xlu0 %v1116, 48
        %v1337 = vpop.permute.xlu0 %1336
        %v1339 = vsel %vm1070, %v1335, 0
        %v1342 = vsel %vm1070, %v1337, 0
        %1344 = vmatpush.bf16.xpose.msra.mxu0 0
        %1345 = vmatpush.bf16.xpose.msra.mxu0 0
        %1346 = vmatpush.bf16.xpose.msra.mxu0 0
        %1347 = vmatpush.bf16.xpose.msra.mxu0 0
        %1348 = vmatpush.bf16.xpose.msra.mxu0 0
        %1349 = vmatpush.bf16.xpose.msra.mxu0 0
        %1350 = vmatpush.bf16.xpose.msra.mxu0 0
        %1351 = vmatpush.bf16.xpose.msra.mxu0 %v1342
        %1352 = vmatmul.bf16.gmra.mxu0 %v1339
        %v1353 = vpop.f32.mrf.mxu0
        %v1354 = vadd.f32 %v1056, %v1353
        %v1355 = vpop.f32.mrf.mxu0
        %1356 = vdwg.mxu0
        %1357 = vrot.lane.b32.xlu0 %v1140, 112
        %v1358 = vpop.permute.xlu0 %1357
        %1359 = vrot.lane.b32.xlu0 %v1140, 48
        %v1360 = vpop.permute.xlu0 %1359
        %v1362 = vsel %vm1070, %v1358, 0
        %v1365 = vsel %vm1070, %v1360, 0
        %1367 = vmatpush.bf16.xpose.msra.mxu0 0
        %1368 = vmatpush.bf16.xpose.msra.mxu0 0
        %1369 = vmatpush.bf16.xpose.msra.mxu0 0
        %1370 = vmatpush.bf16.xpose.msra.mxu0 0
        %1371 = vmatpush.bf16.xpose.msra.mxu0 0
        %1372 = vmatpush.bf16.xpose.msra.mxu0 0
        %1373 = vmatpush.bf16.xpose.msra.mxu0 0
        %1374 = vmatpush.bf16.xpose.msra.mxu0 %v1365
        %1375 = vmatmul.bf16.gmra.mxu0 %v1362
        %v1376 = vpop.f32.mrf.mxu0
        %v1377 = vadd.f32 %v1056, %v1376
        %v1378 = vpop.f32.mrf.mxu0
        %1379 = vdwg.mxu0
        %v1380 = vsel %vm1162, %v1308, -inf
        %1381 = vmax.xlane.f32.xlu0 %v1380
        %v1382 = vpop.xlane.xlu0 %1381
        %v1383 = vsel %vm1162, %v1331, -inf
        %1384 = vmax.xlane.f32.xlu0 %v1383
        %v1385 = vpop.xlane.xlu0 %1384
        %v1386 = vsel %vm1162, %v1354, -inf
        %1387 = vmax.xlane.f32.xlu0 %v1386
        %v1388 = vpop.xlane.xlu0 %1387
        %v1389 = vsel %vm1162, %v1377, -inf
        %1390 = vmax.xlane.f32.xlu0 %v1389
        %v1391 = vpop.xlane.xlu0 %1390
        %v1392 = vsub.f32 %v1308, %v1382
        %v1393 = vsub.f32 %v1331, %v1385
        %v1394 = vsub.f32 %v1354, %v1388
        %v1395 = vsub.f32 %v1377, %v1391
        %v1396 = vmul.f32 %v1392, 1.442695
        %v1397 = vpow.pop %v1396
        %v1398 = vmul.f32 %v1393, 1.442695
        %v1399 = vpow.pop %v1398
        %v1400 = vmul.f32 %v1394, 1.442695
        %v1401 = vpow.pop %v1400
        %v1402 = vmul.f32 %v1395, 1.442695
        %v1403 = vpow.pop %v1402
        %v1404 = vsel %vm1162, %v1397, 0.0
        %1405 = vadd.xlane.f32.xlu0 %v1404
        %v1406 = vpop.xlane.xlu0 %1405
        %v1407 = vsel %vm1162, %v1399, 0.0
        %1408 = vadd.xlane.f32.xlu0 %v1407
        %v1409 = vpop.xlane.xlu0 %1408
        %v1410 = vsel %vm1162, %v1401, 0.0
        %1411 = vadd.xlane.f32.xlu0 %v1410
        %v1412 = vpop.xlane.xlu0 %1411
        %v1413 = vsel %vm1162, %v1403, 0.0
        %1414 = vadd.xlane.f32.xlu0 %v1413
        %v1415 = vpop.xlane.xlu0 %1414
        %v1416 = vrcp.pop %v1406
        %v1417 = vrcp.pop %v1409
        %v1418 = vrcp.pop %v1412
        %v1419 = vrcp.pop %v1415
        %v1420 = vmul.f32 %v1397, %v1416
        %v1421 = vmul.f32 %v1399, %v1417
        %v1422 = vmul.f32 %v1401, %v1418
        %v1423 = vmul.f32 %v1403, %v1419
        %v1424 = vpack.c.bf16 %v1420, %v1420
        %v1425 = vpack.c.bf16 %v1421, %v1421
        %v1426 = vpack.c.bf16 %v1422, %v1422
        %v1427 = vpack.c.bf16 %v1423, %v1423
        %v1429 = vunpack.c.l.b16 %v1061
        %v1430 = vpack.c.b16 %v1429, %v1429
        %1431 = vrot.lane.b32.xlu0 %v1430, 112
        %v1432 = vpop.permute.xlu0 %1431
        %v1434 = vsel %vm1162, %v1424, 0
        %v1437 = vsel %vm1214, %v1432, 0
        %1439 = vmatpush.bf16.msra.mxu0 0
        %1440 = vmatpush.bf16.msra.mxu0 0
        %1441 = vmatpush.bf16.msra.mxu0 0
        %1442 = vmatpush.bf16.msra.mxu0 0
        %1443 = vmatpush.bf16.msra.mxu0 0
        %1444 = vmatpush.bf16.msra.mxu0 0
        %1445 = vmatpush.bf16.msra.mxu0 0
        %1446 = vmatpush.bf16.msra.mxu0 %v1437
        %1447 = vmatmul.bf16.gmra.mxu0 %v1434
        %v1448 = vpop.f32.mrf.mxu0
        %v1449 = vadd.f32 0.0, %v1448
        %v1450 = vpop.f32.mrf.mxu0
        %1451 = vdwg.mxu0
        %v1453 = vunpack.c.l.b16 %v1062
        %v1454 = vpack.c.b16 %v1453, %v1453
        %1455 = vrot.lane.b32.xlu0 %v1454, 112
        %v1456 = vpop.permute.xlu0 %1455
        %v1458 = vsel %vm1162, %v1425, 0
        %v1461 = vsel %vm1214, %v1456, 0
        %1463 = vmatpush.bf16.msra.mxu0 0
        %1464 = vmatpush.bf16.msra.mxu0 0
        %1465 = vmatpush.bf16.msra.mxu0 0
        %1466 = vmatpush.bf16.msra.mxu0 0
        %1467 = vmatpush.bf16.msra.mxu0 0
        %1468 = vmatpush.bf16.msra.mxu0 0
        %1469 = vmatpush.bf16.msra.mxu0 0
        %1470 = vmatpush.bf16.msra.mxu0 %v1461
        %1471 = vmatmul.bf16.gmra.mxu0 %v1458
        %v1472 = vpop.f32.mrf.mxu0
        %v1473 = vadd.f32 0.0, %v1472
        %v1474 = vpop.f32.mrf.mxu0
        %1475 = vdwg.mxu0
        %v1477 = vunpack.c.l.b16 %v1063
        %v1478 = vpack.c.b16 %v1477, %v1477
        %1479 = vrot.lane.b32.xlu0 %v1478, 112
        %v1480 = vpop.permute.xlu0 %1479
        %v1482 = vsel %vm1162, %v1426, 0
        %v1485 = vsel %vm1214, %v1480, 0
        %1487 = vmatpush.bf16.msra.mxu0 0
        %1488 = vmatpush.bf16.msra.mxu0 0
        %1489 = vmatpush.bf16.msra.mxu0 0
        %1490 = vmatpush.bf16.msra.mxu0 0
        %1491 = vmatpush.bf16.msra.mxu0 0
        %1492 = vmatpush.bf16.msra.mxu0 0
        %1493 = vmatpush.bf16.msra.mxu0 0
        %1494 = vmatpush.bf16.msra.mxu0 %v1485
        %1495 = vmatmul.bf16.gmra.mxu0 %v1482
        %v1496 = vpop.f32.mrf.mxu0
        %v1497 = vadd.f32 0.0, %v1496
        %v1498 = vpop.f32.mrf.mxu0
        %1499 = vdwg.mxu0
        %v1501 = vunpack.c.l.b16 %v1064
        %v1502 = vpack.c.b16 %v1501, %v1501
        %1503 = vrot.lane.b32.xlu0 %v1502, 112
        %v1504 = vpop.permute.xlu0 %1503
        %v1506 = vsel %vm1162, %v1427, 0
        %v1509 = vsel %vm1214, %v1504, 0
        %1511 = vmatpush.bf16.msra.mxu0 0
        %1512 = vmatpush.bf16.msra.mxu0 0
        %1513 = vmatpush.bf16.msra.mxu0 0
        %1514 = vmatpush.bf16.msra.mxu0 0
        %1515 = vmatpush.bf16.msra.mxu0 0
        %1516 = vmatpush.bf16.msra.mxu0 0
        %1517 = vmatpush.bf16.msra.mxu0 0
        %1518 = vmatpush.bf16.msra.mxu0 %v1509
        %1519 = vmatmul.bf16.gmra.mxu0 %v1506
        %v1520 = vpop.f32.mrf.mxu0
        %v1521 = vadd.f32 0.0, %v1520
        %v1522 = vpop.f32.mrf.mxu0
        %1523 = vdwg.mxu0
        %1524 = vrot.lane.b32.xlu0 %v1067, 96
        %v1525 = vpop.permute.xlu0 %1524
        %1526 = vrot.lane.b32.xlu0 %v1067, 32
        %v1527 = vpop.permute.xlu0 %1526
        %v1529 = vsel %vm1070, %v1525, 0
        %v1532 = vsel %vm1070, %v1527, 0
        %1534 = vmatpush.bf16.xpose.msra.mxu0 0
        %1535 = vmatpush.bf16.xpose.msra.mxu0 0
        %1536 = vmatpush.bf16.xpose.msra.mxu0 0
        %1537 = vmatpush.bf16.xpose.msra.mxu0 0
        %1538 = vmatpush.bf16.xpose.msra.mxu0 0
        %1539 = vmatpush.bf16.xpose.msra.mxu0 0
        %1540 = vmatpush.bf16.xpose.msra.mxu0 0
        %1541 = vmatpush.bf16.xpose.msra.mxu0 %v1532
        %1542 = vmatmul.bf16.gmra.mxu0 %v1529
        %v1543 = vpop.f32.mrf.mxu0
        %v1544 = vadd.f32 %v1056, %v1543
        %v1545 = vpop.f32.mrf.mxu0
        %1546 = vdwg.mxu0
        %1547 = vrot.lane.b32.xlu0 %v1092, 96
        %v1548 = vpop.permute.xlu0 %1547
        %1549 = vrot.lane.b32.xlu0 %v1092, 32
        %v1550 = vpop.permute.xlu0 %1549
        %v1552 = vsel %vm1070, %v1548, 0
        %v1555 = vsel %vm1070, %v1550, 0
        %1557 = vmatpush.bf16.xpose.msra.mxu0 0
        %1558 = vmatpush.bf16.xpose.msra.mxu0 0
        %1559 = vmatpush.bf16.xpose.msra.mxu0 0
        %1560 = vmatpush.bf16.xpose.msra.mxu0 0
        %1561 = vmatpush.bf16.xpose.msra.mxu0 0
        %1562 = vmatpush.bf16.xpose.msra.mxu0 0
        %1563 = vmatpush.bf16.xpose.msra.mxu0 0
        %1564 = vmatpush.bf16.xpose.msra.mxu0 %v1555
        %1565 = vmatmul.bf16.gmra.mxu0 %v1552
        %v1566 = vpop.f32.mrf.mxu0
        %v1567 = vadd.f32 %v1056, %v1566
        %v1568 = vpop.f32.mrf.mxu0
        %1569 = vdwg.mxu0
        %1570 = vrot.lane.b32.xlu0 %v1116, 96
        %v1571 = vpop.permute.xlu0 %1570
        %1572 = vrot.lane.b32.xlu0 %v1116, 32
        %v1573 = vpop.permute.xlu0 %1572
        %v1575 = vsel %vm1070, %v1571, 0
        %v1578 = vsel %vm1070, %v1573, 0
        %1580 = vmatpush.bf16.xpose.msra.mxu0 0
        %1581 = vmatpush.bf16.xpose.msra.mxu0 0
        %1582 = vmatpush.bf16.xpose.msra.mxu0 0
        %1583 = vmatpush.bf16.xpose.msra.mxu0 0
        %1584 = vmatpush.bf16.xpose.msra.mxu0 0
        %1585 = vmatpush.bf16.xpose.msra.mxu0 0
        %1586 = vmatpush.bf16.xpose.msra.mxu0 0
        %1587 = vmatpush.bf16.xpose.msra.mxu0 %v1578
        %1588 = vmatmul.bf16.gmra.mxu0 %v1575
        %v1589 = vpop.f32.mrf.mxu0
        %v1590 = vadd.f32 %v1056, %v1589
        %v1591 = vpop.f32.mrf.mxu0
        %1592 = vdwg.mxu0
        %1593 = vrot.lane.b32.xlu0 %v1140, 96
        %v1594 = vpop.permute.xlu0 %1593
        %1595 = vrot.lane.b32.xlu0 %v1140, 32
        %v1596 = vpop.permute.xlu0 %1595
        %v1598 = vsel %vm1070, %v1594, 0
        %v1601 = vsel %vm1070, %v1596, 0
        %1603 = vmatpush.bf16.xpose.msra.mxu0 0
        %1604 = vmatpush.bf16.xpose.msra.mxu0 0
        %1605 = vmatpush.bf16.xpose.msra.mxu0 0
        %1606 = vmatpush.bf16.xpose.msra.mxu0 0
        %1607 = vmatpush.bf16.xpose.msra.mxu0 0
        %1608 = vmatpush.bf16.xpose.msra.mxu0 0
        %1609 = vmatpush.bf16.xpose.msra.mxu0 0
        %1610 = vmatpush.bf16.xpose.msra.mxu0 %v1601
        %1611 = vmatmul.bf16.gmra.mxu0 %v1598
        %v1612 = vpop.f32.mrf.mxu0
        %v1613 = vadd.f32 %v1056, %v1612
        %v1614 = vpop.f32.mrf.mxu0
        %1615 = vdwg.mxu0
        %v1616 = vsel %vm1162, %v1544, -inf
        %1617 = vmax.xlane.f32.xlu0 %v1616
        %v1618 = vpop.xlane.xlu0 %1617
        %v1619 = vsel %vm1162, %v1567, -inf
        %1620 = vmax.xlane.f32.xlu0 %v1619
        %v1621 = vpop.xlane.xlu0 %1620
        %v1622 = vsel %vm1162, %v1590, -inf
        %1623 = vmax.xlane.f32.xlu0 %v1622
        %v1624 = vpop.xlane.xlu0 %1623
        %v1625 = vsel %vm1162, %v1613, -inf
        %1626 = vmax.xlane.f32.xlu0 %v1625
        %v1627 = vpop.xlane.xlu0 %1626
        %v1628 = vsub.f32 %v1544, %v1618
        %v1629 = vsub.f32 %v1567, %v1621
        %v1630 = vsub.f32 %v1590, %v1624
        %v1631 = vsub.f32 %v1613, %v1627
        %v1632 = vmul.f32 %v1628, 1.442695
        %v1633 = vpow.pop %v1632
        %v1634 = vmul.f32 %v1629, 1.442695
        %v1635 = vpow.pop %v1634
        %v1636 = vmul.f32 %v1630, 1.442695
        %v1637 = vpow.pop %v1636
        %v1638 = vmul.f32 %v1631, 1.442695
        %v1639 = vpow.pop %v1638
        %v1640 = vsel %vm1162, %v1633, 0.0
        %1641 = vadd.xlane.f32.xlu0 %v1640
        %v1642 = vpop.xlane.xlu0 %1641
        %v1643 = vsel %vm1162, %v1635, 0.0
        %1644 = vadd.xlane.f32.xlu0 %v1643
        %v1645 = vpop.xlane.xlu0 %1644
        %v1646 = vsel %vm1162, %v1637, 0.0
        %1647 = vadd.xlane.f32.xlu0 %v1646
        %v1648 = vpop.xlane.xlu0 %1647
        %v1649 = vsel %vm1162, %v1639, 0.0
        %1650 = vadd.xlane.f32.xlu0 %v1649
        %v1651 = vpop.xlane.xlu0 %1650
        %v1652 = vrcp.pop %v1642
        %v1653 = vrcp.pop %v1645
        %v1654 = vrcp.pop %v1648
        %v1655 = vrcp.pop %v1651
        %v1656 = vmul.f32 %v1633, %v1652
        %v1657 = vmul.f32 %v1635, %v1653
        %v1658 = vmul.f32 %v1637, %v1654
        %v1659 = vmul.f32 %v1639, %v1655
        %v1660 = vpack.c.bf16 %v1656, %v1656
        %v1661 = vpack.c.bf16 %v1657, %v1657
        %v1662 = vpack.c.bf16 %v1658, %v1658
        %v1663 = vpack.c.bf16 %v1659, %v1659
        %1664 = vrot.lane.b32.xlu0 %v1430, 96
        %v1665 = vpop.permute.xlu0 %1664
        %v1667 = vsel %vm1162, %v1660, 0
        %v1670 = vsel %vm1214, %v1665, 0
        %1672 = vmatpush.bf16.msra.mxu0 0
        %1673 = vmatpush.bf16.msra.mxu0 0
        %1674 = vmatpush.bf16.msra.mxu0 0
        %1675 = vmatpush.bf16.msra.mxu0 0
        %1676 = vmatpush.bf16.msra.mxu0 0
        %1677 = vmatpush.bf16.msra.mxu0 0
        %1678 = vmatpush.bf16.msra.mxu0 0
        %1679 = vmatpush.bf16.msra.mxu0 %v1670
        %1680 = vmatmul.bf16.gmra.mxu0 %v1667
        %v1681 = vpop.f32.mrf.mxu0
        %v1682 = vadd.f32 0.0, %v1681
        %v1683 = vpop.f32.mrf.mxu0
        %1684 = vdwg.mxu0
        %1685 = vrot.lane.b32.xlu0 %v1454, 96
        %v1686 = vpop.permute.xlu0 %1685
        %v1688 = vsel %vm1162, %v1661, 0
        %v1691 = vsel %vm1214, %v1686, 0
        %1693 = vmatpush.bf16.msra.mxu0 0
        %1694 = vmatpush.bf16.msra.mxu0 0
        %1695 = vmatpush.bf16.msra.mxu0 0
        %1696 = vmatpush.bf16.msra.mxu0 0
        %1697 = vmatpush.bf16.msra.mxu0 0
        %1698 = vmatpush.bf16.msra.mxu0 0
        %1699 = vmatpush.bf16.msra.mxu0 0
        %1700 = vmatpush.bf16.msra.mxu0 %v1691
        %1701 = vmatmul.bf16.gmra.mxu0 %v1688
        %v1702 = vpop.f32.mrf.mxu0
        %v1703 = vadd.f32 0.0, %v1702
        %v1704 = vpop.f32.mrf.mxu0
        %1705 = vdwg.mxu0
        %1706 = vrot.lane.b32.xlu0 %v1478, 96
        %v1707 = vpop.permute.xlu0 %1706
        %v1709 = vsel %vm1162, %v1662, 0
        %v1712 = vsel %vm1214, %v1707, 0
        %1714 = vmatpush.bf16.msra.mxu0 0
        %1715 = vmatpush.bf16.msra.mxu0 0
        %1716 = vmatpush.bf16.msra.mxu0 0
        %1717 = vmatpush.bf16.msra.mxu0 0
        %1718 = vmatpush.bf16.msra.mxu0 0
        %1719 = vmatpush.bf16.msra.mxu0 0
        %1720 = vmatpush.bf16.msra.mxu0 0
        %1721 = vmatpush.bf16.msra.mxu0 %v1712
        %1722 = vmatmul.bf16.gmra.mxu0 %v1709
        %v1723 = vpop.f32.mrf.mxu0
        %v1724 = vadd.f32 0.0, %v1723
        %v1725 = vpop.f32.mrf.mxu0
        %1726 = vdwg.mxu0
        %1727 = vrot.lane.b32.xlu0 %v1502, 96
        %v1728 = vpop.permute.xlu0 %1727
        %v1730 = vsel %vm1162, %v1663, 0
        %v1733 = vsel %vm1214, %v1728, 0
        %1735 = vmatpush.bf16.msra.mxu0 0
        %1736 = vmatpush.bf16.msra.mxu0 0
        %1737 = vmatpush.bf16.msra.mxu0 0
        %1738 = vmatpush.bf16.msra.mxu0 0
        %1739 = vmatpush.bf16.msra.mxu0 0
        %1740 = vmatpush.bf16.msra.mxu0 0
        %1741 = vmatpush.bf16.msra.mxu0 0
        %1742 = vmatpush.bf16.msra.mxu0 %v1733
        %1743 = vmatmul.bf16.gmra.mxu0 %v1730
        %v1744 = vpop.f32.mrf.mxu0
        %v1745 = vadd.f32 0.0, %v1744
        %v1746 = vpop.f32.mrf.mxu0
        %1747 = vdwg.mxu0
        %1748 = vrot.lane.b32.xlu0 %v1067, 80
        %v1749 = vpop.permute.xlu0 %1748
        %1750 = vrot.lane.b32.xlu0 %v1067, 16
        %v1751 = vpop.permute.xlu0 %1750
        %v1753 = vsel %vm1070, %v1749, 0
        %v1756 = vsel %vm1070, %v1751, 0
        %1758 = vmatpush.bf16.xpose.msra.mxu0 0
        %1759 = vmatpush.bf16.xpose.msra.mxu0 0
        %1760 = vmatpush.bf16.xpose.msra.mxu0 0
        %1761 = vmatpush.bf16.xpose.msra.mxu0 0
        %1762 = vmatpush.bf16.xpose.msra.mxu0 0
        %1763 = vmatpush.bf16.xpose.msra.mxu0 0
        %1764 = vmatpush.bf16.xpose.msra.mxu0 0
        %1765 = vmatpush.bf16.xpose.msra.mxu0 %v1756
        %1766 = vmatmul.bf16.gmra.mxu0 %v1753
        %v1767 = vpop.f32.mrf.mxu0
        %v1768 = vadd.f32 %v1056, %v1767
        %v1769 = vpop.f32.mrf.mxu0
        %1770 = vdwg.mxu0
        %1771 = vrot.lane.b32.xlu0 %v1092, 80
        %v1772 = vpop.permute.xlu0 %1771
        %1773 = vrot.lane.b32.xlu0 %v1092, 16
        %v1774 = vpop.permute.xlu0 %1773
        %v1776 = vsel %vm1070, %v1772, 0
        %v1779 = vsel %vm1070, %v1774, 0
        %1781 = vmatpush.bf16.xpose.msra.mxu0 0
        %1782 = vmatpush.bf16.xpose.msra.mxu0 0
        %1783 = vmatpush.bf16.xpose.msra.mxu0 0
        %1784 = vmatpush.bf16.xpose.msra.mxu0 0
        %1785 = vmatpush.bf16.xpose.msra.mxu0 0
        %1786 = vmatpush.bf16.xpose.msra.mxu0 0
        %1787 = vmatpush.bf16.xpose.msra.mxu0 0
        %1788 = vmatpush.bf16.xpose.msra.mxu0 %v1779
        %1789 = vmatmul.bf16.gmra.mxu0 %v1776
        %v1790 = vpop.f32.mrf.mxu0
        %v1791 = vadd.f32 %v1056, %v1790
        %v1792 = vpop.f32.mrf.mxu0
        %1793 = vdwg.mxu0
        %1794 = vrot.lane.b32.xlu0 %v1116, 80
        %v1795 = vpop.permute.xlu0 %1794
        %1796 = vrot.lane.b32.xlu0 %v1116, 16
        %v1797 = vpop.permute.xlu0 %1796
        %v1799 = vsel %vm1070, %v1795, 0
        %v1802 = vsel %vm1070, %v1797, 0
        %1804 = vmatpush.bf16.xpose.msra.mxu0 0
        %1805 = vmatpush.bf16.xpose.msra.mxu0 0
        %1806 = vmatpush.bf16.xpose.msra.mxu0 0
        %1807 = vmatpush.bf16.xpose.msra.mxu0 0
        %1808 = vmatpush.bf16.xpose.msra.mxu0 0
        %1809 = vmatpush.bf16.xpose.msra.mxu0 0
        %1810 = vmatpush.bf16.xpose.msra.mxu0 0
        %1811 = vmatpush.bf16.xpose.msra.mxu0 %v1802
        %1812 = vmatmul.bf16.gmra.mxu0 %v1799
        %v1813 = vpop.f32.mrf.mxu0
        %v1814 = vadd.f32 %v1056, %v1813
        %v1815 = vpop.f32.mrf.mxu0
        %1816 = vdwg.mxu0
        %1817 = vrot.lane.b32.xlu0 %v1140, 80
        %v1818 = vpop.permute.xlu0 %1817
        %1819 = vrot.lane.b32.xlu0 %v1140, 16
        %v1820 = vpop.permute.xlu0 %1819
        %v1822 = vsel %vm1070, %v1818, 0
        %v1825 = vsel %vm1070, %v1820, 0
        %1827 = vmatpush.bf16.xpose.msra.mxu0 0
        %1828 = vmatpush.bf16.xpose.msra.mxu0 0
        %1829 = vmatpush.bf16.xpose.msra.mxu0 0
        %1830 = vmatpush.bf16.xpose.msra.mxu0 0
        %1831 = vmatpush.bf16.xpose.msra.mxu0 0
        %1832 = vmatpush.bf16.xpose.msra.mxu0 0
        %1833 = vmatpush.bf16.xpose.msra.mxu0 0
        %1834 = vmatpush.bf16.xpose.msra.mxu0 %v1825
        %1835 = vmatmul.bf16.gmra.mxu0 %v1822
        %v1836 = vpop.f32.mrf.mxu0
        %v1837 = vadd.f32 %v1056, %v1836
        %v1838 = vpop.f32.mrf.mxu0
        %1839 = vdwg.mxu0
        %v1840 = vsel %vm1162, %v1768, -inf
        %1841 = vmax.xlane.f32.xlu0 %v1840
        %v1842 = vpop.xlane.xlu0 %1841
        %v1843 = vsel %vm1162, %v1791, -inf
        %1844 = vmax.xlane.f32.xlu0 %v1843
        %v1845 = vpop.xlane.xlu0 %1844
        %v1846 = vsel %vm1162, %v1814, -inf
        %1847 = vmax.xlane.f32.xlu0 %v1846
        %v1848 = vpop.xlane.xlu0 %1847
        %v1849 = vsel %vm1162, %v1837, -inf
        %1850 = vmax.xlane.f32.xlu0 %v1849
        %v1851 = vpop.xlane.xlu0 %1850
        %v1852 = vsub.f32 %v1768, %v1842
        %v1853 = vsub.f32 %v1791, %v1845
        %v1854 = vsub.f32 %v1814, %v1848
        %v1855 = vsub.f32 %v1837, %v1851
        %v1856 = vmul.f32 %v1852, 1.442695
        %v1857 = vpow.pop %v1856
        %v1858 = vmul.f32 %v1853, 1.442695
        %v1859 = vpow.pop %v1858
        %v1860 = vmul.f32 %v1854, 1.442695
        %v1861 = vpow.pop %v1860
        %v1862 = vmul.f32 %v1855, 1.442695
        %v1863 = vpow.pop %v1862
        %v1864 = vsel %vm1162, %v1857, 0.0
        %1865 = vadd.xlane.f32.xlu0 %v1864
        %v1866 = vpop.xlane.xlu0 %1865
        %v1867 = vsel %vm1162, %v1859, 0.0
        %1868 = vadd.xlane.f32.xlu0 %v1867
        %v1869 = vpop.xlane.xlu0 %1868
        %v1870 = vsel %vm1162, %v1861, 0.0
        %1871 = vadd.xlane.f32.xlu0 %v1870
        %v1872 = vpop.xlane.xlu0 %1871
        %v1873 = vsel %vm1162, %v1863, 0.0
        %1874 = vadd.xlane.f32.xlu0 %v1873
        %v1875 = vpop.xlane.xlu0 %1874
        %v1876 = vrcp.pop %v1866
        %v1877 = vrcp.pop %v1869
        %v1878 = vrcp.pop %v1872
        %v1879 = vrcp.pop %v1875
        %v1880 = vmul.f32 %v1857, %v1876
        %v1881 = vmul.f32 %v1859, %v1877
        %v1882 = vmul.f32 %v1861, %v1878
        %v1883 = vmul.f32 %v1863, %v1879
        %v1884 = vpack.c.bf16 %v1880, %v1880
        %v1885 = vpack.c.bf16 %v1881, %v1881
        %v1886 = vpack.c.bf16 %v1882, %v1882
        %v1887 = vpack.c.bf16 %v1883, %v1883
        %1888 = vrot.lane.b32.xlu0 %v1430, 80
        %v1889 = vpop.permute.xlu0 %1888
        %v1891 = vsel %vm1162, %v1884, 0
        %v1894 = vsel %vm1214, %v1889, 0
        %1896 = vmatpush.bf16.msra.mxu0 0
        %1897 = vmatpush.bf16.msra.mxu0 0
        %1898 = vmatpush.bf16.msra.mxu0 0
        %1899 = vmatpush.bf16.msra.mxu0 0
        %1900 = vmatpush.bf16.msra.mxu0 0
        %1901 = vmatpush.bf16.msra.mxu0 0
        %1902 = vmatpush.bf16.msra.mxu0 0
        %1903 = vmatpush.bf16.msra.mxu0 %v1894
        %1904 = vmatmul.bf16.gmra.mxu0 %v1891
        %v1905 = vpop.f32.mrf.mxu0
        %v1906 = vadd.f32 0.0, %v1905
        %v1907 = vpop.f32.mrf.mxu0
        %1908 = vdwg.mxu0
        %1909 = vrot.lane.b32.xlu0 %v1454, 80
        %v1910 = vpop.permute.xlu0 %1909
        %v1912 = vsel %vm1162, %v1885, 0
        %v1915 = vsel %vm1214, %v1910, 0
        %1917 = vmatpush.bf16.msra.mxu0 0
        %1918 = vmatpush.bf16.msra.mxu0 0
        %1919 = vmatpush.bf16.msra.mxu0 0
        %1920 = vmatpush.bf16.msra.mxu0 0
        %1921 = vmatpush.bf16.msra.mxu0 0
        %1922 = vmatpush.bf16.msra.mxu0 0
        %1923 = vmatpush.bf16.msra.mxu0 0
        %1924 = vmatpush.bf16.msra.mxu0 %v1915
        %1925 = vmatmul.bf16.gmra.mxu0 %v1912
        %v1926 = vpop.f32.mrf.mxu0
        %v1927 = vadd.f32 0.0, %v1926
        %v1928 = vpop.f32.mrf.mxu0
        %1929 = vdwg.mxu0
        %1930 = vrot.lane.b32.xlu0 %v1478, 80
        %v1931 = vpop.permute.xlu0 %1930
        %v1933 = vsel %vm1162, %v1886, 0
        %v1936 = vsel %vm1214, %v1931, 0
        %1938 = vmatpush.bf16.msra.mxu0 0
        %1939 = vmatpush.bf16.msra.mxu0 0
        %1940 = vmatpush.bf16.msra.mxu0 0
        %1941 = vmatpush.bf16.msra.mxu0 0
        %1942 = vmatpush.bf16.msra.mxu0 0
        %1943 = vmatpush.bf16.msra.mxu0 0
        %1944 = vmatpush.bf16.msra.mxu0 0
        %1945 = vmatpush.bf16.msra.mxu0 %v1936
        %1946 = vmatmul.bf16.gmra.mxu0 %v1933
        %v1947 = vpop.f32.mrf.mxu0
        %v1948 = vadd.f32 0.0, %v1947
        %v1949 = vpop.f32.mrf.mxu0
        %1950 = vdwg.mxu0
        %1951 = vrot.lane.b32.xlu0 %v1502, 80
        %v1952 = vpop.permute.xlu0 %1951
        %v1954 = vsel %vm1162, %v1887, 0
        %v1957 = vsel %vm1214, %v1952, 0
        %1959 = vmatpush.bf16.msra.mxu0 0
        %1960 = vmatpush.bf16.msra.mxu0 0
        %1961 = vmatpush.bf16.msra.mxu0 0
        %1962 = vmatpush.bf16.msra.mxu0 0
        %1963 = vmatpush.bf16.msra.mxu0 0
        %1964 = vmatpush.bf16.msra.mxu0 0
        %1965 = vmatpush.bf16.msra.mxu0 0
        %1966 = vmatpush.bf16.msra.mxu0 %v1957
        %1967 = vmatmul.bf16.gmra.mxu0 %v1954
        %v1968 = vpop.f32.mrf.mxu0
        %v1969 = vadd.f32 0.0, %v1968
        %v1970 = vpop.f32.mrf.mxu0
        %1971 = vdwg.mxu0
        %1976 = vrot.lane.b32.xlu0 %v1449, 16
        %v1977 = vpop.permute.xlu0 %1976
        %1978 = vrot.lane.b32.xlu0 %v1473, 16
        %v1979 = vpop.permute.xlu0 %1978
        %1980 = vrot.lane.b32.xlu0 %v1497, 16
        %v1981 = vpop.permute.xlu0 %1980
        %1982 = vrot.lane.b32.xlu0 %v1521, 16
        %v1983 = vpop.permute.xlu0 %1982
        %1992 = vrot.lane.b32.xlu0 %v1682, 32
        %v1993 = vpop.permute.xlu0 %1992
        %1994 = vrot.lane.b32.xlu0 %v1703, 32
        %v1995 = vpop.permute.xlu0 %1994
        %1996 = vrot.lane.b32.xlu0 %v1724, 32
        %v1997 = vpop.permute.xlu0 %1996
        %1998 = vrot.lane.b32.xlu0 %v1745, 32
        %v1999 = vpop.permute.xlu0 %1998
        %2008 = vrot.lane.b32.xlu0 %v1906, 48
        %v2009 = vpop.permute.xlu0 %2008
        %2010 = vrot.lane.b32.xlu0 %v1927, 48
        %v2011 = vpop.permute.xlu0 %2010
        %2012 = vrot.lane.b32.xlu0 %v1948, 48
        %v2013 = vpop.permute.xlu0 %2012
        %2014 = vrot.lane.b32.xlu0 %v1969, 48
        %v2015 = vpop.permute.xlu0 %2014
        %v2020 = vsel %vm1070, %v1228, %v1977
        %v2021 = vsel %vm1070, %v1247, %v1979
        %v2022 = vsel %vm1070, %v1266, %v1981
        %v2023 = vsel %vm1070, %v1285, %v1983
        %vm2024 = vcmask 261120
        %v2025 = vsel %vm2024, %v2020, %v1993
        %v2026 = vsel %vm2024, %v2021, %v1995
        %v2027 = vsel %vm2024, %v2022, %v1997
        %v2028 = vsel %vm2024, %v2023, %v1999
        %vm2029 = vcmask 392192
        %v2030 = vsel %vm2029, %v2025, %v2009
        %v2031 = vsel %vm2029, %v2026, %v2011
        %v2032 = vsel %vm2029, %v2027, %v2013
        %v2033 = vsel %vm2029, %v2028, %v2015
        %v2034 = vld [vmem:[%s759] sm:$0xf]
        %v2035 = vld [vmem:[%s759 + $0x4] sm:$0xf]
        %v2036 = vld [vmem:[%s759 + $0x8] sm:$0xf]
        %v2037 = vld [vmem:[%s759 + $0xc] sm:$0xf]
        %v2038 = vld [vmem:[%s759 + $0x10] sm:$0xf]
        %v2039 = vld [vmem:[%s759 + $0x14] sm:$0xf]
        %v2040 = vld [vmem:[%s759 + $0x18] sm:$0xf]
        %v2041 = vld [vmem:[%s759 + $0x1c] sm:$0xf]
        %v2042 = vpack.c.bf16 %v2031, %v2030
        %v2043 = vpack.c.bf16 %v2033, %v2032
        %v2044 = vld [vmem:[%s762] sm:$0x1]
        %v2046 = vperm.slane %v2044, 0
        %v2056 = vunpack.c.l.b16 %v2034
        %v2057 = vunpack.c.l.b16 %v2035
        %v2058 = vunpack.c.l.b16 %v2036
        %v2059 = vunpack.c.l.b16 %v2037
        %v2060 = vunpack.c.l.b16 %v2038
        %v2061 = vunpack.c.l.b16 %v2039
        %v2062 = vunpack.c.l.b16 %v2040
        %v2063 = vunpack.c.l.b16 %v2041
        %v2064 = vpack.c.b16 %v2057, %v2056
        %v2065 = vpack.c.b16 %v2059, %v2058
        %v2066 = vpack.c.b16 %v2061, %v2060
        %v2067 = vpack.c.b16 %v2063, %v2062
        %v2073 = vsel %vm842, %v2042, 0
        %v2076 = vsel %vm842, %v2043, 0
        %2078 = vmatpush.bf16.msra.mxu0 0
        %2079 = vmatpush.bf16.msra.mxu0 0
        %2080 = vmatpush.bf16.msra.mxu0 0
        %2081 = vmatpush.bf16.msra.mxu0 0
        %2082 = vmatpush.bf16.msra.mxu0 %v2067
        %2083 = vmatpush.bf16.msra.mxu0 %v2066
        %2084 = vmatpush.bf16.msra.mxu0 %v2065
        %2085 = vmatpush.bf16.msra.mxu0 %v2064
        %2086 = vmatmul.bf16.gmra.mxu0 %v2073
        %v2087 = vpop.f32.mrf.mxu0
        %v2088 = vadd.f32 %v2046, %v2087
        %v2089 = vpop.f32.mrf.mxu0
        %v2090 = vadd.f32 %v2046, %v2089
        %2091 = vmatmul.bf16.gmra.mxu0 %v2076
        %v2092 = vpop.f32.mrf.mxu0
        %v2093 = vadd.f32 %v2046, %v2092
        %v2094 = vpop.f32.mrf.mxu0
        %v2095 = vadd.f32 %v2046, %v2094
        %2096 = vdwg.mxu0
        %v2097 = vadd.f32 %v828, %v2088
        %v2098 = vadd.f32 %v829, %v2090
        %v2099 = vadd.f32 %v830, %v2093
        %v2100 = vadd.f32 %v831, %v2095
        %v2101 = vld [vmem:[%s773] sm:$0xff]
        %v2102 = vld [vmem:[%s773 + $0x8] sm:$0xff]
        %v2103 = vld [vmem:[%s773 + $0x10] sm:$0xff]
        %v2104 = vld [vmem:[%s773 + $0x18] sm:$0xff]
        %v2105 = vld [vmem:[%s773 + $0x20] sm:$0xff]
        %v2106 = vld [vmem:[%s773 + $0x28] sm:$0xff]
        %v2107 = vld [vmem:[%s773 + $0x30] sm:$0xff]
        %v2108 = vld [vmem:[%s773 + $0x38] sm:$0xff]
        %v2109 = vld [vmem:[%s782] sm:$0xf]
        %v2110 = vld [vmem:[%s782 + $0x4] sm:$0xf]
        %v2111 = vld [vmem:[%s782 + $0x8] sm:$0xf]
        %v2112 = vld [vmem:[%s782 + $0xc] sm:$0xf]
        %v2113 = vld [vmem:[%s782 + $0x10] sm:$0xf]
        %v2114 = vld [vmem:[%s782 + $0x14] sm:$0xf]
        %v2115 = vld [vmem:[%s782 + $0x18] sm:$0xf]
        %v2116 = vld [vmem:[%s782 + $0x1c] sm:$0xf]
        %v2117 = vld [vmem:[%s782 + $0x20] sm:$0xf]
        %v2118 = vld [vmem:[%s782 + $0x24] sm:$0xf]
        %v2119 = vld [vmem:[%s782 + $0x28] sm:$0xf]
        %v2120 = vld [vmem:[%s782 + $0x2c] sm:$0xf]
        %v2121 = vld [vmem:[%s782 + $0x30] sm:$0xf]
        %v2122 = vld [vmem:[%s782 + $0x34] sm:$0xf]
        %v2123 = vld [vmem:[%s782 + $0x38] sm:$0xf]
        %v2124 = vld [vmem:[%s782 + $0x3c] sm:$0xf]
        %v2125 = vld [vmem:[%s782 + $0x40] sm:$0xf]
        %v2126 = vld [vmem:[%s782 + $0x44] sm:$0xf]
        %v2127 = vld [vmem:[%s782 + $0x48] sm:$0xf]
        %v2128 = vld [vmem:[%s782 + $0x4c] sm:$0xf]
        %v2129 = vld [vmem:[%s782 + $0x50] sm:$0xf]
        %v2130 = vld [vmem:[%s782 + $0x54] sm:$0xf]
        %v2131 = vld [vmem:[%s782 + $0x58] sm:$0xf]
        %v2132 = vld [vmem:[%s782 + $0x5c] sm:$0xf]
        %v2133 = vld [vmem:[%s782 + $0x60] sm:$0xf]
        %v2134 = vld [vmem:[%s782 + $0x64] sm:$0xf]
        %v2135 = vld [vmem:[%s782 + $0x68] sm:$0xf]
        %v2136 = vld [vmem:[%s782 + $0x6c] sm:$0xf]
        %v2137 = vld [vmem:[%s782 + $0x70] sm:$0xf]
        %v2138 = vld [vmem:[%s782 + $0x74] sm:$0xf]
        %v2139 = vld [vmem:[%s782 + $0x78] sm:$0xf]
        %v2140 = vld [vmem:[%s782 + $0x7c] sm:$0xf]
        %v2141 = vld [vmem:[%s765] sm:$0x1]
        %v2142 = vld [vmem:[%s768] sm:$0x1]
        %v2143 = vsel %vm842, %v2097, 0.0
        %2144 = vadd.xlane.f32.xlu0 %v2143
        %v2145 = vpop.xlane.xlu0 %2144
        %v2146 = vsel %vm842, %v2098, 0.0
        %2147 = vadd.xlane.f32.xlu0 %v2146
        %v2148 = vpop.xlane.xlu0 %2147
        %v2149 = vsel %vm842, %v2099, 0.0
        %2150 = vadd.xlane.f32.xlu0 %v2149
        %v2151 = vpop.xlane.xlu0 %2150
        %v2152 = vsel %vm842, %v2100, 0.0
        %2153 = vadd.xlane.f32.xlu0 %v2152
        %v2154 = vpop.xlane.xlu0 %2153
        %v2155 = vmul.f32 %v2145, %v861
        %v2156 = vmul.f32 %v2148, %v861
        %v2157 = vmul.f32 %v2151, %v861
        %v2158 = vmul.f32 %v2154, %v861
        %v2159 = vmul.f32 %v2097, %v2097
        %v2160 = vmul.f32 %v2098, %v2098
        %v2161 = vmul.f32 %v2099, %v2099
        %v2162 = vmul.f32 %v2100, %v2100
        %v2163 = vsel %vm842, %v2159, 0.0
        %2164 = vadd.xlane.f32.xlu0 %v2163
        %v2165 = vpop.xlane.xlu0 %2164
        %v2166 = vsel %vm842, %v2160, 0.0
        %2167 = vadd.xlane.f32.xlu0 %v2166
        %v2168 = vpop.xlane.xlu0 %2167
        %v2169 = vsel %vm842, %v2161, 0.0
        %2170 = vadd.xlane.f32.xlu0 %v2169
        %v2171 = vpop.xlane.xlu0 %2170
        %v2172 = vsel %vm842, %v2162, 0.0
        %2173 = vadd.xlane.f32.xlu0 %v2172
        %v2174 = vpop.xlane.xlu0 %2173
        %v2175 = vmul.f32 %v2165, %v861
        %v2176 = vmul.f32 %v2168, %v861
        %v2177 = vmul.f32 %v2171, %v861
        %v2178 = vmul.f32 %v2174, %v861
        %v2179 = vmul.f32 %v2155, %v2155
        %v2180 = vmul.f32 %v2156, %v2156
        %v2181 = vmul.f32 %v2157, %v2157
        %v2182 = vmul.f32 %v2158, %v2158
        %v2183 = vsub.f32 %v2175, %v2179
        %v2184 = vsub.f32 %v2176, %v2180
        %v2185 = vsub.f32 %v2177, %v2181
        %v2186 = vsub.f32 %v2178, %v2182
        %v2187 = vmax.f32 %v2183, 0.0
        %v2188 = vmax.f32 %v2184, 0.0
        %v2189 = vmax.f32 %v2185, 0.0
        %v2190 = vmax.f32 %v2186, 0.0
        %v2191 = vsub.f32 %v2097, %v2155
        %v2192 = vsub.f32 %v2098, %v2156
        %v2193 = vsub.f32 %v2099, %v2157
        %v2194 = vsub.f32 %v2100, %v2158
        %v2195 = vadd.f32 %v2187, 1e-05
        %v2196 = vadd.f32 %v2188, 1e-05
        %v2197 = vadd.f32 %v2189, 1e-05
        %v2198 = vadd.f32 %v2190, 1e-05
        %v2199 = vrsqrt.pop %v2195
        %v2200 = vmul.f32 %v2199, %v2195
        %v2201 = vmul.f32 %v2200, %v2199
        %v2202 = vmul.f32 0.5, %v2201
        %v2203 = vsub.f32 1.5, %v2202
        %v2204 = vmul.f32 %v2199, %v2203
        %vm2205 = vweird.f32 %v2195
        %vm2206 = vweird.f32 %v2199
        %vm2207 = vmor %vm2205, %vm2206
        %v2208 = vsel %vm2207, %v2199, %v2204
        %v2209 = vrsqrt.pop %v2196
        %v2210 = vmul.f32 %v2209, %v2196
        %v2211 = vmul.f32 %v2210, %v2209
        %v2212 = vmul.f32 0.5, %v2211
        %v2213 = vsub.f32 1.5, %v2212
        %v2214 = vmul.f32 %v2209, %v2213
        %vm2215 = vweird.f32 %v2196
        %vm2216 = vweird.f32 %v2209
        %vm2217 = vmor %vm2215, %vm2216
        %v2218 = vsel %vm2217, %v2209, %v2214
        %v2219 = vrsqrt.pop %v2197
        %v2220 = vmul.f32 %v2219, %v2197
        %v2221 = vmul.f32 %v2220, %v2219
        %v2222 = vmul.f32 0.5, %v2221
        %v2223 = vsub.f32 1.5, %v2222
        %v2224 = vmul.f32 %v2219, %v2223
        %vm2225 = vweird.f32 %v2197
        %vm2226 = vweird.f32 %v2219
        %vm2227 = vmor %vm2225, %vm2226
        %v2228 = vsel %vm2227, %v2219, %v2224
        %v2229 = vrsqrt.pop %v2198
        %v2230 = vmul.f32 %v2229, %v2198
        %v2231 = vmul.f32 %v2230, %v2229
        %v2232 = vmul.f32 0.5, %v2231
        %v2233 = vsub.f32 1.5, %v2232
        %v2234 = vmul.f32 %v2229, %v2233
        %vm2235 = vweird.f32 %v2198
        %vm2236 = vweird.f32 %v2229
        %vm2237 = vmor %vm2235, %vm2236
        %v2238 = vsel %vm2237, %v2229, %v2234
        %v2239 = vmul.f32 %v2191, %v2208
        %v2240 = vmul.f32 %v2192, %v2218
        %v2241 = vmul.f32 %v2193, %v2228
        %v2242 = vmul.f32 %v2194, %v2238
        %v2244 = vperm.slane %v2141, 0
        %v2246 = vmul.f32 %v2239, %v2244
        %v2247 = vmul.f32 %v2240, %v2244
        %v2248 = vmul.f32 %v2241, %v2244
        %v2249 = vmul.f32 %v2242, %v2244
        %v2251 = vperm.slane %v2142, 0
        %v2253 = vadd.f32 %v2246, %v2251
        %v2254 = vadd.f32 %v2247, %v2251
        %v2255 = vadd.f32 %v2248, %v2251
        %v2256 = vadd.f32 %v2249, %v2251
        %v2257 = vpack.c.bf16 %v2254, %v2253
        %v2258 = vpack.c.bf16 %v2256, %v2255
        %v2259 = vld [vmem:[%s777] sm:$0x3]
        %v2261 = vperm.slane %v2259, 0
        %v2262 = vperm.slane %v2259, 1
        %v2273 = vunpack.c.l.b16 %v2101
        %v2274 = vunpack.c.h.b16 %v2101
        %v2275 = vunpack.c.l.b16 %v2102
        %v2276 = vunpack.c.h.b16 %v2102
        %v2277 = vunpack.c.l.b16 %v2103
        %v2278 = vunpack.c.h.b16 %v2103
        %v2279 = vunpack.c.l.b16 %v2104
        %v2280 = vunpack.c.h.b16 %v2104
        %v2281 = vunpack.c.l.b16 %v2105
        %v2282 = vunpack.c.h.b16 %v2105
        %v2283 = vunpack.c.l.b16 %v2106
        %v2284 = vunpack.c.h.b16 %v2106
        %v2285 = vunpack.c.l.b16 %v2107
        %v2286 = vunpack.c.h.b16 %v2107
        %v2287 = vunpack.c.l.b16 %v2108
        %v2288 = vunpack.c.h.b16 %v2108
        %v2289 = vpack.c.b16 %v2275, %v2273
        %v2290 = vpack.c.b16 %v2276, %v2274
        %v2291 = vpack.c.b16 %v2279, %v2277
        %v2292 = vpack.c.b16 %v2280, %v2278
        %v2293 = vpack.c.b16 %v2283, %v2281
        %v2294 = vpack.c.b16 %v2284, %v2282
        %v2295 = vpack.c.b16 %v2287, %v2285
        %v2296 = vpack.c.b16 %v2288, %v2286
        %v2306 = vsel %vm842, %v2257, 0
        %v2309 = vsel %vm842, %v2258, 0
        %2311 = vmatpush.bf16.msra.mxu0 0
        %2312 = vmatpush.bf16.msra.mxu0 0
        %2313 = vmatpush.bf16.msra.mxu0 0
        %2314 = vmatpush.bf16.msra.mxu0 0
        %2315 = vmatpush.bf16.msra.mxu0 %v2295
        %2316 = vmatpush.bf16.msra.mxu0 %v2293
        %2317 = vmatpush.bf16.msra.mxu0 %v2291
        %2318 = vmatpush.bf16.msra.mxu0 %v2289
        %2319 = vmatmul.bf16.gmra.mxu0 %v2306
        %v2320 = vpop.f32.mrf.mxu0
        %v2321 = vadd.f32 %v2261, %v2320
        %v2322 = vpop.f32.mrf.mxu0
        %v2323 = vadd.f32 %v2261, %v2322
        %2324 = vmatmul.bf16.gmra.mxu0 %v2309
        %v2325 = vpop.f32.mrf.mxu0
        %v2326 = vadd.f32 %v2261, %v2325
        %v2327 = vpop.f32.mrf.mxu0
        %v2328 = vadd.f32 %v2261, %v2327
        %2329 = vdwg.mxu0
        %2330 = vmatpush.bf16.msra.mxu0 0
        %2331 = vmatpush.bf16.msra.mxu0 0
        %2332 = vmatpush.bf16.msra.mxu0 0
        %2333 = vmatpush.bf16.msra.mxu0 0
        %2334 = vmatpush.bf16.msra.mxu0 %v2296
        %2335 = vmatpush.bf16.msra.mxu0 %v2294
        %2336 = vmatpush.bf16.msra.mxu0 %v2292
        %2337 = vmatpush.bf16.msra.mxu0 %v2290
        %2338 = vmatmul.bf16.gmra.mxu0 %v2306
        %v2339 = vpop.f32.mrf.mxu0
        %v2340 = vadd.f32 %v2262, %v2339
        %v2341 = vpop.f32.mrf.mxu0
        %v2342 = vadd.f32 %v2262, %v2341
        %2343 = vmatmul.bf16.gmra.mxu0 %v2309
        %v2344 = vpop.f32.mrf.mxu0
        %v2345 = vadd.f32 %v2262, %v2344
        %v2346 = vpop.f32.mrf.mxu0
        %v2347 = vadd.f32 %v2262, %v2346
        %2348 = vdwg.mxu0
        %v2349 = vmul.f32 %v2321, 1.702
        %v2350 = vmul.f32 %v2340, 1.702
        %v2351 = vmul.f32 %v2323, 1.702
        %v2352 = vmul.f32 %v2342, 1.702
        %v2353 = vmul.f32 %v2326, 1.702
        %v2354 = vmul.f32 %v2345, 1.702
        %v2355 = vmul.f32 %v2328, 1.702
        %v2356 = vmul.f32 %v2347, 1.702
        %v2357 = vxor.u32 %v2349, 2147483648
        %v2358 = vxor.u32 %v2350, 2147483648
        %v2359 = vxor.u32 %v2351, 2147483648
        %v2360 = vxor.u32 %v2352, 2147483648
        %v2361 = vxor.u32 %v2353, 2147483648
        %v2362 = vxor.u32 %v2354, 2147483648
        %v2363 = vxor.u32 %v2355, 2147483648
        %v2364 = vxor.u32 %v2356, 2147483648
        %v2365 = vmul.f32 %v2357, 1.442695
        %v2366 = vpow.pop %v2365
        %v2367 = vmul.f32 %v2358, 1.442695
        %v2368 = vpow.pop %v2367
        %v2369 = vmul.f32 %v2359, 1.442695
        %v2370 = vpow.pop %v2369
        %v2371 = vmul.f32 %v2360, 1.442695
        %v2372 = vpow.pop %v2371
        %v2373 = vmul.f32 %v2361, 1.442695
        %v2374 = vpow.pop %v2373
        %v2375 = vmul.f32 %v2362, 1.442695
        %v2376 = vpow.pop %v2375
        %v2377 = vmul.f32 %v2363, 1.442695
        %v2378 = vpow.pop %v2377
        %v2379 = vmul.f32 %v2364, 1.442695
        %v2380 = vpow.pop %v2379
        %v2381 = vadd.f32 %v2366, 1.0
        %v2382 = vadd.f32 %v2368, 1.0
        %v2383 = vadd.f32 %v2370, 1.0
        %v2384 = vadd.f32 %v2372, 1.0
        %v2385 = vadd.f32 %v2374, 1.0
        %v2386 = vadd.f32 %v2376, 1.0
        %v2387 = vadd.f32 %v2378, 1.0
        %v2388 = vadd.f32 %v2380, 1.0
        %v2389 = vrcp.pop %v2381
        %v2390 = vmul.f32 %v2381, %v2389
        %v2391 = vsub.f32 1.0, %v2390
        %v2392 = vmul.f32 %v2389, %v2391
        %v2393 = vadd.f32 %v2389, %v2392
        %vm2394 = vweird.f32 %v2381
        %vm2395 = vweird.f32 %v2389
        %vm2396 = vmor %vm2394, %vm2395
        %v2397 = vsel %vm2396, %v2389, %v2393
        %v2398 = vand.u32 2147483647, %v2381
        %vm2399 = vcmp.eq.f32.partialorder %v2398, 8.507059e+37
        %v2400 = vand.u32 %v2381, 2147483648
        %v2401 = vor.u32 1.1754944e-38, %v2400
        %v2402 = vsel %vm2399, %v2401, %v2397
        %v2403 = vmul.f32 1.0, %v2402
        %v2404 = vrcp.pop %v2382
        %v2405 = vmul.f32 %v2382, %v2404
        %v2406 = vsub.f32 1.0, %v2405
        %v2407 = vmul.f32 %v2404, %v2406
        %v2408 = vadd.f32 %v2404, %v2407
        %vm2409 = vweird.f32 %v2382
        %vm2410 = vweird.f32 %v2404
        %vm2411 = vmor %vm2409, %vm2410
        %v2412 = vsel %vm2411, %v2404, %v2408
        %v2413 = vand.u32 2147483647, %v2382
        %vm2414 = vcmp.eq.f32.partialorder %v2413, 8.507059e+37
        %v2415 = vand.u32 %v2382, 2147483648
        %v2416 = vor.u32 1.1754944e-38, %v2415
        %v2417 = vsel %vm2414, %v2416, %v2412
        %v2418 = vmul.f32 1.0, %v2417
        %v2419 = vrcp.pop %v2383
        %v2420 = vmul.f32 %v2383, %v2419
        %v2421 = vsub.f32 1.0, %v2420
        %v2422 = vmul.f32 %v2419, %v2421
        %v2423 = vadd.f32 %v2419, %v2422
        %vm2424 = vweird.f32 %v2383
        %vm2425 = vweird.f32 %v2419
        %vm2426 = vmor %vm2424, %vm2425
        %v2427 = vsel %vm2426, %v2419, %v2423
        %v2428 = vand.u32 2147483647, %v2383
        %vm2429 = vcmp.eq.f32.partialorder %v2428, 8.507059e+37
        %v2430 = vand.u32 %v2383, 2147483648
        %v2431 = vor.u32 1.1754944e-38, %v2430
        %v2432 = vsel %vm2429, %v2431, %v2427
        %v2433 = vmul.f32 1.0, %v2432
        %v2434 = vrcp.pop %v2384
        %v2435 = vmul.f32 %v2384, %v2434
        %v2436 = vsub.f32 1.0, %v2435
        %v2437 = vmul.f32 %v2434, %v2436
        %v2438 = vadd.f32 %v2434, %v2437
        %vm2439 = vweird.f32 %v2384
        %vm2440 = vweird.f32 %v2434
        %vm2441 = vmor %vm2439, %vm2440
        %v2442 = vsel %vm2441, %v2434, %v2438
        %v2443 = vand.u32 2147483647, %v2384
        %vm2444 = vcmp.eq.f32.partialorder %v2443, 8.507059e+37
        %v2445 = vand.u32 %v2384, 2147483648
        %v2446 = vor.u32 1.1754944e-38, %v2445
        %v2447 = vsel %vm2444, %v2446, %v2442
        %v2448 = vmul.f32 1.0, %v2447
        %v2449 = vrcp.pop %v2385
        %v2450 = vmul.f32 %v2385, %v2449
        %v2451 = vsub.f32 1.0, %v2450
        %v2452 = vmul.f32 %v2449, %v2451
        %v2453 = vadd.f32 %v2449, %v2452
        %vm2454 = vweird.f32 %v2385
        %vm2455 = vweird.f32 %v2449
        %vm2456 = vmor %vm2454, %vm2455
        %v2457 = vsel %vm2456, %v2449, %v2453
        %v2458 = vand.u32 2147483647, %v2385
        %vm2459 = vcmp.eq.f32.partialorder %v2458, 8.507059e+37
        %v2460 = vand.u32 %v2385, 2147483648
        %v2461 = vor.u32 1.1754944e-38, %v2460
        %v2462 = vsel %vm2459, %v2461, %v2457
        %v2463 = vmul.f32 1.0, %v2462
        %v2464 = vrcp.pop %v2386
        %v2465 = vmul.f32 %v2386, %v2464
        %v2466 = vsub.f32 1.0, %v2465
        %v2467 = vmul.f32 %v2464, %v2466
        %v2468 = vadd.f32 %v2464, %v2467
        %vm2469 = vweird.f32 %v2386
        %vm2470 = vweird.f32 %v2464
        %vm2471 = vmor %vm2469, %vm2470
        %v2472 = vsel %vm2471, %v2464, %v2468
        %v2473 = vand.u32 2147483647, %v2386
        %vm2474 = vcmp.eq.f32.partialorder %v2473, 8.507059e+37
        %v2475 = vand.u32 %v2386, 2147483648
        %v2476 = vor.u32 1.1754944e-38, %v2475
        %v2477 = vsel %vm2474, %v2476, %v2472
        %v2478 = vmul.f32 1.0, %v2477
        %v2479 = vrcp.pop %v2387
        %v2480 = vmul.f32 %v2387, %v2479
        %v2481 = vsub.f32 1.0, %v2480
        %v2482 = vmul.f32 %v2479, %v2481
        %v2483 = vadd.f32 %v2479, %v2482
        %vm2484 = vweird.f32 %v2387
        %vm2485 = vweird.f32 %v2479
        %vm2486 = vmor %vm2484, %vm2485
        %v2487 = vsel %vm2486, %v2479, %v2483
        %v2488 = vand.u32 2147483647, %v2387
        %vm2489 = vcmp.eq.f32.partialorder %v2488, 8.507059e+37
        %v2490 = vand.u32 %v2387, 2147483648
        %v2491 = vor.u32 1.1754944e-38, %v2490
        %v2492 = vsel %vm2489, %v2491, %v2487
        %v2493 = vmul.f32 1.0, %v2492
        %v2494 = vrcp.pop %v2388
        %v2495 = vmul.f32 %v2388, %v2494
        %v2496 = vsub.f32 1.0, %v2495
        %v2497 = vmul.f32 %v2494, %v2496
        %v2498 = vadd.f32 %v2494, %v2497
        %vm2499 = vweird.f32 %v2388
        %vm2500 = vweird.f32 %v2494
        %vm2501 = vmor %vm2499, %vm2500
        %v2502 = vsel %vm2501, %v2494, %v2498
        %v2503 = vand.u32 2147483647, %v2388
        %vm2504 = vcmp.eq.f32.partialorder %v2503, 8.507059e+37
        %v2505 = vand.u32 %v2388, 2147483648
        %v2506 = vor.u32 1.1754944e-38, %v2505
        %v2507 = vsel %vm2504, %v2506, %v2502
        %v2508 = vmul.f32 1.0, %v2507
        %v2509 = vmul.f32 %v2321, %v2403
        %v2510 = vmul.f32 %v2340, %v2418
        %v2511 = vmul.f32 %v2323, %v2433
        %v2512 = vmul.f32 %v2342, %v2448
        %v2513 = vmul.f32 %v2326, %v2463
        %v2514 = vmul.f32 %v2345, %v2478
        %v2515 = vmul.f32 %v2328, %v2493
        %v2516 = vmul.f32 %v2347, %v2508
        %v2517 = vpack.c.bf16 %v2511, %v2509
        %v2518 = vpack.c.bf16 %v2512, %v2510
        %v2519 = vpack.c.bf16 %v2515, %v2513
        %v2520 = vpack.c.bf16 %v2516, %v2514
        %v2521 = vld [vmem:[%s785] sm:$0x1]
        %v2523 = vperm.slane %v2521, 0
        %v2557 = vunpack.c.l.b16 %v2109
        %v2558 = vunpack.c.l.b16 %v2110
        %v2559 = vunpack.c.l.b16 %v2111
        %v2560 = vunpack.c.l.b16 %v2112
        %v2561 = vunpack.c.l.b16 %v2113
        %v2562 = vunpack.c.l.b16 %v2114
        %v2563 = vunpack.c.l.b16 %v2115
        %v2564 = vunpack.c.l.b16 %v2116
        %v2565 = vunpack.c.l.b16 %v2117
        %v2566 = vunpack.c.l.b16 %v2118
        %v2567 = vunpack.c.l.b16 %v2119
        %v2568 = vunpack.c.l.b16 %v2120
        %v2569 = vunpack.c.l.b16 %v2121
        %v2570 = vunpack.c.l.b16 %v2122
        %v2571 = vunpack.c.l.b16 %v2123
        %v2572 = vunpack.c.l.b16 %v2124
        %v2573 = vunpack.c.l.b16 %v2125
        %v2574 = vunpack.c.l.b16 %v2126
        %v2575 = vunpack.c.l.b16 %v2127
        %v2576 = vunpack.c.l.b16 %v2128
        %v2577 = vunpack.c.l.b16 %v2129
        %v2578 = vunpack.c.l.b16 %v2130
        %v2579 = vunpack.c.l.b16 %v2131
        %v2580 = vunpack.c.l.b16 %v2132
        %v2581 = vunpack.c.l.b16 %v2133
        %v2582 = vunpack.c.l.b16 %v2134
        %v2583 = vunpack.c.l.b16 %v2135
        %v2584 = vunpack.c.l.b16 %v2136
        %v2585 = vunpack.c.l.b16 %v2137
        %v2586 = vunpack.c.l.b16 %v2138
        %v2587 = vunpack.c.l.b16 %v2139
        %v2588 = vunpack.c.l.b16 %v2140
        %v2589 = vpack.c.b16 %v2558, %v2557
        %v2590 = vpack.c.b16 %v2560, %v2559
        %v2591 = vpack.c.b16 %v2562, %v2561
        %v2592 = vpack.c.b16 %v2564, %v2563
        %v2593 = vpack.c.b16 %v2566, %v2565
        %v2594 = vpack.c.b16 %v2568, %v2567
        %v2595 = vpack.c.b16 %v2570, %v2569
        %v2596 = vpack.c.b16 %v2572, %v2571
        %v2597 = vpack.c.b16 %v2574, %v2573
        %v2598 = vpack.c.b16 %v2576, %v2575
        %v2599 = vpack.c.b16 %v2578, %v2577
        %v2600 = vpack.c.b16 %v2580, %v2579
        %v2601 = vpack.c.b16 %v2582, %v2581
        %v2602 = vpack.c.b16 %v2584, %v2583
        %v2603 = vpack.c.b16 %v2586, %v2585
        %v2604 = vpack.c.b16 %v2588, %v2587
        %2621 = vmatpush.bf16.msra.mxu0 %v2596
        %2622 = vmatpush.bf16.msra.mxu0 %v2595
        %2623 = vmatpush.bf16.msra.mxu0 %v2594
        %2624 = vmatpush.bf16.msra.mxu0 %v2593
        %2625 = vmatpush.bf16.msra.mxu0 %v2592
        %2626 = vmatpush.bf16.msra.mxu0 %v2591
        %2627 = vmatpush.bf16.msra.mxu0 %v2590
        %2628 = vmatpush.bf16.msra.mxu0 %v2589
        %2629 = vmatmul.bf16.gmra.mxu0 %v2517
        %v2630 = vpop.f32.mrf.mxu0
        %v2631 = vadd.f32 %v2523, %v2630
        %v2632 = vpop.f32.mrf.mxu0
        %v2633 = vadd.f32 %v2523, %v2632
        %2634 = vmatmul.bf16.gmra.mxu0 %v2519
        %v2635 = vpop.f32.mrf.mxu0
        %v2636 = vadd.f32 %v2523, %v2635
        %v2637 = vpop.f32.mrf.mxu0
        %v2638 = vadd.f32 %v2523, %v2637
        %2639 = vdwg.mxu0
        %2640 = vmatpush.bf16.msra.mxu0 %v2604
        %2641 = vmatpush.bf16.msra.mxu0 %v2603
        %2642 = vmatpush.bf16.msra.mxu0 %v2602
        %2643 = vmatpush.bf16.msra.mxu0 %v2601
        %2644 = vmatpush.bf16.msra.mxu0 %v2600
        %2645 = vmatpush.bf16.msra.mxu0 %v2599
        %2646 = vmatpush.bf16.msra.mxu0 %v2598
        %2647 = vmatpush.bf16.msra.mxu0 %v2597
        %2648 = vmatmul.bf16.gmra.mxu0 %v2518
        %v2649 = vpop.f32.mrf.mxu0
        %v2650 = vadd.f32 %v2631, %v2649
        %v2651 = vpop.f32.mrf.mxu0
        %v2652 = vadd.f32 %v2633, %v2651
        %2653 = vmatmul.bf16.gmra.mxu0 %v2520
        %v2654 = vpop.f32.mrf.mxu0
        %v2655 = vadd.f32 %v2636, %v2654
        %v2656 = vpop.f32.mrf.mxu0
        %v2657 = vadd.f32 %v2638, %v2656
        %2658 = vdwg.mxu0
        %v2659 = vadd.f32 %v2097, %v2650
        %v2660 = vadd.f32 %v2098, %v2652
        %v2661 = vadd.f32 %v2099, %v2655
        %v2662 = vadd.f32 %v2100, %v2657
        %2663 = vst.msk [vmem:[#allocation2] sm:$0xff] %vm842, %v2659
        %2664 = vst.msk [vmem:[#allocation2 + $0x8] sm:$0xff] %vm842, %v2660
        %2665 = vst.msk [vmem:[#allocation2 + $0x10] sm:$0xff] %vm842, %v2661
        %2666 = vst.msk [vmem:[#allocation2 + $0x18] sm:$0xff] %vm842, %v2662
        %p2667 = scmp.eq.s32.totalorder %s34, 2
        // Predicated region
        $region93: #{tpu_custom_call.1} parent=87 // pred_check
          %p2668 = pneg %p2667
        $region94: #{tpu_custom_call.1} parent=87 // pred_check_branch
          %2670 = sbr.rel (%p2668) target = $region96
        $region95: #{tpu_custom_call.1} parent=87 // pred_region
          %2671 = vst.msk [vmem:[#allocation3] sm:$0xff] %vm842, %v2659
          %2672 = vst.msk [vmem:[#allocation3 + $0x8] sm:$0xff] %vm842, %v2660
          %2673 = vst.msk [vmem:[#allocation3 + $0x10] sm:$0xff] %vm842, %v2661
          %2674 = vst.msk [vmem:[#allocation3 + $0x18] sm:$0xff] %vm842, %v2662
        $region96: #{tpu_custom_call.1} parent=87 // pred_fallthru
          _
        // Predicated region
        $region97: #{tpu_custom_call.1} parent=87 // pred_check
          %p2675 = pneg %p491
        $region98: #{tpu_custom_call.1} parent=87 // pred_check_branch
          %2677 = sbr.rel (%p2675) target = $region100
        $region99: #{tpu_custom_call.1} parent=87 // pred_region
          %s2678 = smul.u32 4, %s33
          %2680 = vsyncadd [#allocation4], 0
          %s2681 = smul.addr %s2678, 8
          %s2682 = scalar_lea.hbm %s17, %s2681
          %s2683 = sshll.u32 [#allocation3], 4
          %s2684 = int_to_ptr.vmem [resolvable:$true] %s2683
          %s2685 = sshll.u32 %s2682, 4
          %s2686 = int_to_ptr.hbm [resolvable:$true] %s2685
          %2691 = dma.vmem_to_hbm [thread:$0]  %s2684, 512, %s2686, [#allocation4], 128, 128, 8
        $region100: #{tpu_custom_call.1} parent=87 // pred_fallthru
          _
        // Predicated region
        $region101: #{tpu_custom_call.1} parent=87 // pred_check
          %p2692 = pneg %p491
        $region102: #{tpu_custom_call.1} parent=87 // pred_check_branch
          %2694 = sbr.rel (%p2692) target = $region104
        $region103: #{tpu_custom_call.1} parent=87 // pred_region
          %2696 = dma.done [#allocation4], 512
        $region104: #{tpu_custom_call.1} parent=87 // pred_fallthru
          _
      $region88: #{tpu_custom_call.1} parent=5 // pred_fallthru
        _
      %p2697 = scmp.le.s32.totalorder 2, %s24
      // Predicated region
      $region105: #{tpu_custom_call.1} parent=5 // pred_check
        %p2698 = pneg %p2697
      $region106: #{tpu_custom_call.1} parent=5 // pred_check_branch
        %2700 = sbr.rel (%p2698) target = $region108
      $region107: #{tpu_custom_call.1} parent=5 // pred_region
        %s2701 = ssub.s32 %s24, 2
      $region108: #{tpu_custom_call.1} parent=5 // pred_fallthru
        _
    $region6: #{tpu_custom_call.1} parent=1 // loop_footer
      %s28 = sadd.s32 1, %s24
    $region7: #{tpu_custom_call.1} parent=1 // loop_footer_branch
      %23 = sbr.rel target = $region3
    $region8: #{tpu_custom_call.1} parent=1 // loop_exit
      _
    %2702 = vsyncpa [#allocation4], 1
    %s2703 = scalar_lea.sflag [#allocation4], 1
    %2704 = vsyncpa %s2703, 1

</llo_original>
